<compile_context>
chip_gen: v7x
topology: tpu7x:2x2x1
jax: 0.10.0
libtpu: 0.0.40
codegen_flags: <defaults>
</compile_context>

<pallas_src>
import functools
import math

import jax
import jax.numpy as jnp
from jax import lax
from jax.experimental import pallas as pl
from jax.experimental.pallas import tpu as pltpu


# ----------------------------------------------------------------------------
# Model configuration (toy sizes)
# ----------------------------------------------------------------------------
B = 2            # batch
M = 4            # max molecules per reaction
L = 8            # tokens per molecule
H = 32           # hidden size
NH = 4           # attention heads
DH = H // NH     # head dim
INTER = 64       # BERT intermediate size
VOCAB = 64       # vocab size
MAX_POS = 16     # max BERT positions
ALPHA = 0.5
SRC_LEN = 1 + M + 1 + M       # cls + reactants + sep + reagents
BS = B * SRC_LEN
LANE = 128                    # lane-padded output width
LN_EPS = 1e-12
NEG_INF = -1e9
N_MOL = 3 * B * M             # reactants + reagents + products molecule rows
N_DEC = B * L                 # decoder token rows


# ----------------------------------------------------------------------------
# Small helpers
# ----------------------------------------------------------------------------
def _zeros_index(ndim, *_):
    return (0,) * ndim


def _full_spec(shape):
    return pl.BlockSpec(tuple(shape), functools.partial(_zeros_index, len(shape)))


def _mm(a, b):
    # bf16 MXU operands, f32 accumulation (v6e/v7x native; v5e also fine).
    return jnp.dot(a.astype(jnp.bfloat16), b.astype(jnp.bfloat16),
                   preferred_element_type=jnp.float32)


def _mm_t(a, b):
    # a @ b.T with bf16 operands, f32 accumulation.
    return lax.dot_general(a.astype(jnp.bfloat16), b.astype(jnp.bfloat16),
                           (((1,), (1,)), ((), ())),
                           preferred_element_type=jnp.float32)


def _layer_norm(t, g, beta):
    mu = jnp.mean(t, axis=-1, keepdims=True)
    tc = t - mu
    var = jnp.mean(tc * tc, axis=-1, keepdims=True)
    return tc * lax.rsqrt(var + LN_EPS) * g + beta


# ----------------------------------------------------------------------------
# The single fused MVM forward kernel
# ----------------------------------------------------------------------------
def _mvm_kernel(ids_ref, tmask_ref, mmask_ref, srcmask_ref, dec_ids_ref, dec_tmask_ref,
                enc_tab_ref, enc_w_ref, enc_b_ref,
                cls_ref, sep_ref, pos_ref, eg_ref, eb_ref,
                wqkv_ref, bqkv_ref, wo_ref, bo_ref, l1g_ref, l1b_ref,
                wi_ref, bi_ref, wo2_ref, bo2_ref, l2g_ref, l2b_ref,
                wp_ref, bp_ref, dec_tab_ref, wlm_ref, blm_ref,
                pooled_ref, logits_ref, loss_ref):
    f32 = jnp.float32

    # ---- stage 1: molecule encoder for reactants + reagents + products at once
    ids = ids_ref[...]                                        # [N_MOL, L] int32
    tmask = tmask_ref[...]                                    # [N_MOL, L] f32
    iota_v = lax.broadcasted_iota(jnp.int32, (N_MOL, VOCAB), 1)
    bag = jnp.zeros((N_MOL, VOCAB), f32)
    # TODO(synk): at a real vocab (30k+) replace the one-hot bag with a gather
    # (scalar-prefetched ids / Element index_map); at VOCAB=64 it is cheap.
    for t in range(L):
        bag = bag + (iota_v == ids[:, t:t + 1]).astype(f32) * tmask[:, t:t + 1]
    denom = jnp.maximum(jnp.sum(tmask, axis=-1, keepdims=True), 1.0)
    tok_pool = _mm(bag, enc_tab_ref[...]) / denom             # [N_MOL, H]
    mol_emb = jnp.tanh(_mm(tok_pool, enc_w_ref[...]) + enc_b_ref[...])
    mol_emb = mol_emb * mmask_ref[...]                        # zero masked molecules

    # ---- stage 2: BERT input [BS, H]: per batch (cls | reactants | sep | reagents)
    RB = B * M                 # reagents base row in mol_emb
    PB = 2 * B * M             # products base row in mol_emb
    cls_tok = cls_ref[...]
    sep_tok = sep_ref[...]
    rows = []
    for b in range(B):
        rows.append(cls_tok)
        rows.append(mol_emb[b * M:(b + 1) * M, :])
        rows.append(sep_tok)
        rows.append(mol_emb[RB + b * M:RB + (b + 1) * M, :])
    x = jnp.concatenate(rows, axis=0)                         # [BS, H]
    pos = pos_ref[0:SRC_LEN, :]
    x = x + jnp.concatenate([pos] * B, axis=0)
    x = _layer_norm(x, eg_ref[...], eb_ref[...])

    # ---- stage 3: one BERT layer (fused QKV, all-head attention, FFN)
    qkv = _mm(x, wqkv_ref[...]) + bqkv_ref[...]               # [BS, 3H]
    q = qkv[:, 0:H]
    k = qkv[:, H:2 * H]
    v = qkv[:, 2 * H:3 * H]

    # Block-diagonal additive mask built IN-KERNEL from the raw [B, S] mask
    # (never materialized in HBM). Every row keeps its own cls key -> no NaN.
    # TODO(synk): at production S tile with a (batch, q-block) grid, keep the
    # key mask as [1, S] per batch, mark the batch axis "parallel" (v7x 2 TCs)
    # and set vmem_limit_bytes per generation (v7x has 64 MiB VMEM).
    srcm = srcmask_ref[...]                                   # [B, S] f32
    neg_row = jnp.full((1, SRC_LEN), NEG_INF, f32)
    blocks = []
    for b in range(B):
        add_b = (1.0 - srcm[b:b + 1, :]) * NEG_INF            # [1, S]
        parts = [neg_row] * b + [add_b] + [neg_row] * (B - 1 - b)
        blocks.append(jnp.broadcast_to(jnp.concatenate(parts, axis=1), (SRC_LEN, BS)))
    amask = jnp.concatenate(blocks, axis=0)                   # [BS, BS]

    # head masks hoisted out of the loop (JAX does not CSE iota/broadcast)
    col = lax.broadcasted_iota(jnp.int32, (1, H), 1)
    head_masks = [((col >= h * DH) & (col < (h + 1) * DH)).astype(f32) for h in range(NH)]

    # TODO(synk): at production (H~768, NH~12) switch to a [B*NH, S, DH] layout
    # (DH>=64 on lanes) instead of lane-masked full-H contractions.
    scale = 1.0 / math.sqrt(DH)
    ctx = jnp.zeros((BS, H), f32)
    for hm in head_masks:
        s = _mm_t(q * hm, k) * scale + amask
        s = s - jnp.max(s, axis=-1, keepdims=True)
        e = jnp.exp(s)
        p_attn = e * pl.reciprocal(jnp.sum(e, axis=-1, keepdims=True), approx=True)
        ctx = ctx + _mm(p_attn, v * hm)

    attn_out = _mm(ctx, wo_ref[...]) + bo_ref[...]
    h1 = _layer_norm(attn_out + x, l1g_ref[...], l1b_ref[...])
    # TODO(synk): HF BERT default is exact erf GELU; tanh approximation used here.
    inter = jax.nn.gelu(_mm(h1, wi_ref[...]) + bi_ref[...], approximate=True)
    ffn = _mm(inter, wo2_ref[...]) + bo2_ref[...]
    h2 = _layer_norm(ffn + h1, l2g_ref[...], l2b_ref[...])    # [BS, H]

    # ---- stage 4: pooler (static cls-row slices, no selector matmul) + MSE
    cls_rows = jnp.concatenate(
        [h2[b * SRC_LEN:b * SRC_LEN + 1, :] for b in range(B)], axis=0)       # [B, H]
    pooled_pad = jnp.tanh(_mm(cls_rows, wp_ref[...]) + bp_ref[...])           # [B, LANE]
    pooled_ref[...] = pooled_pad                              # full-lane store
    pooled = pooled_pad[:, 0:H]

    gt = jnp.concatenate(
        [mol_emb[PB + b * M:PB + b * M + 1, :] for b in range(B)], axis=0)    # [B, H]
    d = pooled - gt
    mse = jnp.sum(d * d, axis=(0, 1), keepdims=True)[0, 0] / float(B * H)

    # ---- stage 5: synthetic decoder (embed + condition on pooled + LM head) + CE
    dec_ids = dec_ids_ref[...]                                # [N_DEC, 1] int32
    iota_dv = lax.broadcasted_iota(jnp.int32, (N_DEC, VOCAB), 1)
    onehot = (iota_dv == dec_ids).astype(f32)
    demb = _mm(onehot, dec_tab_ref[...])                      # [N_DEC, H]
    cond = jnp.concatenate(
        [jnp.broadcast_to(pooled[b:b + 1, :], (L, H)) for b in range(B)], axis=0)
    # LM-head weights are lane-padded to 128 (pad bias = -1e9): the logits store
    # is an unmasked full-lane vst and padded columns vanish in the logsumexp.
    logits = _mm(demb + cond, wlm_ref[...]) + blm_ref[...]    # [N_DEC, LANE]
    logits_ref[...] = logits

    labels = jnp.where(dec_tmask_ref[...] < 0.5,
                       jnp.full_like(dec_ids, -100), dec_ids)                 # [N_DEC, 1]
    iota_pad = lax.broadcasted_iota(jnp.int32, (N_DEC, LANE), 1)
    mrow = jnp.max(logits, axis=-1, keepdims=True)
    lse = mrow + jnp.log(jnp.sum(jnp.exp(logits - mrow), axis=-1, keepdims=True))
    picked = jnp.sum(jnp.where(iota_pad == labels, logits, 0.0), axis=-1, keepdims=True)
    valid = (labels != -100).astype(f32)
    nll = (lse - picked) * valid
    dec_loss = (jnp.sum(nll, axis=(0, 1), keepdims=True)[0, 0] /
                jnp.maximum(jnp.sum(valid, axis=(0, 1), keepdims=True)[0, 0], 1.0))

    # ---- scalar losses via SMEM (no lane-sparse (1,1) VMEM stores)
    loss_ref[0] = mse
    loss_ref[1] = dec_loss
    loss_ref[2] = ALPHA * mse + (1.0 - ALPHA) * dec_loss


# ----------------------------------------------------------------------------
# Wrapper: pack raw inputs, one pallas_call, unpack lane-padded outputs
# ----------------------------------------------------------------------------
def mvm_forward(p,
                reactants_input_ids, reactants_token_attention_mask, reactants_mol_attention_mask,
                products_input_ids, products_token_attention_mask, products_mol_attention_mask,
                reagents_input_ids, reagents_token_attention_mask, reagents_mol_attention_mask):
    f32 = jnp.float32
    # Pack molecule rows in group order [reactants, reagents, products]; all
    # remaining glue (masks, selectors, labels, one-hots) is built in-kernel.
    ids_all = jnp.concatenate(
        [reactants_input_ids.reshape(B * M, L),
         reagents_input_ids.reshape(B * M, L),
         products_input_ids.reshape(B * M, L)], axis=0).astype(jnp.int32)
    tmask_all = jnp.concatenate(
        [reactants_token_attention_mask.reshape(B * M, L),
         reagents_token_attention_mask.reshape(B * M, L),
         products_token_attention_mask.reshape(B * M, L)], axis=0).astype(f32)
    mmask_col = jnp.concatenate(
        [reactants_mol_attention_mask.reshape(B * M),
         reagents_mol_attention_mask.reshape(B * M),
         products_mol_attention_mask.reshape(B * M)], axis=0).reshape(N_MOL, 1).astype(f32)
    ones = jnp.ones((B, 1), f32)
    src_mask = jnp.concatenate(
        [ones, reactants_mol_attention_mask.astype(f32), ones,
         reagents_mol_attention_mask.astype(f32)], axis=1)                    # [B, SRC_LEN]
    dec_ids = products_input_ids[:, 0].reshape(N_DEC, 1).astype(jnp.int32)
    dec_tmask = products_token_attention_mask[:, 0].reshape(N_DEC, 1).astype(f32)

    args = (ids_all, tmask_all, mmask_col, src_mask, dec_ids, dec_tmask,
            p["enc_embed"], p["enc_w"], p["enc_b"],
            p["cls_token"], p["sep_token"], p["pos_emb"], p["emb_ln_g"], p["emb_ln_b"],
            p["wqkv"], p["bqkv"], p["wo"], p["bo"], p["ln1_g"], p["ln1_b"],
            p["wi"], p["bi"], p["wo2"], p["bo2"], p["ln2_g"], p["ln2_b"],
            p["wp_pad"], p["bp_pad"], p["dec_embed"], p["w_lm_pad"], p["b_lm_pad"])

    out_shapes = (jax.ShapeDtypeStruct((B, LANE), f32),       # pooled (lane-padded)
                  jax.ShapeDtypeStruct((N_DEC, LANE), f32),   # logits (lane-padded)
                  jax.ShapeDtypeStruct((3,), f32))            # [mse, dec_loss, total]
    out_specs = (_full_spec((B, LANE)),
                 _full_spec((N_DEC, LANE)),
                 pl.BlockSpec(memory_space=pltpu.MemorySpace.SMEM))

    pooled_pad, logits_pad, losses = pl.pallas_call(
        _mvm_kernel,
        out_shape=out_shapes,
        grid=(1,),
        in_specs=[_full_spec(a.shape) for a in args],
        out_specs=out_specs,
        compiler_params=pltpu.CompilerParams(dimension_semantics=("arbitrary",)),
    )(*args)

    return {
        "loss": losses[2],
        "mse_loss": losses[0],
        "decoder_loss": losses[1],
        "decoder_hidden_states": pooled_pad[:, :H],
        "logits": logits_pad[:, :VOCAB].reshape(B, L, VOCAB),
    }


# ----------------------------------------------------------------------------
# Deterministic parameter init
# ----------------------------------------------------------------------------
def init_params(key):
    def nrm(k, shape, scale=0.02):
        return scale * jax.random.normal(k, shape, dtype=jnp.float32)

    ks = iter(jax.random.split(key, 32))
    wp = nrm(next(ks), (H, H))
    w_lm = nrm(next(ks), (H, VOCAB))
    return {
        # MVM own params
        "cls_token": jax.random.normal(next(ks), (1, H), dtype=jnp.float32),
        "sep_token": jax.random.normal(next(ks), (1, H), dtype=jnp.float32),
        # synthetic MolFormer encoder (shared for reactants / reagents / products)
        "enc_embed": nrm(next(ks), (VOCAB, H)),
        "enc_w": nrm(next(ks), (H, H)),
        "enc_b": jnp.zeros((1, H), jnp.float32),
        # BERT embeddings
        "pos_emb": nrm(next(ks), (MAX_POS, H)),
        "emb_ln_g": jnp.ones((1, H), jnp.float32),
        "emb_ln_b": jnp.zeros((1, H), jnp.float32),
        # one BERT encoder layer (QKV fused into one [H, 3H] weight)
        "wqkv": nrm(next(ks), (H, 3 * H)),
        "bqkv": jnp.zeros((1, 3 * H), jnp.float32),
        "wo": nrm(next(ks), (H, H)), "bo": jnp.zeros((1, H), jnp.float32),
        "ln1_g": jnp.ones((1, H), jnp.float32), "ln1_b": jnp.zeros((1, H), jnp.float32),
        "wi": nrm(next(ks), (H, INTER)), "bi": jnp.zeros((1, INTER), jnp.float32),
        "wo2": nrm(next(ks), (INTER, H)), "bo2": jnp.zeros((1, H), jnp.float32),
        "ln2_g": jnp.ones((1, H), jnp.float32), "ln2_b": jnp.zeros((1, H), jnp.float32),
        # pooler + LM head stored lane-padded to 128 so pooled/logits stores are
        # unmasked full-lane vsts (pad bias of the LM head = -1e9 for the LSE).
        "wp_pad": jnp.pad(wp, ((0, 0), (0, LANE - H))),
        "bp_pad": jnp.zeros((1, LANE), jnp.float32),
        "dec_embed": nrm(next(ks), (VOCAB, H)),
        "w_lm_pad": jnp.pad(w_lm, ((0, 0), (0, LANE - VOCAB))),
        "b_lm_pad": jnp.concatenate(
            [jnp.zeros((1, VOCAB), jnp.float32),
             jnp.full((1, LANE - VOCAB), NEG_INF, jnp.float32)], axis=1),
    }


# ----------------------------------------------------------------------------
# Driver
# ----------------------------------------------------------------------------
if __name__ == "__main__":
    key = jax.random.PRNGKey(0)
    pkey, dkey = jax.random.split(key)
    params = init_params(pkey)

    def make_inputs(k):
        k1, k2, k3 = jax.random.split(k, 3)
        ids = jax.random.randint(k1, (B, M, L), 0, VOCAB, dtype=jnp.int32)
        tmask = (jax.random.uniform(k2, (B, M, L)) > 0.2).astype(jnp.int32)
        tmask = tmask.at[..., 0].set(1)                  # at least one valid token
        mmask = (jax.random.uniform(k3, (B, M)) > 0.3).astype(jnp.int32)
        mmask = mmask.at[:, 0].set(1)                    # at least one valid molecule
        return ids, tmask, mmask

    kr, kp, kg = jax.random.split(dkey, 3)
    r_ids, r_tm, r_mm = make_inputs(kr)      # reactants
    p_ids, p_tm, p_mm = make_inputs(kp)      # products
    g_ids, g_tm, g_mm = make_inputs(kg)      # reagents

    fwd = jax.jit(mvm_forward)
    out = fwd(params,
              r_ids, r_tm, r_mm,
              p_ids, p_tm, p_mm,
              g_ids, g_tm, g_mm)
    jax.block_until_ready(out)

    assert out["decoder_hidden_states"].shape == (B, H)
    assert out["logits"].shape == (B, L, VOCAB)
    assert bool(jnp.isfinite(out["loss"]))
    assert bool(jnp.isfinite(out["mse_loss"]))
    assert bool(jnp.isfinite(out["decoder_loss"]))
    print("KERNEL_OK")
</pallas_src>

<mosaic_0001>
module attributes {stable_mosaic.version = 11 : i64} {
  func.func @_mvm_kernel(%arg0: i32, %arg1: memref<24x8xi32, #tpu.memory_space<vmem>>, %arg2: memref<24x8xf32, #tpu.memory_space<vmem>>, %arg3: memref<24x1xf32, #tpu.memory_space<vmem>>, %arg4: memref<2x10xf32, #tpu.memory_space<vmem>>, %arg5: memref<16x1xi32, #tpu.memory_space<vmem>>, %arg6: memref<16x1xf32, #tpu.memory_space<vmem>>, %arg7: memref<64x32xf32, #tpu.memory_space<vmem>>, %arg8: memref<32x32xf32, #tpu.memory_space<vmem>>, %arg9: memref<1x32xf32, #tpu.memory_space<vmem>>, %arg10: memref<1x32xf32, #tpu.memory_space<vmem>>, %arg11: memref<1x32xf32, #tpu.memory_space<vmem>>, %arg12: memref<16x32xf32, #tpu.memory_space<vmem>>, %arg13: memref<1x32xf32, #tpu.memory_space<vmem>>, %arg14: memref<1x32xf32, #tpu.memory_space<vmem>>, %arg15: memref<32x96xf32, #tpu.memory_space<vmem>>, %arg16: memref<1x96xf32, #tpu.memory_space<vmem>>, %arg17: memref<32x32xf32, #tpu.memory_space<vmem>>, %arg18: memref<1x32xf32, #tpu.memory_space<vmem>>, %arg19: memref<1x32xf32, #tpu.memory_space<vmem>>, %arg20: memref<1x32xf32, #tpu.memory_space<vmem>>, %arg21: memref<32x64xf32, #tpu.memory_space<vmem>>, %arg22: memref<1x64xf32, #tpu.memory_space<vmem>>, %arg23: memref<64x32xf32, #tpu.memory_space<vmem>>, %arg24: memref<1x32xf32, #tpu.memory_space<vmem>>, %arg25: memref<1x32xf32, #tpu.memory_space<vmem>>, %arg26: memref<1x32xf32, #tpu.memory_space<vmem>>, %arg27: memref<32x128xf32, #tpu.memory_space<vmem>>, %arg28: memref<1x128xf32, #tpu.memory_space<vmem>>, %arg29: memref<64x32xf32, #tpu.memory_space<vmem>>, %arg30: memref<32x128xf32, #tpu.memory_space<vmem>>, %arg31: memref<1x128xf32, #tpu.memory_space<vmem>>, %arg32: memref<2x128xf32, #tpu.memory_space<vmem>>, %arg33: memref<16x128xf32, #tpu.memory_space<vmem>>, %arg34: memref<3xf32, #tpu.memory_space<smem>>) attributes {dimension_semantics = [#tpu.dimension_semantics<arbitrary>], iteration_bounds = array<i64: 1>, scalar_prefetch = 0 : i64, scratch_operands = 0 : i64, tpu.core_type = #tpu.core_type<tc>, window_params = [{pipeline_mode = #tpu.pipeline_mode<synchronous>, transform_indices = @transform_0, window_bounds = array<i64: 24, 8>}, {pipeline_mode = #tpu.pipeline_mode<synchronous>, transform_indices = @transform_1, window_bounds = array<i64: 24, 8>}, {pipeline_mode = #tpu.pipeline_mode<synchronous>, transform_indices = @transform_2, window_bounds = array<i64: 24, 1>}, {pipeline_mode = #tpu.pipeline_mode<synchronous>, transform_indices = @transform_3, window_bounds = array<i64: 2, 10>}, {pipeline_mode = #tpu.pipeline_mode<synchronous>, transform_indices = @transform_4, window_bounds = array<i64: 16, 1>}, {pipeline_mode = #tpu.pipeline_mode<synchronous>, transform_indices = @transform_5, window_bounds = array<i64: 16, 1>}, {pipeline_mode = #tpu.pipeline_mode<synchronous>, transform_indices = @transform_6, window_bounds = array<i64: 64, 32>}, {pipeline_mode = #tpu.pipeline_mode<synchronous>, transform_indices = @transform_7, window_bounds = array<i64: 32, 32>}, {pipeline_mode = #tpu.pipeline_mode<synchronous>, transform_indices = @transform_8, window_bounds = array<i64: 1, 32>}, {pipeline_mode = #tpu.pipeline_mode<synchronous>, transform_indices = @transform_9, window_bounds = array<i64: 1, 32>}, {pipeline_mode = #tpu.pipeline_mode<synchronous>, transform_indices = @transform_10, window_bounds = array<i64: 1, 32>}, {pipeline_mode = #tpu.pipeline_mode<synchronous>, transform_indices = @transform_11, window_bounds = array<i64: 16, 32>}, {pipeline_mode = #tpu.pipeline_mode<synchronous>, transform_indices = @transform_12, window_bounds = array<i64: 1, 32>}, {pipeline_mode = #tpu.pipeline_mode<synchronous>, transform_indices = @transform_13, window_bounds = array<i64: 1, 32>}, {pipeline_mode = #tpu.pipeline_mode<synchronous>, transform_indices = @transform_14, window_bounds = array<i64: 32, 96>}, {pipeline_mode = #tpu.pipeline_mode<synchronous>, transform_indices = @transform_15, window_bounds = array<i64: 1, 96>}, {pipeline_mode = #tpu.pipeline_mode<synchronous>, transform_indices = @transform_16, window_bounds = array<i64: 32, 32>}, {pipeline_mode = #tpu.pipeline_mode<synchronous>, transform_indices = @transform_17, window_bounds = array<i64: 1, 32>}, {pipeline_mode = #tpu.pipeline_mode<synchronous>, transform_indices = @transform_18, window_bounds = array<i64: 1, 32>}, {pipeline_mode = #tpu.pipeline_mode<synchronous>, transform_indices = @transform_19, window_bounds = array<i64: 1, 32>}, {pipeline_mode = #tpu.pipeline_mode<synchronous>, transform_indices = @transform_20, window_bounds = array<i64: 32, 64>}, {pipeline_mode = #tpu.pipeline_mode<synchronous>, transform_indices = @transform_21, window_bounds = array<i64: 1, 64>}, {pipeline_mode = #tpu.pipeline_mode<synchronous>, transform_indices = @transform_22, window_bounds = array<i64: 64, 32>}, {pipeline_mode = #tpu.pipeline_mode<synchronous>, transform_indices = @transform_23, window_bounds = array<i64: 1, 32>}, {pipeline_mode = #tpu.pipeline_mode<synchronous>, transform_indices = @transform_24, window_bounds = array<i64: 1, 32>}, {pipeline_mode = #tpu.pipeline_mode<synchronous>, transform_indices = @transform_25, window_bounds = array<i64: 1, 32>}, {pipeline_mode = #tpu.pipeline_mode<synchronous>, transform_indices = @transform_26, window_bounds = array<i64: 32, 128>}, {pipeline_mode = #tpu.pipeline_mode<synchronous>, transform_indices = @transform_27, window_bounds = array<i64: 1, 128>}, {pipeline_mode = #tpu.pipeline_mode<synchronous>, transform_indices = @transform_28, window_bounds = array<i64: 64, 32>}, {pipeline_mode = #tpu.pipeline_mode<synchronous>, transform_indices = @transform_29, window_bounds = array<i64: 32, 128>}, {pipeline_mode = #tpu.pipeline_mode<synchronous>, transform_indices = @transform_30, window_bounds = array<i64: 1, 128>}, {pipeline_mode = #tpu.pipeline_mode<synchronous>, transform_indices = @transform_31, window_bounds = array<i64: 2, 128>}, {pipeline_mode = #tpu.pipeline_mode<synchronous>, transform_indices = @transform_32, window_bounds = array<i64: 16, 128>}, {transform_indices = @transform_33, window_bounds = array<i64: 3>}]} {
    %c0 = arith.constant 0 : index
    %c0_0 = arith.constant 0 : index
    %0 = vector.load %arg1[%c0, %c0_0] : memref<24x8xi32, #tpu.memory_space<vmem>>, vector<24x8xi32>
    %c0_1 = arith.constant 0 : index
    %c0_2 = arith.constant 0 : index
    %1 = vector.load %arg2[%c0_1, %c0_2] : memref<24x8xf32, #tpu.memory_space<vmem>>, vector<24x8xf32>
    %2 = tpu.iota {dimensions = array<i32: 1>} : vector<24x64xi32>
    %cst = arith.constant 0.000000e+00 : f32
    %3 = vector.broadcast %cst : f32 to vector<24x64xf32>
    %4 = vector.extract_strided_slice %0 {offsets = [0, 0], sizes = [24, 1], strides = [1, 1]} : vector<24x8xi32> to vector<24x1xi32>
    %5 = vector.broadcast %4 : vector<24x1xi32> to vector<24x64xi32>
    %6 = arith.cmpi eq, %2, %5 : vector<24x64xi32>
    %7 = arith.extui %6 : vector<24x64xi1> to vector<24x64xi32>
    %8 = arith.sitofp %7 : vector<24x64xi32> to vector<24x64xf32>
    %9 = vector.extract_strided_slice %1 {offsets = [0, 0], sizes = [24, 1], strides = [1, 1]} : vector<24x8xf32> to vector<24x1xf32>
    %10 = vector.broadcast %9 : vector<24x1xf32> to vector<24x64xf32>
    %11 = arith.mulf %8, %10 : vector<24x64xf32>
    %12 = arith.addf %3, %11 : vector<24x64xf32>
    %13 = vector.extract_strided_slice %0 {offsets = [0, 1], sizes = [24, 1], strides = [1, 1]} : vector<24x8xi32> to vector<24x1xi32>
    %14 = vector.broadcast %13 : vector<24x1xi32> to vector<24x64xi32>
    %15 = arith.cmpi eq, %2, %14 : vector<24x64xi32>
    %16 = arith.extui %15 : vector<24x64xi1> to vector<24x64xi32>
    %17 = arith.sitofp %16 : vector<24x64xi32> to vector<24x64xf32>
    %18 = vector.extract_strided_slice %1 {offsets = [0, 1], sizes = [24, 1], strides = [1, 1]} : vector<24x8xf32> to vector<24x1xf32>
    %19 = vector.broadcast %18 : vector<24x1xf32> to vector<24x64xf32>
    %20 = arith.mulf %17, %19 : vector<24x64xf32>
    %21 = arith.addf %12, %20 : vector<24x64xf32>
    %22 = vector.extract_strided_slice %0 {offsets = [0, 2], sizes = [24, 1], strides = [1, 1]} : vector<24x8xi32> to vector<24x1xi32>
    %23 = vector.broadcast %22 : vector<24x1xi32> to vector<24x64xi32>
    %24 = arith.cmpi eq, %2, %23 : vector<24x64xi32>
    %25 = arith.extui %24 : vector<24x64xi1> to vector<24x64xi32>
    %26 = arith.sitofp %25 : vector<24x64xi32> to vector<24x64xf32>
    %27 = vector.extract_strided_slice %1 {offsets = [0, 2], sizes = [24, 1], strides = [1, 1]} : vector<24x8xf32> to vector<24x1xf32>
    %28 = vector.broadcast %27 : vector<24x1xf32> to vector<24x64xf32>
    %29 = arith.mulf %26, %28 : vector<24x64xf32>
    %30 = arith.addf %21, %29 : vector<24x64xf32>
    %31 = vector.extract_strided_slice %0 {offsets = [0, 3], sizes = [24, 1], strides = [1, 1]} : vector<24x8xi32> to vector<24x1xi32>
    %32 = vector.broadcast %31 : vector<24x1xi32> to vector<24x64xi32>
    %33 = arith.cmpi eq, %2, %32 : vector<24x64xi32>
    %34 = arith.extui %33 : vector<24x64xi1> to vector<24x64xi32>
    %35 = arith.sitofp %34 : vector<24x64xi32> to vector<24x64xf32>
    %36 = vector.extract_strided_slice %1 {offsets = [0, 3], sizes = [24, 1], strides = [1, 1]} : vector<24x8xf32> to vector<24x1xf32>
    %37 = vector.broadcast %36 : vector<24x1xf32> to vector<24x64xf32>
    %38 = arith.mulf %35, %37 : vector<24x64xf32>
    %39 = arith.addf %30, %38 : vector<24x64xf32>
    %40 = vector.extract_strided_slice %0 {offsets = [0, 4], sizes = [24, 1], strides = [1, 1]} : vector<24x8xi32> to vector<24x1xi32>
    %41 = vector.broadcast %40 : vector<24x1xi32> to vector<24x64xi32>
    %42 = arith.cmpi eq, %2, %41 : vector<24x64xi32>
    %43 = arith.extui %42 : vector<24x64xi1> to vector<24x64xi32>
    %44 = arith.sitofp %43 : vector<24x64xi32> to vector<24x64xf32>
    %45 = vector.extract_strided_slice %1 {offsets = [0, 4], sizes = [24, 1], strides = [1, 1]} : vector<24x8xf32> to vector<24x1xf32>
    %46 = vector.broadcast %45 : vector<24x1xf32> to vector<24x64xf32>
    %47 = arith.mulf %44, %46 : vector<24x64xf32>
    %48 = arith.addf %39, %47 : vector<24x64xf32>
    %49 = vector.extract_strided_slice %0 {offsets = [0, 5], sizes = [24, 1], strides = [1, 1]} : vector<24x8xi32> to vector<24x1xi32>
    %50 = vector.broadcast %49 : vector<24x1xi32> to vector<24x64xi32>
    %51 = arith.cmpi eq, %2, %50 : vector<24x64xi32>
    %52 = arith.extui %51 : vector<24x64xi1> to vector<24x64xi32>
    %53 = arith.sitofp %52 : vector<24x64xi32> to vector<24x64xf32>
    %54 = vector.extract_strided_slice %1 {offsets = [0, 5], sizes = [24, 1], strides = [1, 1]} : vector<24x8xf32> to vector<24x1xf32>
    %55 = vector.broadcast %54 : vector<24x1xf32> to vector<24x64xf32>
    %56 = arith.mulf %53, %55 : vector<24x64xf32>
    %57 = arith.addf %48, %56 : vector<24x64xf32>
    %58 = vector.extract_strided_slice %0 {offsets = [0, 6], sizes = [24, 1], strides = [1, 1]} : vector<24x8xi32> to vector<24x1xi32>
    %59 = vector.broadcast %58 : vector<24x1xi32> to vector<24x64xi32>
    %60 = arith.cmpi eq, %2, %59 : vector<24x64xi32>
    %61 = arith.extui %60 : vector<24x64xi1> to vector<24x64xi32>
    %62 = arith.sitofp %61 : vector<24x64xi32> to vector<24x64xf32>
    %63 = vector.extract_strided_slice %1 {offsets = [0, 6], sizes = [24, 1], strides = [1, 1]} : vector<24x8xf32> to vector<24x1xf32>
    %64 = vector.broadcast %63 : vector<24x1xf32> to vector<24x64xf32>
    %65 = arith.mulf %62, %64 : vector<24x64xf32>
    %66 = arith.addf %57, %65 : vector<24x64xf32>
    %67 = vector.extract_strided_slice %0 {offsets = [0, 7], sizes = [24, 1], strides = [1, 1]} : vector<24x8xi32> to vector<24x1xi32>
    %68 = vector.broadcast %67 : vector<24x1xi32> to vector<24x64xi32>
    %69 = arith.cmpi eq, %2, %68 : vector<24x64xi32>
    %70 = arith.extui %69 : vector<24x64xi1> to vector<24x64xi32>
    %71 = arith.sitofp %70 : vector<24x64xi32> to vector<24x64xf32>
    %72 = vector.extract_strided_slice %1 {offsets = [0, 7], sizes = [24, 1], strides = [1, 1]} : vector<24x8xf32> to vector<24x1xf32>
    %73 = vector.broadcast %72 : vector<24x1xf32> to vector<24x64xf32>
    %74 = arith.mulf %71, %73 : vector<24x64xf32>
    %75 = arith.addf %66, %74 : vector<24x64xf32>
    %cst_3 = arith.constant dense<0.000000e+00> : vector<24xf32>
    %76 = vector.multi_reduction <add>, %1, %cst_3 [1] : vector<24x8xf32> to vector<24xf32>
    %77 = vector.shape_cast %76 : vector<24xf32> to vector<24x1xf32>
    %cst_4 = arith.constant 1.000000e+00 : f32
    %78 = vector.broadcast %cst_4 : f32 to vector<24x1xf32>
    %79 = arith.maximumf %77, %78 : vector<24x1xf32>
    %c0_5 = arith.constant 0 : index
    %c0_6 = arith.constant 0 : index
    %80 = vector.load %arg7[%c0_5, %c0_6] : memref<64x32xf32, #tpu.memory_space<vmem>>, vector<64x32xf32>
    %81 = arith.truncf %75 : vector<24x64xf32> to vector<24x64xbf16>
    %82 = arith.truncf %80 : vector<64x32xf32> to vector<64x32xbf16>
    %cst_7 = arith.constant dense<0.000000e+00> : vector<24x32xf32>
    %83 = tpu.matmul %81, %82, %cst_7 {dimension_numbers = #tpu.dot_dimension_numbers<[1], [0], [0], [1], [0, 0, 1, 1], [], []>} : vector<24x64xbf16>, vector<64x32xbf16>, vector<24x32xf32> -> vector<24x32xf32>
    %84 = vector.broadcast %79 : vector<24x1xf32> to vector<24x32xf32>
    %85 = arith.divf %83, %84 : vector<24x32xf32>
    %c0_8 = arith.constant 0 : index
    %c0_9 = arith.constant 0 : index
    %86 = vector.load %arg8[%c0_8, %c0_9] : memref<32x32xf32, #tpu.memory_space<vmem>>, vector<32x32xf32>
    %87 = arith.truncf %85 : vector<24x32xf32> to vector<24x32xbf16>
    %88 = arith.truncf %86 : vector<32x32xf32> to vector<32x32xbf16>
    %cst_10 = arith.constant dense<0.000000e+00> : vector<24x32xf32>
    %89 = tpu.matmul %87, %88, %cst_10 {dimension_numbers = #tpu.dot_dimension_numbers<[1], [0], [0], [1], [0, 0, 1, 1], [], []>} : vector<24x32xbf16>, vector<32x32xbf16>, vector<24x32xf32> -> vector<24x32xf32>
    %c0_11 = arith.constant 0 : index
    %c0_12 = arith.constant 0 : index
    %90 = vector.load %arg9[%c0_11, %c0_12] : memref<1x32xf32, #tpu.memory_space<vmem>>, vector<1x32xf32>
    %91 = vector.broadcast %90 : vector<1x32xf32> to vector<24x32xf32>
    %92 = arith.addf %89, %91 : vector<24x32xf32>
    %93 = math.tanh %92 : vector<24x32xf32>
    %c0_13 = arith.constant 0 : index
    %c0_14 = arith.constant 0 : index
    %94 = vector.load %arg3[%c0_13, %c0_14] : memref<24x1xf32, #tpu.memory_space<vmem>>, vector<24x1xf32>
    %95 = vector.broadcast %94 : vector<24x1xf32> to vector<24x32xf32>
    %96 = arith.mulf %93, %95 : vector<24x32xf32>
    %c0_15 = arith.constant 0 : index
    %c0_16 = arith.constant 0 : index
    %97 = vector.load %arg10[%c0_15, %c0_16] : memref<1x32xf32, #tpu.memory_space<vmem>>, vector<1x32xf32>
    %c0_17 = arith.constant 0 : index
    %c0_18 = arith.constant 0 : index
    %98 = vector.load %arg11[%c0_17, %c0_18] : memref<1x32xf32, #tpu.memory_space<vmem>>, vector<1x32xf32>
    %99 = vector.extract_strided_slice %96 {offsets = [0, 0], sizes = [4, 32], strides = [1, 1]} : vector<24x32xf32> to vector<4x32xf32>
    %100 = vector.extract_strided_slice %96 {offsets = [8, 0], sizes = [4, 32], strides = [1, 1]} : vector<24x32xf32> to vector<4x32xf32>
    %101 = vector.extract_strided_slice %96 {offsets = [4, 0], sizes = [4, 32], strides = [1, 1]} : vector<24x32xf32> to vector<4x32xf32>
    %102 = vector.extract_strided_slice %96 {offsets = [12, 0], sizes = [4, 32], strides = [1, 1]} : vector<24x32xf32> to vector<4x32xf32>
    %103 = tpu.concatenate %97, %99, %98, %100, %97, %101, %98, %102 in 0 : vector<1x32xf32>, vector<4x32xf32>, vector<1x32xf32>, vector<4x32xf32>, vector<1x32xf32>, vector<4x32xf32>, vector<1x32xf32>, vector<4x32xf32> -> vector<20x32xf32>
    %c0_19 = arith.constant 0 : index
    %c0_20 = arith.constant 0 : index
    %104 = vector.load %arg12[%c0_19, %c0_20] : memref<16x32xf32, #tpu.memory_space<vmem>>, vector<10x32xf32>
    %105 = tpu.concatenate %104, %104 in 0 : vector<10x32xf32>, vector<10x32xf32> -> vector<20x32xf32>
    %106 = arith.addf %103, %105 : vector<20x32xf32>
    %c0_21 = arith.constant 0 : index
    %c0_22 = arith.constant 0 : index
    %107 = vector.load %arg13[%c0_21, %c0_22] : memref<1x32xf32, #tpu.memory_space<vmem>>, vector<1x32xf32>
    %c0_23 = arith.constant 0 : index
    %c0_24 = arith.constant 0 : index
    %108 = vector.load %arg14[%c0_23, %c0_24] : memref<1x32xf32, #tpu.memory_space<vmem>>, vector<1x32xf32>
    %cst_25 = arith.constant dense<0.000000e+00> : vector<20xf32>
    %109 = vector.multi_reduction <add>, %106, %cst_25 [1] : vector<20x32xf32> to vector<20xf32>
    %110 = vector.shape_cast %109 : vector<20xf32> to vector<20x1xf32>
    %cst_26 = arith.constant 3.200000e+01 : f32
    %111 = vector.broadcast %cst_26 : f32 to vector<20x1xf32>
    %112 = arith.divf %110, %111 : vector<20x1xf32>
    %113 = vector.broadcast %112 : vector<20x1xf32> to vector<20x32xf32>
    %114 = arith.subf %106, %113 : vector<20x32xf32>
    %115 = arith.mulf %114, %114 : vector<20x32xf32>
    %cst_27 = arith.constant dense<0.000000e+00> : vector<20xf32>
    %116 = vector.multi_reduction <add>, %115, %cst_27 [1] : vector<20x32xf32> to vector<20xf32>
    %117 = vector.shape_cast %116 : vector<20xf32> to vector<20x1xf32>
    %cst_28 = arith.constant 3.200000e+01 : f32
    %118 = vector.broadcast %cst_28 : f32 to vector<20x1xf32>
    %119 = arith.divf %117, %118 : vector<20x1xf32>
    %cst_29 = arith.constant 9.99999996E-13 : f32
    %120 = vector.broadcast %cst_29 : f32 to vector<20x1xf32>
    %121 = arith.addf %119, %120 : vector<20x1xf32>
    %122 = math.rsqrt %121 : vector<20x1xf32>
    %123 = vector.broadcast %122 : vector<20x1xf32> to vector<20x32xf32>
    %124 = arith.mulf %114, %123 : vector<20x32xf32>
    %125 = vector.broadcast %107 : vector<1x32xf32> to vector<20x32xf32>
    %126 = arith.mulf %124, %125 : vector<20x32xf32>
    %127 = vector.broadcast %108 : vector<1x32xf32> to vector<20x32xf32>
    %128 = arith.addf %126, %127 : vector<20x32xf32>
    %c0_30 = arith.constant 0 : index
    %c0_31 = arith.constant 0 : index
    %129 = vector.load %arg15[%c0_30, %c0_31] : memref<32x96xf32, #tpu.memory_space<vmem>>, vector<32x96xf32>
    %130 = arith.truncf %128 : vector<20x32xf32> to vector<20x32xbf16>
    %131 = arith.truncf %129 : vector<32x96xf32> to vector<32x96xbf16>
    %cst_32 = arith.constant dense<0.000000e+00> : vector<20x96xf32>
    %132 = tpu.matmul %130, %131, %cst_32 {dimension_numbers = #tpu.dot_dimension_numbers<[1], [0], [0], [1], [0, 0, 1, 1], [], []>} : vector<20x32xbf16>, vector<32x96xbf16>, vector<20x96xf32> -> vector<20x96xf32>
    %c0_33 = arith.constant 0 : index
    %c0_34 = arith.constant 0 : index
    %133 = vector.load %arg16[%c0_33, %c0_34] : memref<1x96xf32, #tpu.memory_space<vmem>>, vector<1x96xf32>
    %134 = vector.broadcast %133 : vector<1x96xf32> to vector<20x96xf32>
    %135 = arith.addf %132, %134 : vector<20x96xf32>
    %136 = vector.extract_strided_slice %135 {offsets = [0, 0], sizes = [20, 32], strides = [1, 1]} : vector<20x96xf32> to vector<20x32xf32>
    %137 = vector.extract_strided_slice %135 {offsets = [0, 32], sizes = [20, 32], strides = [1, 1]} : vector<20x96xf32> to vector<20x32xf32>
    %138 = vector.extract_strided_slice %135 {offsets = [0, 64], sizes = [20, 32], strides = [1, 1]} : vector<20x96xf32> to vector<20x32xf32>
    %c0_35 = arith.constant 0 : index
    %c0_36 = arith.constant 0 : index
    %139 = vector.load %arg4[%c0_35, %c0_36] : memref<2x10xf32, #tpu.memory_space<vmem>>, vector<2x10xf32>
    %cst_37 = arith.constant -1.000000e+09 : f32
    %140 = vector.broadcast %cst_37 : f32 to vector<1x10xf32>
    %141 = vector.extract_strided_slice %139 {offsets = [0, 0], sizes = [1, 10], strides = [1, 1]} : vector<2x10xf32> to vector<1x10xf32>
    %cst_38 = arith.constant 1.000000e+00 : f32
    %142 = vector.broadcast %cst_38 : f32 to vector<1x10xf32>
    %143 = arith.subf %142, %141 : vector<1x10xf32>
    %cst_39 = arith.constant -1.000000e+09 : f32
    %144 = vector.broadcast %cst_39 : f32 to vector<1x10xf32>
    %145 = arith.mulf %143, %144 : vector<1x10xf32>
    %146 = tpu.concatenate %145, %140 in 1 : vector<1x10xf32>, vector<1x10xf32> -> vector<1x20xf32>
    %147 = vector.shape_cast %146 : vector<1x20xf32> to vector<1x20xf32>
    %148 = vector.broadcast %147 : vector<1x20xf32> to vector<10x20xf32>
    %149 = vector.extract_strided_slice %139 {offsets = [1, 0], sizes = [1, 10], strides = [1, 1]} : vector<2x10xf32> to vector<1x10xf32>
    %cst_40 = arith.constant 1.000000e+00 : f32
    %150 = vector.broadcast %cst_40 : f32 to vector<1x10xf32>
    %151 = arith.subf %150, %149 : vector<1x10xf32>
    %cst_41 = arith.constant -1.000000e+09 : f32
    %152 = vector.broadcast %cst_41 : f32 to vector<1x10xf32>
    %153 = arith.mulf %151, %152 : vector<1x10xf32>
    %154 = tpu.concatenate %140, %153 in 1 : vector<1x10xf32>, vector<1x10xf32> -> vector<1x20xf32>
    %155 = vector.shape_cast %154 : vector<1x20xf32> to vector<1x20xf32>
    %156 = vector.broadcast %155 : vector<1x20xf32> to vector<10x20xf32>
    %157 = tpu.concatenate %148, %156 in 0 : vector<10x20xf32>, vector<10x20xf32> -> vector<20x20xf32>
    %158 = tpu.iota {dimensions = array<i32: 1>} : vector<1x32xi32>
    %c0_i32 = arith.constant 0 : i32
    %159 = vector.broadcast %c0_i32 : i32 to vector<1x32xi32>
    %160 = arith.cmpi sge, %158, %159 : vector<1x32xi32>
    %c8_i32 = arith.constant 8 : i32
    %161 = vector.broadcast %c8_i32 : i32 to vector<1x32xi32>
    %162 = arith.cmpi slt, %158, %161 : vector<1x32xi32>
    %163 = arith.andi %160, %162 : vector<1x32xi1>
    %164 = arith.extui %163 : vector<1x32xi1> to vector<1x32xi32>
    %165 = arith.sitofp %164 : vector<1x32xi32> to vector<1x32xf32>
    %c8_i32_42 = arith.constant 8 : i32
    %166 = vector.broadcast %c8_i32_42 : i32 to vector<1x32xi32>
    %167 = arith.cmpi sge, %158, %166 : vector<1x32xi32>
    %c16_i32 = arith.constant 16 : i32
    %168 = vector.broadcast %c16_i32 : i32 to vector<1x32xi32>
    %169 = arith.cmpi slt, %158, %168 : vector<1x32xi32>
    %170 = arith.andi %167, %169 : vector<1x32xi1>
    %171 = arith.extui %170 : vector<1x32xi1> to vector<1x32xi32>
    %172 = arith.sitofp %171 : vector<1x32xi32> to vector<1x32xf32>
    %c16_i32_43 = arith.constant 16 : i32
    %173 = vector.broadcast %c16_i32_43 : i32 to vector<1x32xi32>
    %174 = arith.cmpi sge, %158, %173 : vector<1x32xi32>
    %c24_i32 = arith.constant 24 : i32
    %175 = vector.broadcast %c24_i32 : i32 to vector<1x32xi32>
    %176 = arith.cmpi slt, %158, %175 : vector<1x32xi32>
    %177 = arith.andi %174, %176 : vector<1x32xi1>
    %178 = arith.extui %177 : vector<1x32xi1> to vector<1x32xi32>
    %179 = arith.sitofp %178 : vector<1x32xi32> to vector<1x32xf32>
    %c24_i32_44 = arith.constant 24 : i32
    %180 = vector.broadcast %c24_i32_44 : i32 to vector<1x32xi32>
    %181 = arith.cmpi sge, %158, %180 : vector<1x32xi32>
    %c32_i32 = arith.constant 32 : i32
    %182 = vector.broadcast %c32_i32 : i32 to vector<1x32xi32>
    %183 = arith.cmpi slt, %158, %182 : vector<1x32xi32>
    %184 = arith.andi %181, %183 : vector<1x32xi1>
    %185 = arith.extui %184 : vector<1x32xi1> to vector<1x32xi32>
    %186 = arith.sitofp %185 : vector<1x32xi32> to vector<1x32xf32>
    %cst_45 = arith.constant 0.000000e+00 : f32
    %187 = vector.broadcast %cst_45 : f32 to vector<20x32xf32>
    %188 = vector.broadcast %165 : vector<1x32xf32> to vector<20x32xf32>
    %189 = arith.mulf %136, %188 : vector<20x32xf32>
    %190 = arith.truncf %189 : vector<20x32xf32> to vector<20x32xbf16>
    %191 = arith.truncf %137 : vector<20x32xf32> to vector<20x32xbf16>
    %cst_46 = arith.constant dense<0.000000e+00> : vector<20x20xf32>
    %192 = tpu.matmul %190, %191, %cst_46 {dimension_numbers = #tpu.dot_dimension_numbers<[1], [1], [0], [0], [0, 0, 1, 0], [], []>} : vector<20x32xbf16>, vector<20x32xbf16>, vector<20x20xf32> -> vector<20x20xf32>
    %cst_47 = arith.constant 0.353553385 : f32
    %193 = vector.broadcast %cst_47 : f32 to vector<20x20xf32>
    %194 = arith.mulf %192, %193 : vector<20x20xf32>
    %195 = arith.addf %194, %157 : vector<20x20xf32>
    %cst_48 = arith.constant dense<0xFF800000> : vector<20xf32>
    %196 = vector.multi_reduction <maximumf>, %195, %cst_48 [1] : vector<20x20xf32> to vector<20xf32>
    %197 = vector.shape_cast %196 : vector<20xf32> to vector<20x1xf32>
    %198 = vector.broadcast %197 : vector<20x1xf32> to vector<20x20xf32>
    %199 = arith.subf %195, %198 : vector<20x20xf32>
    %200 = math.exp %199 : vector<20x20xf32>
    %cst_49 = arith.constant dense<0.000000e+00> : vector<20xf32>
    %201 = vector.multi_reduction <add>, %200, %cst_49 [1] : vector<20x20xf32> to vector<20xf32>
    %202 = vector.shape_cast %201 : vector<20xf32> to vector<20x1xf32>
    %203 = tpu.reciprocal %202 {approx = true} : vector<20x1xf32> -> vector<20x1xf32>
    %204 = vector.broadcast %203 : vector<20x1xf32> to vector<20x20xf32>
    %205 = arith.mulf %200, %204 : vector<20x20xf32>
    %206 = vector.broadcast %165 : vector<1x32xf32> to vector<20x32xf32>
    %207 = arith.mulf %138, %206 : vector<20x32xf32>
    %208 = arith.truncf %205 : vector<20x20xf32> to vector<20x20xbf16>
    %209 = arith.truncf %207 : vector<20x32xf32> to vector<20x32xbf16>
    %cst_50 = arith.constant dense<0.000000e+00> : vector<20x32xf32>
    %210 = tpu.matmul %208, %209, %cst_50 {dimension_numbers = #tpu.dot_dimension_numbers<[1], [0], [0], [1], [0, 0, 1, 1], [], []>} : vector<20x20xbf16>, vector<20x32xbf16>, vector<20x32xf32> -> vector<20x32xf32>
    %211 = arith.addf %187, %210 : vector<20x32xf32>
    %212 = vector.broadcast %172 : vector<1x32xf32> to vector<20x32xf32>
    %213 = arith.mulf %136, %212 : vector<20x32xf32>
    %214 = arith.truncf %213 : vector<20x32xf32> to vector<20x32xbf16>
    %215 = arith.truncf %137 : vector<20x32xf32> to vector<20x32xbf16>
    %cst_51 = arith.constant dense<0.000000e+00> : vector<20x20xf32>
    %216 = tpu.matmul %214, %215, %cst_51 {dimension_numbers = #tpu.dot_dimension_numbers<[1], [1], [0], [0], [0, 0, 1, 0], [], []>} : vector<20x32xbf16>, vector<20x32xbf16>, vector<20x20xf32> -> vector<20x20xf32>
    %cst_52 = arith.constant 0.353553385 : f32
    %217 = vector.broadcast %cst_52 : f32 to vector<20x20xf32>
    %218 = arith.mulf %216, %217 : vector<20x20xf32>
    %219 = arith.addf %218, %157 : vector<20x20xf32>
    %cst_53 = arith.constant dense<0xFF800000> : vector<20xf32>
    %220 = vector.multi_reduction <maximumf>, %219, %cst_53 [1] : vector<20x20xf32> to vector<20xf32>
    %221 = vector.shape_cast %220 : vector<20xf32> to vector<20x1xf32>
    %222 = vector.broadcast %221 : vector<20x1xf32> to vector<20x20xf32>
    %223 = arith.subf %219, %222 : vector<20x20xf32>
    %224 = math.exp %223 : vector<20x20xf32>
    %cst_54 = arith.constant dense<0.000000e+00> : vector<20xf32>
    %225 = vector.multi_reduction <add>, %224, %cst_54 [1] : vector<20x20xf32> to vector<20xf32>
    %226 = vector.shape_cast %225 : vector<20xf32> to vector<20x1xf32>
    %227 = tpu.reciprocal %226 {approx = true} : vector<20x1xf32> -> vector<20x1xf32>
    %228 = vector.broadcast %227 : vector<20x1xf32> to vector<20x20xf32>
    %229 = arith.mulf %224, %228 : vector<20x20xf32>
    %230 = vector.broadcast %172 : vector<1x32xf32> to vector<20x32xf32>
    %231 = arith.mulf %138, %230 : vector<20x32xf32>
    %232 = arith.truncf %229 : vector<20x20xf32> to vector<20x20xbf16>
    %233 = arith.truncf %231 : vector<20x32xf32> to vector<20x32xbf16>
    %cst_55 = arith.constant dense<0.000000e+00> : vector<20x32xf32>
    %234 = tpu.matmul %232, %233, %cst_55 {dimension_numbers = #tpu.dot_dimension_numbers<[1], [0], [0], [1], [0, 0, 1, 1], [], []>} : vector<20x20xbf16>, vector<20x32xbf16>, vector<20x32xf32> -> vector<20x32xf32>
    %235 = arith.addf %211, %234 : vector<20x32xf32>
    %236 = vector.broadcast %179 : vector<1x32xf32> to vector<20x32xf32>
    %237 = arith.mulf %136, %236 : vector<20x32xf32>
    %238 = arith.truncf %237 : vector<20x32xf32> to vector<20x32xbf16>
    %239 = arith.truncf %137 : vector<20x32xf32> to vector<20x32xbf16>
    %cst_56 = arith.constant dense<0.000000e+00> : vector<20x20xf32>
    %240 = tpu.matmul %238, %239, %cst_56 {dimension_numbers = #tpu.dot_dimension_numbers<[1], [1], [0], [0], [0, 0, 1, 0], [], []>} : vector<20x32xbf16>, vector<20x32xbf16>, vector<20x20xf32> -> vector<20x20xf32>
    %cst_57 = arith.constant 0.353553385 : f32
    %241 = vector.broadcast %cst_57 : f32 to vector<20x20xf32>
    %242 = arith.mulf %240, %241 : vector<20x20xf32>
    %243 = arith.addf %242, %157 : vector<20x20xf32>
    %cst_58 = arith.constant dense<0xFF800000> : vector<20xf32>
    %244 = vector.multi_reduction <maximumf>, %243, %cst_58 [1] : vector<20x20xf32> to vector<20xf32>
    %245 = vector.shape_cast %244 : vector<20xf32> to vector<20x1xf32>
    %246 = vector.broadcast %245 : vector<20x1xf32> to vector<20x20xf32>
    %247 = arith.subf %243, %246 : vector<20x20xf32>
    %248 = math.exp %247 : vector<20x20xf32>
    %cst_59 = arith.constant dense<0.000000e+00> : vector<20xf32>
    %249 = vector.multi_reduction <add>, %248, %cst_59 [1] : vector<20x20xf32> to vector<20xf32>
    %250 = vector.shape_cast %249 : vector<20xf32> to vector<20x1xf32>
    %251 = tpu.reciprocal %250 {approx = true} : vector<20x1xf32> -> vector<20x1xf32>
    %252 = vector.broadcast %251 : vector<20x1xf32> to vector<20x20xf32>
    %253 = arith.mulf %248, %252 : vector<20x20xf32>
    %254 = vector.broadcast %179 : vector<1x32xf32> to vector<20x32xf32>
    %255 = arith.mulf %138, %254 : vector<20x32xf32>
    %256 = arith.truncf %253 : vector<20x20xf32> to vector<20x20xbf16>
    %257 = arith.truncf %255 : vector<20x32xf32> to vector<20x32xbf16>
    %cst_60 = arith.constant dense<0.000000e+00> : vector<20x32xf32>
    %258 = tpu.matmul %256, %257, %cst_60 {dimension_numbers = #tpu.dot_dimension_numbers<[1], [0], [0], [1], [0, 0, 1, 1], [], []>} : vector<20x20xbf16>, vector<20x32xbf16>, vector<20x32xf32> -> vector<20x32xf32>
    %259 = arith.addf %235, %258 : vector<20x32xf32>
    %260 = vector.broadcast %186 : vector<1x32xf32> to vector<20x32xf32>
    %261 = arith.mulf %136, %260 : vector<20x32xf32>
    %262 = arith.truncf %261 : vector<20x32xf32> to vector<20x32xbf16>
    %263 = arith.truncf %137 : vector<20x32xf32> to vector<20x32xbf16>
    %cst_61 = arith.constant dense<0.000000e+00> : vector<20x20xf32>
    %264 = tpu.matmul %262, %263, %cst_61 {dimension_numbers = #tpu.dot_dimension_numbers<[1], [1], [0], [0], [0, 0, 1, 0], [], []>} : vector<20x32xbf16>, vector<20x32xbf16>, vector<20x20xf32> -> vector<20x20xf32>
    %cst_62 = arith.constant 0.353553385 : f32
    %265 = vector.broadcast %cst_62 : f32 to vector<20x20xf32>
    %266 = arith.mulf %264, %265 : vector<20x20xf32>
    %267 = arith.addf %266, %157 : vector<20x20xf32>
    %cst_63 = arith.constant dense<0xFF800000> : vector<20xf32>
    %268 = vector.multi_reduction <maximumf>, %267, %cst_63 [1] : vector<20x20xf32> to vector<20xf32>
    %269 = vector.shape_cast %268 : vector<20xf32> to vector<20x1xf32>
    %270 = vector.broadcast %269 : vector<20x1xf32> to vector<20x20xf32>
    %271 = arith.subf %267, %270 : vector<20x20xf32>
    %272 = math.exp %271 : vector<20x20xf32>
    %cst_64 = arith.constant dense<0.000000e+00> : vector<20xf32>
    %273 = vector.multi_reduction <add>, %272, %cst_64 [1] : vector<20x20xf32> to vector<20xf32>
    %274 = vector.shape_cast %273 : vector<20xf32> to vector<20x1xf32>
    %275 = tpu.reciprocal %274 {approx = true} : vector<20x1xf32> -> vector<20x1xf32>
    %276 = vector.broadcast %275 : vector<20x1xf32> to vector<20x20xf32>
    %277 = arith.mulf %272, %276 : vector<20x20xf32>
    %278 = vector.broadcast %186 : vector<1x32xf32> to vector<20x32xf32>
    %279 = arith.mulf %138, %278 : vector<20x32xf32>
    %280 = arith.truncf %277 : vector<20x20xf32> to vector<20x20xbf16>
    %281 = arith.truncf %279 : vector<20x32xf32> to vector<20x32xbf16>
    %cst_65 = arith.constant dense<0.000000e+00> : vector<20x32xf32>
    %282 = tpu.matmul %280, %281, %cst_65 {dimension_numbers = #tpu.dot_dimension_numbers<[1], [0], [0], [1], [0, 0, 1, 1], [], []>} : vector<20x20xbf16>, vector<20x32xbf16>, vector<20x32xf32> -> vector<20x32xf32>
    %283 = arith.addf %259, %282 : vector<20x32xf32>
    %c0_66 = arith.constant 0 : index
    %c0_67 = arith.constant 0 : index
    %284 = vector.load %arg17[%c0_66, %c0_67] : memref<32x32xf32, #tpu.memory_space<vmem>>, vector<32x32xf32>
    %285 = arith.truncf %283 : vector<20x32xf32> to vector<20x32xbf16>
    %286 = arith.truncf %284 : vector<32x32xf32> to vector<32x32xbf16>
    %cst_68 = arith.constant dense<0.000000e+00> : vector<20x32xf32>
    %287 = tpu.matmul %285, %286, %cst_68 {dimension_numbers = #tpu.dot_dimension_numbers<[1], [0], [0], [1], [0, 0, 1, 1], [], []>} : vector<20x32xbf16>, vector<32x32xbf16>, vector<20x32xf32> -> vector<20x32xf32>
    %c0_69 = arith.constant 0 : index
    %c0_70 = arith.constant 0 : index
    %288 = vector.load %arg18[%c0_69, %c0_70] : memref<1x32xf32, #tpu.memory_space<vmem>>, vector<1x32xf32>
    %289 = vector.broadcast %288 : vector<1x32xf32> to vector<20x32xf32>
    %290 = arith.addf %287, %289 : vector<20x32xf32>
    %291 = arith.addf %290, %128 : vector<20x32xf32>
    %c0_71 = arith.constant 0 : index
    %c0_72 = arith.constant 0 : index
    %292 = vector.load %arg19[%c0_71, %c0_72] : memref<1x32xf32, #tpu.memory_space<vmem>>, vector<1x32xf32>
    %c0_73 = arith.constant 0 : index
    %c0_74 = arith.constant 0 : index
    %293 = vector.load %arg20[%c0_73, %c0_74] : memref<1x32xf32, #tpu.memory_space<vmem>>, vector<1x32xf32>
    %cst_75 = arith.constant dense<0.000000e+00> : vector<20xf32>
    %294 = vector.multi_reduction <add>, %291, %cst_75 [1] : vector<20x32xf32> to vector<20xf32>
    %295 = vector.shape_cast %294 : vector<20xf32> to vector<20x1xf32>
    %cst_76 = arith.constant 3.200000e+01 : f32
    %296 = vector.broadcast %cst_76 : f32 to vector<20x1xf32>
    %297 = arith.divf %295, %296 : vector<20x1xf32>
    %298 = vector.broadcast %297 : vector<20x1xf32> to vector<20x32xf32>
    %299 = arith.subf %291, %298 : vector<20x32xf32>
    %300 = arith.mulf %299, %299 : vector<20x32xf32>
    %cst_77 = arith.constant dense<0.000000e+00> : vector<20xf32>
    %301 = vector.multi_reduction <add>, %300, %cst_77 [1] : vector<20x32xf32> to vector<20xf32>
    %302 = vector.shape_cast %301 : vector<20xf32> to vector<20x1xf32>
    %cst_78 = arith.constant 3.200000e+01 : f32
    %303 = vector.broadcast %cst_78 : f32 to vector<20x1xf32>
    %304 = arith.divf %302, %303 : vector<20x1xf32>
    %cst_79 = arith.constant 9.99999996E-13 : f32
    %305 = vector.broadcast %cst_79 : f32 to vector<20x1xf32>
    %306 = arith.addf %304, %305 : vector<20x1xf32>
    %307 = math.rsqrt %306 : vector<20x1xf32>
    %308 = vector.broadcast %307 : vector<20x1xf32> to vector<20x32xf32>
    %309 = arith.mulf %299, %308 : vector<20x32xf32>
    %310 = vector.broadcast %292 : vector<1x32xf32> to vector<20x32xf32>
    %311 = arith.mulf %309, %310 : vector<20x32xf32>
    %312 = vector.broadcast %293 : vector<1x32xf32> to vector<20x32xf32>
    %313 = arith.addf %311, %312 : vector<20x32xf32>
    %c0_80 = arith.constant 0 : index
    %c0_81 = arith.constant 0 : index
    %314 = vector.load %arg21[%c0_80, %c0_81] : memref<32x64xf32, #tpu.memory_space<vmem>>, vector<32x64xf32>
    %315 = arith.truncf %313 : vector<20x32xf32> to vector<20x32xbf16>
    %316 = arith.truncf %314 : vector<32x64xf32> to vector<32x64xbf16>
    %cst_82 = arith.constant dense<0.000000e+00> : vector<20x64xf32>
    %317 = tpu.matmul %315, %316, %cst_82 {dimension_numbers = #tpu.dot_dimension_numbers<[1], [0], [0], [1], [0, 0, 1, 1], [], []>} : vector<20x32xbf16>, vector<32x64xbf16>, vector<20x64xf32> -> vector<20x64xf32>
    %c0_83 = arith.constant 0 : index
    %c0_84 = arith.constant 0 : index
    %318 = vector.load %arg22[%c0_83, %c0_84] : memref<1x64xf32, #tpu.memory_space<vmem>>, vector<1x64xf32>
    %319 = vector.broadcast %318 : vector<1x64xf32> to vector<20x64xf32>
    %320 = arith.addf %317, %319 : vector<20x64xf32>
    %321 = arith.mulf %320, %320 : vector<20x64xf32>
    %322 = arith.mulf %320, %321 : vector<20x64xf32>
    %cst_85 = arith.constant 4.471500e-02 : f32
    %323 = vector.broadcast %cst_85 : f32 to vector<20x64xf32>
    %324 = arith.mulf %323, %322 : vector<20x64xf32>
    %325 = arith.addf %320, %324 : vector<20x64xf32>
    %cst_86 = arith.constant 0.797884583 : f32
    %326 = vector.broadcast %cst_86 : f32 to vector<20x64xf32>
    %327 = arith.mulf %326, %325 : vector<20x64xf32>
    %328 = math.tanh %327 : vector<20x64xf32>
    %cst_87 = arith.constant 1.000000e+00 : f32
    %329 = vector.broadcast %cst_87 : f32 to vector<20x64xf32>
    %330 = arith.addf %329, %328 : vector<20x64xf32>
    %cst_88 = arith.constant 5.000000e-01 : f32
    %331 = vector.broadcast %cst_88 : f32 to vector<20x64xf32>
    %332 = arith.mulf %331, %330 : vector<20x64xf32>
    %333 = arith.mulf %320, %332 : vector<20x64xf32>
    %c0_89 = arith.constant 0 : index
    %c0_90 = arith.constant 0 : index
    %334 = vector.load %arg23[%c0_89, %c0_90] : memref<64x32xf32, #tpu.memory_space<vmem>>, vector<64x32xf32>
    %335 = arith.truncf %333 : vector<20x64xf32> to vector<20x64xbf16>
    %336 = arith.truncf %334 : vector<64x32xf32> to vector<64x32xbf16>
    %cst_91 = arith.constant dense<0.000000e+00> : vector<20x32xf32>
    %337 = tpu.matmul %335, %336, %cst_91 {dimension_numbers = #tpu.dot_dimension_numbers<[1], [0], [0], [1], [0, 0, 1, 1], [], []>} : vector<20x64xbf16>, vector<64x32xbf16>, vector<20x32xf32> -> vector<20x32xf32>
    %c0_92 = arith.constant 0 : index
    %c0_93 = arith.constant 0 : index
    %338 = vector.load %arg24[%c0_92, %c0_93] : memref<1x32xf32, #tpu.memory_space<vmem>>, vector<1x32xf32>
    %339 = vector.broadcast %338 : vector<1x32xf32> to vector<20x32xf32>
    %340 = arith.addf %337, %339 : vector<20x32xf32>
    %341 = arith.addf %340, %313 : vector<20x32xf32>
    %c0_94 = arith.constant 0 : index
    %c0_95 = arith.constant 0 : index
    %342 = vector.load %arg25[%c0_94, %c0_95] : memref<1x32xf32, #tpu.memory_space<vmem>>, vector<1x32xf32>
    %c0_96 = arith.constant 0 : index
    %c0_97 = arith.constant 0 : index
    %343 = vector.load %arg26[%c0_96, %c0_97] : memref<1x32xf32, #tpu.memory_space<vmem>>, vector<1x32xf32>
    %cst_98 = arith.constant dense<0.000000e+00> : vector<20xf32>
    %344 = vector.multi_reduction <add>, %341, %cst_98 [1] : vector<20x32xf32> to vector<20xf32>
    %345 = vector.shape_cast %344 : vector<20xf32> to vector<20x1xf32>
    %cst_99 = arith.constant 3.200000e+01 : f32
    %346 = vector.broadcast %cst_99 : f32 to vector<20x1xf32>
    %347 = arith.divf %345, %346 : vector<20x1xf32>
    %348 = vector.broadcast %347 : vector<20x1xf32> to vector<20x32xf32>
    %349 = arith.subf %341, %348 : vector<20x32xf32>
    %350 = arith.mulf %349, %349 : vector<20x32xf32>
    %cst_100 = arith.constant dense<0.000000e+00> : vector<20xf32>
    %351 = vector.multi_reduction <add>, %350, %cst_100 [1] : vector<20x32xf32> to vector<20xf32>
    %352 = vector.shape_cast %351 : vector<20xf32> to vector<20x1xf32>
    %cst_101 = arith.constant 3.200000e+01 : f32
    %353 = vector.broadcast %cst_101 : f32 to vector<20x1xf32>
    %354 = arith.divf %352, %353 : vector<20x1xf32>
    %cst_102 = arith.constant 9.99999996E-13 : f32
    %355 = vector.broadcast %cst_102 : f32 to vector<20x1xf32>
    %356 = arith.addf %354, %355 : vector<20x1xf32>
    %357 = math.rsqrt %356 : vector<20x1xf32>
    %358 = vector.broadcast %357 : vector<20x1xf32> to vector<20x32xf32>
    %359 = arith.mulf %349, %358 : vector<20x32xf32>
    %360 = vector.broadcast %342 : vector<1x32xf32> to vector<20x32xf32>
    %361 = arith.mulf %359, %360 : vector<20x32xf32>
    %362 = vector.broadcast %343 : vector<1x32xf32> to vector<20x32xf32>
    %363 = arith.addf %361, %362 : vector<20x32xf32>
    %364 = vector.extract_strided_slice %363 {offsets = [0, 0], sizes = [1, 32], strides = [1, 1]} : vector<20x32xf32> to vector<1x32xf32>
    %365 = vector.extract_strided_slice %363 {offsets = [10, 0], sizes = [1, 32], strides = [1, 1]} : vector<20x32xf32> to vector<1x32xf32>
    %366 = tpu.concatenate %364, %365 in 0 : vector<1x32xf32>, vector<1x32xf32> -> vector<2x32xf32>
    %c0_103 = arith.constant 0 : index
    %c0_104 = arith.constant 0 : index
    %367 = vector.load %arg27[%c0_103, %c0_104] : memref<32x128xf32, #tpu.memory_space<vmem>>, vector<32x128xf32>
    %368 = arith.truncf %366 : vector<2x32xf32> to vector<2x32xbf16>
    %369 = arith.truncf %367 : vector<32x128xf32> to vector<32x128xbf16>
    %cst_105 = arith.constant dense<0.000000e+00> : vector<2x128xf32>
    %370 = tpu.matmul %368, %369, %cst_105 {dimension_numbers = #tpu.dot_dimension_numbers<[1], [0], [0], [1], [0, 0, 1, 1], [], []>} : vector<2x32xbf16>, vector<32x128xbf16>, vector<2x128xf32> -> vector<2x128xf32>
    %c0_106 = arith.constant 0 : index
    %c0_107 = arith.constant 0 : index
    %371 = vector.load %arg28[%c0_106, %c0_107] : memref<1x128xf32, #tpu.memory_space<vmem>>, vector<1x128xf32>
    %372 = vector.broadcast %371 : vector<1x128xf32> to vector<2x128xf32>
    %373 = arith.addf %370, %372 : vector<2x128xf32>
    %374 = math.tanh %373 : vector<2x128xf32>
    %c0_108 = arith.constant 0 : index
    %c0_109 = arith.constant 0 : index
    %375 = vector.load %arg32[%c0_108, %c0_109] : memref<2x128xf32, #tpu.memory_space<vmem>>, vector<2x128xf32>
    tpu.vector_store %arg32[%c0_108, %c0_109], %374 {strides = array<i32>} : memref<2x128xf32, #tpu.memory_space<vmem>>, vector<2x128xf32>,
    %376 = vector.extract_strided_slice %374 {offsets = [0, 0], sizes = [2, 32], strides = [1, 1]} : vector<2x128xf32> to vector<2x32xf32>
    %377 = vector.extract_strided_slice %96 {offsets = [16, 0], sizes = [1, 32], strides = [1, 1]} : vector<24x32xf32> to vector<1x32xf32>
    %378 = vector.extract_strided_slice %96 {offsets = [20, 0], sizes = [1, 32], strides = [1, 1]} : vector<24x32xf32> to vector<1x32xf32>
    %379 = tpu.concatenate %377, %378 in 0 : vector<1x32xf32>, vector<1x32xf32> -> vector<2x32xf32>
    %380 = arith.subf %376, %379 : vector<2x32xf32>
    %381 = arith.mulf %380, %380 : vector<2x32xf32>
    %382 = vector.shape_cast %381 : vector<2x32xf32> to vector<1x2x32xf32>
    %cst_110 = arith.constant dense<0.000000e+00> : vector<1xf32>
    %383 = vector.multi_reduction <add>, %382, %cst_110 [1, 2] : vector<1x2x32xf32> to vector<1xf32>
    %384 = vector.shape_cast %383 : vector<1xf32> to vector<1x1x1xf32>
    %385 = vector.extract %384[0, 0, 0] : f32 from vector<1x1x1xf32>
    %386 = vector.broadcast %385 : f32 to vector<1x1xf32>
    %387 = vector.extract %386[0, 0] : f32 from vector<1x1xf32>
    %cst_111 = arith.constant 6.400000e+01 : f32
    %388 = arith.divf %387, %cst_111 : f32
    %c0_112 = arith.constant 0 : index
    %c0_113 = arith.constant 0 : index
    %389 = vector.load %arg5[%c0_112, %c0_113] : memref<16x1xi32, #tpu.memory_space<vmem>>, vector<16x1xi32>
    %390 = tpu.iota {dimensions = array<i32: 1>} : vector<16x64xi32>
    %391 = vector.broadcast %389 : vector<16x1xi32> to vector<16x64xi32>
    %392 = arith.cmpi eq, %390, %391 : vector<16x64xi32>
    %393 = arith.extui %392 : vector<16x64xi1> to vector<16x64xi32>
    %394 = arith.sitofp %393 : vector<16x64xi32> to vector<16x64xf32>
    %c0_114 = arith.constant 0 : index
    %c0_115 = arith.constant 0 : index
    %395 = vector.load %arg29[%c0_114, %c0_115] : memref<64x32xf32, #tpu.memory_space<vmem>>, vector<64x32xf32>
    %396 = arith.truncf %394 : vector<16x64xf32> to vector<16x64xbf16>
    %397 = arith.truncf %395 : vector<64x32xf32> to vector<64x32xbf16>
    %cst_116 = arith.constant dense<0.000000e+00> : vector<16x32xf32>
    %398 = tpu.matmul %396, %397, %cst_116 {dimension_numbers = #tpu.dot_dimension_numbers<[1], [0], [0], [1], [0, 0, 1, 1], [], []>} : vector<16x64xbf16>, vector<64x32xbf16>, vector<16x32xf32> -> vector<16x32xf32>
    %399 = vector.extract_strided_slice %376 {offsets = [0, 0], sizes = [1, 32], strides = [1, 1]} : vector<2x32xf32> to vector<1x32xf32>
    %400 = vector.shape_cast %399 : vector<1x32xf32> to vector<1x32xf32>
    %401 = vector.broadcast %400 : vector<1x32xf32> to vector<8x32xf32>
    %402 = vector.extract_strided_slice %376 {offsets = [1, 0], sizes = [1, 32], strides = [1, 1]} : vector<2x32xf32> to vector<1x32xf32>
    %403 = vector.shape_cast %402 : vector<1x32xf32> to vector<1x32xf32>
    %404 = vector.broadcast %403 : vector<1x32xf32> to vector<8x32xf32>
    %405 = tpu.concatenate %401, %404 in 0 : vector<8x32xf32>, vector<8x32xf32> -> vector<16x32xf32>
    %406 = arith.addf %398, %405 : vector<16x32xf32>
    %c0_117 = arith.constant 0 : index
    %c0_118 = arith.constant 0 : index
    %407 = vector.load %arg30[%c0_117, %c0_118] : memref<32x128xf32, #tpu.memory_space<vmem>>, vector<32x128xf32>
    %408 = arith.truncf %406 : vector<16x32xf32> to vector<16x32xbf16>
    %409 = arith.truncf %407 : vector<32x128xf32> to vector<32x128xbf16>
    %cst_119 = arith.constant dense<0.000000e+00> : vector<16x128xf32>
    %410 = tpu.matmul %408, %409, %cst_119 {dimension_numbers = #tpu.dot_dimension_numbers<[1], [0], [0], [1], [0, 0, 1, 1], [], []>} : vector<16x32xbf16>, vector<32x128xbf16>, vector<16x128xf32> -> vector<16x128xf32>
    %c0_120 = arith.constant 0 : index
    %c0_121 = arith.constant 0 : index
    %411 = vector.load %arg31[%c0_120, %c0_121] : memref<1x128xf32, #tpu.memory_space<vmem>>, vector<1x128xf32>
    %412 = vector.broadcast %411 : vector<1x128xf32> to vector<16x128xf32>
    %413 = arith.addf %410, %412 : vector<16x128xf32>
    %c0_122 = arith.constant 0 : index
    %c0_123 = arith.constant 0 : index
    %414 = vector.load %arg33[%c0_122, %c0_123] : memref<16x128xf32, #tpu.memory_space<vmem>>, vector<16x128xf32>
    tpu.vector_store %arg33[%c0_122, %c0_123], %413 {strides = array<i32>} : memref<16x128xf32, #tpu.memory_space<vmem>>, vector<16x128xf32>,
    %c0_124 = arith.constant 0 : index
    %c0_125 = arith.constant 0 : index
    %415 = vector.load %arg6[%c0_124, %c0_125] : memref<16x1xf32, #tpu.memory_space<vmem>>, vector<16x1xf32>
    %cst_126 = arith.constant 5.000000e-01 : f32
    %416 = vector.broadcast %cst_126 : f32 to vector<16x1xf32>
    %417 = arith.cmpf olt, %415, %416 : vector<16x1xf32>
    %c-100_i32 = arith.constant -100 : i32
    %418 = vector.broadcast %c-100_i32 : i32 to vector<16x1xi32>
    %419 = arith.select %417, %418, %389 : vector<16x1xi1>, vector<16x1xi32>
    %420 = tpu.iota {dimensions = array<i32: 1>} : vector<16x128xi32>
    %cst_127 = arith.constant dense<0xFF800000> : vector<16xf32>
    %421 = vector.multi_reduction <maximumf>, %413, %cst_127 [1] : vector<16x128xf32> to vector<16xf32>
    %422 = vector.shape_cast %421 : vector<16xf32> to vector<16x1xf32>
    %423 = vector.broadcast %422 : vector<16x1xf32> to vector<16x128xf32>
    %424 = arith.subf %413, %423 : vector<16x128xf32>
    %425 = math.exp %424 : vector<16x128xf32>
    %cst_128 = arith.constant dense<0.000000e+00> : vector<16xf32>
    %426 = vector.multi_reduction <add>, %425, %cst_128 [1] : vector<16x128xf32> to vector<16xf32>
    %427 = vector.shape_cast %426 : vector<16xf32> to vector<16x1xf32>
    %428 = math.log %427 : vector<16x1xf32>
    %429 = arith.addf %422, %428 : vector<16x1xf32>
    %430 = vector.broadcast %419 : vector<16x1xi32> to vector<16x128xi32>
    %431 = arith.cmpi eq, %420, %430 : vector<16x128xi32>
    %cst_129 = arith.constant 0.000000e+00 : f32
    %432 = vector.broadcast %cst_129 : f32 to vector<16x128xf32>
    %433 = arith.select %431, %413, %432 : vector<16x128xi1>, vector<16x128xf32>
    %cst_130 = arith.constant dense<0.000000e+00> : vector<16xf32>
    %434 = vector.multi_reduction <add>, %433, %cst_130 [1] : vector<16x128xf32> to vector<16xf32>
    %435 = vector.shape_cast %434 : vector<16xf32> to vector<16x1xf32>
    %c-100_i32_131 = arith.constant -100 : i32
    %436 = vector.broadcast %c-100_i32_131 : i32 to vector<16x1xi32>
    %437 = arith.cmpi ne, %419, %436 : vector<16x1xi32>
    %438 = arith.extui %437 : vector<16x1xi1> to vector<16x1xi32>
    %439 = arith.sitofp %438 : vector<16x1xi32> to vector<16x1xf32>
    %440 = arith.subf %429, %435 : vector<16x1xf32>
    %441 = arith.mulf %440, %439 : vector<16x1xf32>
    %442 = vector.shape_cast %441 : vector<16x1xf32> to vector<1x16x1xf32>
    %cst_132 = arith.constant dense<0.000000e+00> : vector<1xf32>
    %443 = vector.multi_reduction <add>, %442, %cst_132 [1, 2] : vector<1x16x1xf32> to vector<1xf32>
    %444 = vector.shape_cast %443 : vector<1xf32> to vector<1x1x1xf32>
    %445 = vector.extract %444[0, 0, 0] : f32 from vector<1x1x1xf32>
    %446 = vector.broadcast %445 : f32 to vector<1x1xf32>
    %447 = vector.extract %446[0, 0] : f32 from vector<1x1xf32>
    %448 = vector.shape_cast %439 : vector<16x1xf32> to vector<1x16x1xf32>
    %cst_133 = arith.constant dense<0.000000e+00> : vector<1xf32>
    %449 = vector.multi_reduction <add>, %448, %cst_133 [1, 2] : vector<1x16x1xf32> to vector<1xf32>
    %450 = vector.shape_cast %449 : vector<1xf32> to vector<1x1x1xf32>
    %451 = vector.extract %450[0, 0, 0] : f32 from vector<1x1x1xf32>
    %452 = vector.broadcast %451 : f32 to vector<1x1xf32>
    %453 = vector.extract %452[0, 0] : f32 from vector<1x1xf32>
    %cst_134 = arith.constant 1.000000e+00 : f32
    %454 = arith.maximumf %453, %cst_134 : f32
    %455 = arith.divf %447, %454 : f32
    %c0_135 = arith.constant 0 : index
    %456 = memref.load %arg34[%c0_135] : memref<3xf32, #tpu.memory_space<smem>>
    memref.store %388, %arg34[%c0_135] : memref<3xf32, #tpu.memory_space<smem>>
    %c1 = arith.constant 1 : index
    %457 = memref.load %arg34[%c1] : memref<3xf32, #tpu.memory_space<smem>>
    memref.store %455, %arg34[%c1] : memref<3xf32, #tpu.memory_space<smem>>
    %cst_136 = arith.constant 5.000000e-01 : f32
    %458 = arith.mulf %cst_136, %388 : f32
    %cst_137 = arith.constant 5.000000e-01 : f32
    %459 = arith.mulf %cst_137, %455 : f32
    %460 = arith.addf %458, %459 : f32
    %c2 = arith.constant 2 : index
    %461 = memref.load %arg34[%c2] : memref<3xf32, #tpu.memory_space<smem>>
    memref.store %460, %arg34[%c2] : memref<3xf32, #tpu.memory_space<smem>>
    return
  }
  func.func @transform_0(%arg0: i32) -> (i32, i32) {
    %c0_i32 = arith.constant 0 : i32
    %c0_i32_0 = arith.constant 0 : i32
    %c0_i32_1 = arith.constant 0 : i32
    return %c0_i32, %c0_i32_0 : i32, i32
  }
  func.func @transform_1(%arg0: i32) -> (i32, i32) {
    %c0_i32 = arith.constant 0 : i32
    %c0_i32_0 = arith.constant 0 : i32
    %c0_i32_1 = arith.constant 0 : i32
    return %c0_i32, %c0_i32_0 : i32, i32
  }
  func.func @transform_2(%arg0: i32) -> (i32, i32) {
    %c0_i32 = arith.constant 0 : i32
    %c0_i32_0 = arith.constant 0 : i32
    %c0_i32_1 = arith.constant 0 : i32
    return %c0_i32, %c0_i32_0 : i32, i32
  }
  func.func @transform_3(%arg0: i32) -> (i32, i32) {
    %c0_i32 = arith.constant 0 : i32
    %c0_i32_0 = arith.constant 0 : i32
    %c0_i32_1 = arith.constant 0 : i32
    return %c0_i32, %c0_i32_0 : i32, i32
  }
  func.func @transform_4(%arg0: i32) -> (i32, i32) {
    %c0_i32 = arith.constant 0 : i32
    %c0_i32_0 = arith.constant 0 : i32
    %c0_i32_1 = arith.constant 0 : i32
    return %c0_i32, %c0_i32_0 : i32, i32
  }
  func.func @transform_5(%arg0: i32) -> (i32, i32) {
    %c0_i32 = arith.constant 0 : i32
    %c0_i32_0 = arith.constant 0 : i32
    %c0_i32_1 = arith.constant 0 : i32
    return %c0_i32, %c0_i32_0 : i32, i32
  }
  func.func @transform_6(%arg0: i32) -> (i32, i32) {
    %c0_i32 = arith.constant 0 : i32
    %c0_i32_0 = arith.constant 0 : i32
    %c0_i32_1 = arith.constant 0 : i32
    return %c0_i32, %c0_i32_0 : i32, i32
  }
  func.func @transform_7(%arg0: i32) -> (i32, i32) {
    %c0_i32 = arith.constant 0 : i32
    %c0_i32_0 = arith.constant 0 : i32
    %c0_i32_1 = arith.constant 0 : i32
    return %c0_i32, %c0_i32_0 : i32, i32
  }
  func.func @transform_8(%arg0: i32) -> (i32, i32) {
    %c0_i32 = arith.constant 0 : i32
    %c0_i32_0 = arith.constant 0 : i32
    %c0_i32_1 = arith.constant 0 : i32
    return %c0_i32, %c0_i32_0 : i32, i32
  }
  func.func @transform_9(%arg0: i32) -> (i32, i32) {
    %c0_i32 = arith.constant 0 : i32
    %c0_i32_0 = arith.constant 0 : i32
    %c0_i32_1 = arith.constant 0 : i32
    return %c0_i32, %c0_i32_0 : i32, i32
  }
  func.func @transform_10(%arg0: i32) -> (i32, i32) {
    %c0_i32 = arith.constant 0 : i32
    %c0_i32_0 = arith.constant 0 : i32
    %c0_i32_1 = arith.constant 0 : i32
    return %c0_i32, %c0_i32_0 : i32, i32
  }
  func.func @transform_11(%arg0: i32) -> (i32, i32) {
    %c0_i32 = arith.constant 0 : i32
    %c0_i32_0 = arith.constant 0 : i32
    %c0_i32_1 = arith.constant 0 : i32
    return %c0_i32, %c0_i32_0 : i32, i32
  }
  func.func @transform_12(%arg0: i32) -> (i32, i32) {
    %c0_i32 = arith.constant 0 : i32
    %c0_i32_0 = arith.constant 0 : i32
    %c0_i32_1 = arith.constant 0 : i32
    return %c0_i32, %c0_i32_0 : i32, i32
  }
  func.func @transform_13(%arg0: i32) -> (i32, i32) {
    %c0_i32 = arith.constant 0 : i32
    %c0_i32_0 = arith.constant 0 : i32
    %c0_i32_1 = arith.constant 0 : i32
    return %c0_i32, %c0_i32_0 : i32, i32
  }
  func.func @transform_14(%arg0: i32) -> (i32, i32) {
    %c0_i32 = arith.constant 0 : i32
    %c0_i32_0 = arith.constant 0 : i32
    %c0_i32_1 = arith.constant 0 : i32
    return %c0_i32, %c0_i32_0 : i32, i32
  }
  func.func @transform_15(%arg0: i32) -> (i32, i32) {
    %c0_i32 = arith.constant 0 : i32
    %c0_i32_0 = arith.constant 0 : i32
    %c0_i32_1 = arith.constant 0 : i32
    return %c0_i32, %c0_i32_0 : i32, i32
  }
  func.func @transform_16(%arg0: i32) -> (i32, i32) {
    %c0_i32 = arith.constant 0 : i32
    %c0_i32_0 = arith.constant 0 : i32
    %c0_i32_1 = arith.constant 0 : i32
    return %c0_i32, %c0_i32_0 : i32, i32
  }
  func.func @transform_17(%arg0: i32) -> (i32, i32) {
    %c0_i32 = arith.constant 0 : i32
    %c0_i32_0 = arith.constant 0 : i32
    %c0_i32_1 = arith.constant 0 : i32
    return %c0_i32, %c0_i32_0 : i32, i32
  }
  func.func @transform_18(%arg0: i32) -> (i32, i32) {
    %c0_i32 = arith.constant 0 : i32
    %c0_i32_0 = arith.constant 0 : i32
    %c0_i32_1 = arith.constant 0 : i32
    return %c0_i32, %c0_i32_0 : i32, i32
  }
  func.func @transform_19(%arg0: i32) -> (i32, i32) {
    %c0_i32 = arith.constant 0 : i32
    %c0_i32_0 = arith.constant 0 : i32
    %c0_i32_1 = arith.constant 0 : i32
    return %c0_i32, %c0_i32_0 : i32, i32
  }
  func.func @transform_20(%arg0: i32) -> (i32, i32) {
    %c0_i32 = arith.constant 0 : i32
    %c0_i32_0 = arith.constant 0 : i32
    %c0_i32_1 = arith.constant 0 : i32
    return %c0_i32, %c0_i32_0 : i32, i32
  }
  func.func @transform_21(%arg0: i32) -> (i32, i32) {
    %c0_i32 = arith.constant 0 : i32
    %c0_i32_0 = arith.constant 0 : i32
    %c0_i32_1 = arith.constant 0 : i32
    return %c0_i32, %c0_i32_0 : i32, i32
  }
  func.func @transform_22(%arg0: i32) -> (i32, i32) {
    %c0_i32 = arith.constant 0 : i32
    %c0_i32_0 = arith.constant 0 : i32
    %c0_i32_1 = arith.constant 0 : i32
    return %c0_i32, %c0_i32_0 : i32, i32
  }
  func.func @transform_23(%arg0: i32) -> (i32, i32) {
    %c0_i32 = arith.constant 0 : i32
    %c0_i32_0 = arith.constant 0 : i32
    %c0_i32_1 = arith.constant 0 : i32
    return %c0_i32, %c0_i32_0 : i32, i32
  }
  func.func @transform_24(%arg0: i32) -> (i32, i32) {
    %c0_i32 = arith.constant 0 : i32
    %c0_i32_0 = arith.constant 0 : i32
    %c0_i32_1 = arith.constant 0 : i32
    return %c0_i32, %c0_i32_0 : i32, i32
  }
  func.func @transform_25(%arg0: i32) -> (i32, i32) {
    %c0_i32 = arith.constant 0 : i32
    %c0_i32_0 = arith.constant 0 : i32
    %c0_i32_1 = arith.constant 0 : i32
    return %c0_i32, %c0_i32_0 : i32, i32
  }
  func.func @transform_26(%arg0: i32) -> (i32, i32) {
    %c0_i32 = arith.constant 0 : i32
    %c0_i32_0 = arith.constant 0 : i32
    %c0_i32_1 = arith.constant 0 : i32
    return %c0_i32, %c0_i32_0 : i32, i32
  }
  func.func @transform_27(%arg0: i32) -> (i32, i32) {
    %c0_i32 = arith.constant 0 : i32
    %c0_i32_0 = arith.constant 0 : i32
    %c0_i32_1 = arith.constant 0 : i32
    return %c0_i32, %c0_i32_0 : i32, i32
  }
  func.func @transform_28(%arg0: i32) -> (i32, i32) {
    %c0_i32 = arith.constant 0 : i32
    %c0_i32_0 = arith.constant 0 : i32
    %c0_i32_1 = arith.constant 0 : i32
    return %c0_i32, %c0_i32_0 : i32, i32
  }
  func.func @transform_29(%arg0: i32) -> (i32, i32) {
    %c0_i32 = arith.constant 0 : i32
    %c0_i32_0 = arith.constant 0 : i32
    %c0_i32_1 = arith.constant 0 : i32
    return %c0_i32, %c0_i32_0 : i32, i32
  }
  func.func @transform_30(%arg0: i32) -> (i32, i32) {
    %c0_i32 = arith.constant 0 : i32
    %c0_i32_0 = arith.constant 0 : i32
    %c0_i32_1 = arith.constant 0 : i32
    return %c0_i32, %c0_i32_0 : i32, i32
  }
  func.func @transform_31(%arg0: i32) -> (i32, i32) {
    %c0_i32 = arith.constant 0 : i32
    %c0_i32_0 = arith.constant 0 : i32
    %c0_i32_1 = arith.constant 0 : i32
    return %c0_i32, %c0_i32_0 : i32, i32
  }
  func.func @transform_32(%arg0: i32) -> (i32, i32) {
    %c0_i32 = arith.constant 0 : i32
    %c0_i32_0 = arith.constant 0 : i32
    %c0_i32_1 = arith.constant 0 : i32
    return %c0_i32, %c0_i32_0 : i32, i32
  }
  func.func @transform_33(%arg0: i32) -> i32 {
    %c0_i32 = arith.constant 0 : i32
    %c0_i32_0 = arith.constant 0 : i32
    return %c0_i32 : i32
  }
}

</mosaic_0001>

<llo_original>
// kernel: squeeze.0
$region0: #{squeeze.0}
  %s0 = inlined_call_operand.vmem [shape: s32[2,8], index: 0, kind: input, shape index: {}]
  %s1 = inlined_call_operand.vmem [shape: s32[16,1], index: 1, kind: output, shape index: {}]
  $region1: #{squeeze.0} parent=0
    #allocation0 [shape = 'u8[4096]{0}', space=vmem, size = 0x1000, scoped, tag = 'scoped mem for input reshape']
    %s3 = sshllo.u32 0, 2
    %v4 = vld [vmem:[%s0] sm:%s3]
    %5 = vst [vmem:[#allocation0] sm:%s3] %v4
    %v6 = vld [vmem:[#allocation0] sm:$0x3]
    %vm7 = vcmask 7168
    %8 = vst.msk [vmem:[%s1] ss:$8 sm:$0x3] %vm7, %v6
    %v9 = vld [vmem:[#allocation0] sm:$0x3]
    %10 = vrot.lane.b32.xlu0 %v9, 127
    %v11 = vpop.permute.xlu0 %10
    %vm12 = vcmask 7168
    %s13 = scalar_lea.vmem %s1, 1
    %14 = vst.msk [vmem:[%s13] ss:$8 sm:$0x3] %vm12, %v11
    %v15 = vld [vmem:[#allocation0] sm:$0x3]
    %16 = vrot.lane.b32.xlu0 %v15, 126
    %v17 = vpop.permute.xlu0 %16
    %vm18 = vcmask 7168
    %s19 = scalar_lea.vmem %s1, 2
    %20 = vst.msk [vmem:[%s19] ss:$8 sm:$0x3] %vm18, %v17
    %v21 = vld [vmem:[#allocation0] sm:$0x3]
    %22 = vrot.lane.b32.xlu0 %v21, 125
    %v23 = vpop.permute.xlu0 %22
    %vm24 = vcmask 7168
    %s25 = scalar_lea.vmem %s1, 3
    %26 = vst.msk [vmem:[%s25] ss:$8 sm:$0x3] %vm24, %v23
    %v27 = vld [vmem:[#allocation0] sm:$0x3]
    %28 = vrot.lane.b32.xlu0 %v27, 124
    %v29 = vpop.permute.xlu0 %28
    %vm30 = vcmask 7168
    %s31 = scalar_lea.vmem %s1, 4
    %32 = vst.msk [vmem:[%s31] ss:$8 sm:$0x3] %vm30, %v29
    %v33 = vld [vmem:[#allocation0] sm:$0x3]
    %34 = vrot.lane.b32.xlu0 %v33, 123
    %v35 = vpop.permute.xlu0 %34
    %vm36 = vcmask 7168
    %s37 = scalar_lea.vmem %s1, 5
    %38 = vst.msk [vmem:[%s37] ss:$8 sm:$0x3] %vm36, %v35
    %v39 = vld [vmem:[#allocation0] sm:$0x3]
    %40 = vrot.lane.b32.xlu0 %v39, 122
    %v41 = vpop.permute.xlu0 %40
    %vm42 = vcmask 7168
    %s43 = scalar_lea.vmem %s1, 6
    %44 = vst.msk [vmem:[%s43] ss:$8 sm:$0x3] %vm42, %v41
    %v45 = vld [vmem:[#allocation0] sm:$0x3]
    %46 = vrot.lane.b32.xlu0 %v45, 121
    %v47 = vpop.permute.xlu0 %46
    %vm48 = vcmask 7168
    %s49 = scalar_lea.vmem %s1, 7
    %50 = vst.msk [vmem:[%s49] ss:$8 sm:$0x3] %vm48, %v47

// kernel: mvm_forward.1
$region0: #{mvm_forward.1}
  #allocation0 [shape = 'u32[]', space=smem, size = 0x4, offset = 0x4, fixed_abs, tag = 'smem constant byte address 0x4 - core index']
  #allocation1 [shape = 'u32[144,128]{1,0:T(1,128)}', space=vmem, size = 0x12000, scoped, tag = 'internal scratch']
  %s0 = inlined_call_operand.smem [shape: u32[34], index: -1, kind: input, shape index: {}]
  %s1 = sld [smem:[%s0]]
  %s2 = scalar_lea.smem %s0, 1
  %s3 = sld [smem:[%s2]]
  %s4 = scalar_lea.smem %s0, 2
  %s5 = sld [smem:[%s4]]
  %s6 = scalar_lea.smem %s0, 3
  %s7 = sld [smem:[%s6]]
  %s8 = scalar_lea.smem %s0, 4
  %s9 = sld [smem:[%s8]]
  %s10 = scalar_lea.smem %s0, 5
  %s11 = sld [smem:[%s10]]
  %s12 = scalar_lea.smem %s0, 6
  %s13 = sld [smem:[%s12]]
  %s14 = scalar_lea.smem %s0, 7
  %s15 = sld [smem:[%s14]]
  %s16 = scalar_lea.smem %s0, 8
  %s17 = sld [smem:[%s16]]
  %s18 = scalar_lea.smem %s0, 9
  %s19 = sld [smem:[%s18]]
  %s20 = scalar_lea.smem %s0, 10
  %s21 = sld [smem:[%s20]]
  %s22 = scalar_lea.smem %s0, 11
  %s23 = sld [smem:[%s22]]
  %s24 = scalar_lea.smem %s0, 12
  %s25 = sld [smem:[%s24]]
  %s26 = scalar_lea.smem %s0, 13
  %s27 = sld [smem:[%s26]]
  %s28 = scalar_lea.smem %s0, 14
  %s29 = sld [smem:[%s28]]
  %s30 = scalar_lea.smem %s0, 15
  %s31 = sld [smem:[%s30]]
  %s32 = scalar_lea.smem %s0, 16
  %s33 = sld [smem:[%s32]]
  %s34 = scalar_lea.smem %s0, 17
  %s35 = sld [smem:[%s34]]
  %s36 = scalar_lea.smem %s0, 18
  %s37 = sld [smem:[%s36]]
  %s38 = scalar_lea.smem %s0, 19
  %s39 = sld [smem:[%s38]]
  %s40 = scalar_lea.smem %s0, 20
  %s41 = sld [smem:[%s40]]
  %s42 = scalar_lea.smem %s0, 21
  %s43 = sld [smem:[%s42]]
  %s44 = scalar_lea.smem %s0, 22
  %s45 = sld [smem:[%s44]]
  %s46 = scalar_lea.smem %s0, 23
  %s47 = sld [smem:[%s46]]
  %s48 = scalar_lea.smem %s0, 24
  %s49 = sld [smem:[%s48]]
  %s50 = scalar_lea.smem %s0, 25
  %s51 = sld [smem:[%s50]]
  %s52 = scalar_lea.smem %s0, 26
  %s53 = sld [smem:[%s52]]
  %s54 = scalar_lea.smem %s0, 27
  %s55 = sld [smem:[%s54]]
  %s56 = scalar_lea.smem %s0, 28
  %s57 = sld [smem:[%s56]]
  %s58 = scalar_lea.smem %s0, 29
  %s59 = sld [smem:[%s58]]
  %s60 = scalar_lea.smem %s0, 30
  %s61 = sld [smem:[%s60]]
  %s62 = scalar_lea.smem %s0, 31
  %s63 = sld [smem:[%s62]]
  %s64 = scalar_lea.smem %s0, 32
  %s65 = sld [smem:[%s64]]
  %s66 = scalar_lea.smem %s0, 33
  %s67 = sld [smem:[%s66]]
  %68 = xla_tuple %s63, %s65, %s67
  %s69 = sld [smem:[#allocation0]]
  $region150: #{mvm_forward.1} parent=0
    _
  %s71 = ssub.s32 1, %s69
  %s72 = scalar_select 0, %s71, %s69
  $region1: #{mvm_forward.1} parent=0
    #allocation2 [shape = 'u8[1024]{0}', space=vmem, size = 0x400, scoped, tag = 'output window, operand 0, single buffered']
    #allocation3 [shape = 's32[1]{0}', space=sflag, size = 0x4, scoped, tag = 'scoped memory for mvm_forward.1']
    #allocation4 [shape = 's32[1]{0}', space=sflag, size = 0x4, scoped, tag = 'scoped memory for mvm_forward.1']
    #allocation5 [shape = 'u8[512]{0}', space=smem, size = 0x200, scoped, tag = 'output window, operand 2, single buffered']
    %73 = vsyncpa [#allocation3], 0
    %74 = vsyncpa [#allocation4], 0
    // Predicated region
    $region2: #{mvm_forward.1} parent=1 // pred_check
      _
    $region3: #{mvm_forward.1} parent=1 // pred_check_branch
      %76 = sbr.rel (0) target = $region5
    $region4: #{mvm_forward.1} parent=1 // pred_region
      _
    $region5: #{mvm_forward.1} parent=1 // pred_fallthru
      _
    // Predicated region
    $region6: #{mvm_forward.1} parent=1 // pred_check
      _
    $region7: #{mvm_forward.1} parent=1 // pred_check_branch
      %78 = sbr.rel (0) target = $region9
    $region8: #{mvm_forward.1} parent=1 // pred_region
      _
    $region9: #{mvm_forward.1} parent=1 // pred_fallthru
      _
    // Predicated region
    $region10: #{mvm_forward.1} parent=1 // pred_check
      _
    $region11: #{mvm_forward.1} parent=1 // pred_check_branch
      %80 = sbr.rel (0) target = $region13
    $region12: #{mvm_forward.1} parent=1 // pred_region
      _
    $region13: #{mvm_forward.1} parent=1 // pred_fallthru
      _
    // Predicated region
    $region14: #{mvm_forward.1} parent=1 // pred_check
      _
    $region15: #{mvm_forward.1} parent=1 // pred_check_branch
      %82 = sbr.rel (0) target = $region17
    $region16: #{mvm_forward.1} parent=1 // pred_region
      _
    $region17: #{mvm_forward.1} parent=1 // pred_fallthru
      _
    // Predicated region
    $region18: #{mvm_forward.1} parent=1 // pred_check
      _
    $region19: #{mvm_forward.1} parent=1 // pred_check_branch
      %84 = sbr.rel (0) target = $region21
    $region20: #{mvm_forward.1} parent=1 // pred_region
      _
    $region21: #{mvm_forward.1} parent=1 // pred_fallthru
      _
    // Predicated region
    $region22: #{mvm_forward.1} parent=1 // pred_check
      _
    $region23: #{mvm_forward.1} parent=1 // pred_check_branch
      %86 = sbr.rel (0) target = $region25
    $region24: #{mvm_forward.1} parent=1 // pred_region
      _
    $region25: #{mvm_forward.1} parent=1 // pred_fallthru
      _
    // Predicated region
    $region26: #{mvm_forward.1} parent=1 // pred_check
      _
    $region27: #{mvm_forward.1} parent=1 // pred_check_branch
      %88 = sbr.rel (0) target = $region29
    $region28: #{mvm_forward.1} parent=1 // pred_region
      _
    $region29: #{mvm_forward.1} parent=1 // pred_fallthru
      _
    // Predicated region
    $region30: #{mvm_forward.1} parent=1 // pred_check
      _
    $region31: #{mvm_forward.1} parent=1 // pred_check_branch
      %90 = sbr.rel (0) target = $region33
    $region32: #{mvm_forward.1} parent=1 // pred_region
      _
    $region33: #{mvm_forward.1} parent=1 // pred_fallthru
      _
    // Predicated region
    $region34: #{mvm_forward.1} parent=1 // pred_check
      _
    $region35: #{mvm_forward.1} parent=1 // pred_check_branch
      %92 = sbr.rel (0) target = $region37
    $region36: #{mvm_forward.1} parent=1 // pred_region
      _
    $region37: #{mvm_forward.1} parent=1 // pred_fallthru
      _
    // Predicated region
    $region38: #{mvm_forward.1} parent=1 // pred_check
      _
    $region39: #{mvm_forward.1} parent=1 // pred_check_branch
      %94 = sbr.rel (0) target = $region41
    $region40: #{mvm_forward.1} parent=1 // pred_region
      _
    $region41: #{mvm_forward.1} parent=1 // pred_fallthru
      _
    // Predicated region
    $region42: #{mvm_forward.1} parent=1 // pred_check
      _
    $region43: #{mvm_forward.1} parent=1 // pred_check_branch
      %96 = sbr.rel (0) target = $region45
    $region44: #{mvm_forward.1} parent=1 // pred_region
      _
    $region45: #{mvm_forward.1} parent=1 // pred_fallthru
      _
    // Predicated region
    $region46: #{mvm_forward.1} parent=1 // pred_check
      _
    $region47: #{mvm_forward.1} parent=1 // pred_check_branch
      %98 = sbr.rel (0) target = $region49
    $region48: #{mvm_forward.1} parent=1 // pred_region
      _
    $region49: #{mvm_forward.1} parent=1 // pred_fallthru
      _
    // Predicated region
    $region50: #{mvm_forward.1} parent=1 // pred_check
      _
    $region51: #{mvm_forward.1} parent=1 // pred_check_branch
      %100 = sbr.rel (0) target = $region53
    $region52: #{mvm_forward.1} parent=1 // pred_region
      _
    $region53: #{mvm_forward.1} parent=1 // pred_fallthru
      _
    // Predicated region
    $region54: #{mvm_forward.1} parent=1 // pred_check
      _
    $region55: #{mvm_forward.1} parent=1 // pred_check_branch
      %102 = sbr.rel (0) target = $region57
    $region56: #{mvm_forward.1} parent=1 // pred_region
      _
    $region57: #{mvm_forward.1} parent=1 // pred_fallthru
      _
    // Predicated region
    $region58: #{mvm_forward.1} parent=1 // pred_check
      _
    $region59: #{mvm_forward.1} parent=1 // pred_check_branch
      %104 = sbr.rel (0) target = $region61
    $region60: #{mvm_forward.1} parent=1 // pred_region
      _
    $region61: #{mvm_forward.1} parent=1 // pred_fallthru
      _
    // Predicated region
    $region62: #{mvm_forward.1} parent=1 // pred_check
      _
    $region63: #{mvm_forward.1} parent=1 // pred_check_branch
      %106 = sbr.rel (0) target = $region65
    $region64: #{mvm_forward.1} parent=1 // pred_region
      _
    $region65: #{mvm_forward.1} parent=1 // pred_fallthru
      _
    // Predicated region
    $region66: #{mvm_forward.1} parent=1 // pred_check
      _
    $region67: #{mvm_forward.1} parent=1 // pred_check_branch
      %108 = sbr.rel (0) target = $region69
    $region68: #{mvm_forward.1} parent=1 // pred_region
      _
    $region69: #{mvm_forward.1} parent=1 // pred_fallthru
      _
    // Predicated region
    $region70: #{mvm_forward.1} parent=1 // pred_check
      _
    $region71: #{mvm_forward.1} parent=1 // pred_check_branch
      %110 = sbr.rel (0) target = $region73
    $region72: #{mvm_forward.1} parent=1 // pred_region
      _
    $region73: #{mvm_forward.1} parent=1 // pred_fallthru
      _
    // Predicated region
    $region74: #{mvm_forward.1} parent=1 // pred_check
      _
    $region75: #{mvm_forward.1} parent=1 // pred_check_branch
      %112 = sbr.rel (0) target = $region77
    $region76: #{mvm_forward.1} parent=1 // pred_region
      _
    $region77: #{mvm_forward.1} parent=1 // pred_fallthru
      _
    // Predicated region
    $region78: #{mvm_forward.1} parent=1 // pred_check
      _
    $region79: #{mvm_forward.1} parent=1 // pred_check_branch
      %114 = sbr.rel (0) target = $region81
    $region80: #{mvm_forward.1} parent=1 // pred_region
      _
    $region81: #{mvm_forward.1} parent=1 // pred_fallthru
      _
    // Predicated region
    $region82: #{mvm_forward.1} parent=1 // pred_check
      _
    $region83: #{mvm_forward.1} parent=1 // pred_check_branch
      %116 = sbr.rel (0) target = $region85
    $region84: #{mvm_forward.1} parent=1 // pred_region
      _
    $region85: #{mvm_forward.1} parent=1 // pred_fallthru
      _
    // Predicated region
    $region86: #{mvm_forward.1} parent=1 // pred_check
      _
    $region87: #{mvm_forward.1} parent=1 // pred_check_branch
      %118 = sbr.rel (0) target = $region89
    $region88: #{mvm_forward.1} parent=1 // pred_region
      _
    $region89: #{mvm_forward.1} parent=1 // pred_fallthru
      _
    // Predicated region
    $region90: #{mvm_forward.1} parent=1 // pred_check
      _
    $region91: #{mvm_forward.1} parent=1 // pred_check_branch
      %120 = sbr.rel (0) target = $region93
    $region92: #{mvm_forward.1} parent=1 // pred_region
      _
    $region93: #{mvm_forward.1} parent=1 // pred_fallthru
      _
    // Predicated region
    $region94: #{mvm_forward.1} parent=1 // pred_check
      _
    $region95: #{mvm_forward.1} parent=1 // pred_check_branch
      %122 = sbr.rel (0) target = $region97
    $region96: #{mvm_forward.1} parent=1 // pred_region
      _
    $region97: #{mvm_forward.1} parent=1 // pred_fallthru
      _
    // Predicated region
    $region98: #{mvm_forward.1} parent=1 // pred_check
      _
    $region99: #{mvm_forward.1} parent=1 // pred_check_branch
      %124 = sbr.rel (0) target = $region101
    $region100: #{mvm_forward.1} parent=1 // pred_region
      _
    $region101: #{mvm_forward.1} parent=1 // pred_fallthru
      _
    // Predicated region
    $region102: #{mvm_forward.1} parent=1 // pred_check
      _
    $region103: #{mvm_forward.1} parent=1 // pred_check_branch
      %126 = sbr.rel (0) target = $region105
    $region104: #{mvm_forward.1} parent=1 // pred_region
      _
    $region105: #{mvm_forward.1} parent=1 // pred_fallthru
      _
    // Predicated region
    $region106: #{mvm_forward.1} parent=1 // pred_check
      _
    $region107: #{mvm_forward.1} parent=1 // pred_check_branch
      %128 = sbr.rel (0) target = $region109
    $region108: #{mvm_forward.1} parent=1 // pred_region
      _
    $region109: #{mvm_forward.1} parent=1 // pred_fallthru
      _
    // Predicated region
    $region110: #{mvm_forward.1} parent=1 // pred_check
      _
    $region111: #{mvm_forward.1} parent=1 // pred_check_branch
      %130 = sbr.rel (0) target = $region113
    $region112: #{mvm_forward.1} parent=1 // pred_region
      _
    $region113: #{mvm_forward.1} parent=1 // pred_fallthru
      _
    // Predicated region
    $region114: #{mvm_forward.1} parent=1 // pred_check
      _
    $region115: #{mvm_forward.1} parent=1 // pred_check_branch
      %132 = sbr.rel (0) target = $region117
    $region116: #{mvm_forward.1} parent=1 // pred_region
      _
    $region117: #{mvm_forward.1} parent=1 // pred_fallthru
      _
    // Predicated region
    $region118: #{mvm_forward.1} parent=1 // pred_check
      _
    $region119: #{mvm_forward.1} parent=1 // pred_check_branch
      %134 = sbr.rel (0) target = $region121
    $region120: #{mvm_forward.1} parent=1 // pred_region
      _
    $region121: #{mvm_forward.1} parent=1 // pred_fallthru
      _
    // Predicated region
    $region122: #{mvm_forward.1} parent=1 // pred_check
      _
    $region123: #{mvm_forward.1} parent=1 // pred_check_branch
      %136 = sbr.rel (0) target = $region125
    $region124: #{mvm_forward.1} parent=1 // pred_region
      _
    $region125: #{mvm_forward.1} parent=1 // pred_fallthru
      _
    %v138 = vld [vmem:[%s1] sm:$0xff]
    %v139 = vld [vmem:[%s1 + $0x8] sm:$0xff]
    %v140 = vld [vmem:[%s1 + $0x10] sm:$0xff]
    %v141 = vld [vmem:[%s3] sm:$0xff]
    %v142 = vld [vmem:[%s3 + $0x8] sm:$0xff]
    %v143 = vld [vmem:[%s3 + $0x10] sm:$0xff]
    %v144 = vlaneseq
    %v145 = vand.u32 %v144, 127
    %146 = vset.pattern.permute.xlu0 0
    %147 = vperm.xlu0 %146, %v138
    %v148 = vpop.permute.xlu0 %147
    %149 = vset.pattern.permute.xlu0 0
    %150 = vperm.xlu0 %149, %v139
    %v151 = vpop.permute.xlu0 %150
    %152 = vset.pattern.permute.xlu0 0
    %153 = vperm.xlu0 %152, %v140
    %v154 = vpop.permute.xlu0 %153
    %vm155 = vcmp.eq.s32.totalorder %v145, %v148
    %vm156 = vcmp.eq.s32.totalorder %v145, %v151
    %vm157 = vcmp.eq.s32.totalorder %v145, %v154
    %v158 = vsel %vm155, 1, 0
    %v159 = vsel %vm156, 1, 0
    %v160 = vsel %vm157, 1, 0
    %v161 = vcvt.s32.f32 %v158
    %v162 = vcvt.s32.f32 %v159
    %v163 = vcvt.s32.f32 %v160
    %165 = vset.pattern.permute.xlu0 0
    %166 = vperm.xlu0 %165, %v141
    %v167 = vpop.permute.xlu0 %166
    %170 = vset.pattern.permute.xlu0 0
    %171 = vperm.xlu0 %170, %v142
    %v172 = vpop.permute.xlu0 %171
    %175 = vset.pattern.permute.xlu0 0
    %176 = vperm.xlu0 %175, %v143
    %v177 = vpop.permute.xlu0 %176
    %v179 = vmul.f32 %v161, %v167
    %v180 = vmul.f32 %v162, %v172
    %v181 = vmul.f32 %v163, %v177
    %v182 = vadd.f32 %v179, 0.0
    %v183 = vadd.f32 %v180, 0.0
    %v184 = vadd.f32 %v181, 0.0
    %185 = vset.pattern.permute.xlu0 1
    %186 = vperm.xlu0 %185, %v138
    %v187 = vpop.permute.xlu0 %186
    %188 = vset.pattern.permute.xlu0 1
    %189 = vperm.xlu0 %188, %v139
    %v190 = vpop.permute.xlu0 %189
    %191 = vset.pattern.permute.xlu0 1
    %192 = vperm.xlu0 %191, %v140
    %v193 = vpop.permute.xlu0 %192
    %vm194 = vcmp.eq.s32.totalorder %v145, %v187
    %vm195 = vcmp.eq.s32.totalorder %v145, %v190
    %vm196 = vcmp.eq.s32.totalorder %v145, %v193
    %v197 = vsel %vm194, 1, 0
    %v198 = vsel %vm195, 1, 0
    %v199 = vsel %vm196, 1, 0
    %v200 = vcvt.s32.f32 %v197
    %v201 = vcvt.s32.f32 %v198
    %v202 = vcvt.s32.f32 %v199
    %203 = vset.pattern.permute.xlu0 1
    %204 = vperm.xlu0 %203, %v141
    %v205 = vpop.permute.xlu0 %204
    %207 = vset.pattern.permute.xlu0 1
    %208 = vperm.xlu0 %207, %v142
    %v209 = vpop.permute.xlu0 %208
    %211 = vset.pattern.permute.xlu0 1
    %212 = vperm.xlu0 %211, %v143
    %v213 = vpop.permute.xlu0 %212
    %v215 = vmul.f32 %v200, %v205
    %v216 = vmul.f32 %v201, %v209
    %v217 = vmul.f32 %v202, %v213
    %v218 = vadd.f32 %v182, %v215
    %v219 = vadd.f32 %v183, %v216
    %v220 = vadd.f32 %v184, %v217
    %221 = vset.pattern.permute.xlu0 2
    %222 = vperm.xlu0 %221, %v138
    %v223 = vpop.permute.xlu0 %222
    %224 = vset.pattern.permute.xlu0 2
    %225 = vperm.xlu0 %224, %v139
    %v226 = vpop.permute.xlu0 %225
    %227 = vset.pattern.permute.xlu0 2
    %228 = vperm.xlu0 %227, %v140
    %v229 = vpop.permute.xlu0 %228
    %vm230 = vcmp.eq.s32.totalorder %v145, %v223
    %vm231 = vcmp.eq.s32.totalorder %v145, %v226
    %vm232 = vcmp.eq.s32.totalorder %v145, %v229
    %v233 = vsel %vm230, 1, 0
    %v234 = vsel %vm231, 1, 0
    %v235 = vsel %vm232, 1, 0
    %v236 = vcvt.s32.f32 %v233
    %v237 = vcvt.s32.f32 %v234
    %v238 = vcvt.s32.f32 %v235
    %239 = vset.pattern.permute.xlu0 2
    %240 = vperm.xlu0 %239, %v141
    %v241 = vpop.permute.xlu0 %240
    %243 = vset.pattern.permute.xlu0 2
    %244 = vperm.xlu0 %243, %v142
    %v245 = vpop.permute.xlu0 %244
    %247 = vset.pattern.permute.xlu0 2
    %248 = vperm.xlu0 %247, %v143
    %v249 = vpop.permute.xlu0 %248
    %v251 = vmul.f32 %v236, %v241
    %v252 = vmul.f32 %v237, %v245
    %v253 = vmul.f32 %v238, %v249
    %v254 = vadd.f32 %v218, %v251
    %v255 = vadd.f32 %v219, %v252
    %v256 = vadd.f32 %v220, %v253
    %257 = vset.pattern.permute.xlu0 3
    %258 = vperm.xlu0 %257, %v138
    %v259 = vpop.permute.xlu0 %258
    %260 = vset.pattern.permute.xlu0 3
    %261 = vperm.xlu0 %260, %v139
    %v262 = vpop.permute.xlu0 %261
    %263 = vset.pattern.permute.xlu0 3
    %264 = vperm.xlu0 %263, %v140
    %v265 = vpop.permute.xlu0 %264
    %vm266 = vcmp.eq.s32.totalorder %v145, %v259
    %vm267 = vcmp.eq.s32.totalorder %v145, %v262
    %vm268 = vcmp.eq.s32.totalorder %v145, %v265
    %v269 = vsel %vm266, 1, 0
    %v270 = vsel %vm267, 1, 0
    %v271 = vsel %vm268, 1, 0
    %v272 = vcvt.s32.f32 %v269
    %v273 = vcvt.s32.f32 %v270
    %v274 = vcvt.s32.f32 %v271
    %275 = vset.pattern.permute.xlu0 3
    %276 = vperm.xlu0 %275, %v141
    %v277 = vpop.permute.xlu0 %276
    %279 = vset.pattern.permute.xlu0 3
    %280 = vperm.xlu0 %279, %v142
    %v281 = vpop.permute.xlu0 %280
    %283 = vset.pattern.permute.xlu0 3
    %284 = vperm.xlu0 %283, %v143
    %v285 = vpop.permute.xlu0 %284
    %v287 = vmul.f32 %v272, %v277
    %v288 = vmul.f32 %v273, %v281
    %v289 = vmul.f32 %v274, %v285
    %v290 = vadd.f32 %v254, %v287
    %v291 = vadd.f32 %v255, %v288
    %v292 = vadd.f32 %v256, %v289
    %293 = vset.pattern.permute.xlu0 4
    %294 = vperm.xlu0 %293, %v138
    %v295 = vpop.permute.xlu0 %294
    %296 = vset.pattern.permute.xlu0 4
    %297 = vperm.xlu0 %296, %v139
    %v298 = vpop.permute.xlu0 %297
    %299 = vset.pattern.permute.xlu0 4
    %300 = vperm.xlu0 %299, %v140
    %v301 = vpop.permute.xlu0 %300
    %vm302 = vcmp.eq.s32.totalorder %v145, %v295
    %vm303 = vcmp.eq.s32.totalorder %v145, %v298
    %vm304 = vcmp.eq.s32.totalorder %v145, %v301
    %v305 = vsel %vm302, 1, 0
    %v306 = vsel %vm303, 1, 0
    %v307 = vsel %vm304, 1, 0
    %v308 = vcvt.s32.f32 %v305
    %v309 = vcvt.s32.f32 %v306
    %v310 = vcvt.s32.f32 %v307
    %311 = vset.pattern.permute.xlu0 4
    %312 = vperm.xlu0 %311, %v141
    %v313 = vpop.permute.xlu0 %312
    %315 = vset.pattern.permute.xlu0 4
    %316 = vperm.xlu0 %315, %v142
    %v317 = vpop.permute.xlu0 %316
    %319 = vset.pattern.permute.xlu0 4
    %320 = vperm.xlu0 %319, %v143
    %v321 = vpop.permute.xlu0 %320
    %v323 = vmul.f32 %v308, %v313
    %v324 = vmul.f32 %v309, %v317
    %v325 = vmul.f32 %v310, %v321
    %v326 = vadd.f32 %v290, %v323
    %v327 = vadd.f32 %v291, %v324
    %v328 = vadd.f32 %v292, %v325
    %329 = vset.pattern.permute.xlu0 5
    %330 = vperm.xlu0 %329, %v138
    %v331 = vpop.permute.xlu0 %330
    %332 = vset.pattern.permute.xlu0 5
    %333 = vperm.xlu0 %332, %v139
    %v334 = vpop.permute.xlu0 %333
    %335 = vset.pattern.permute.xlu0 5
    %336 = vperm.xlu0 %335, %v140
    %v337 = vpop.permute.xlu0 %336
    %vm338 = vcmp.eq.s32.totalorder %v145, %v331
    %vm339 = vcmp.eq.s32.totalorder %v145, %v334
    %vm340 = vcmp.eq.s32.totalorder %v145, %v337
    %v341 = vsel %vm338, 1, 0
    %v342 = vsel %vm339, 1, 0
    %v343 = vsel %vm340, 1, 0
    %v344 = vcvt.s32.f32 %v341
    %v345 = vcvt.s32.f32 %v342
    %v346 = vcvt.s32.f32 %v343
    %347 = vset.pattern.permute.xlu0 5
    %348 = vperm.xlu0 %347, %v141
    %v349 = vpop.permute.xlu0 %348
    %351 = vset.pattern.permute.xlu0 5
    %352 = vperm.xlu0 %351, %v142
    %v353 = vpop.permute.xlu0 %352
    %355 = vset.pattern.permute.xlu0 5
    %356 = vperm.xlu0 %355, %v143
    %v357 = vpop.permute.xlu0 %356
    %v359 = vmul.f32 %v344, %v349
    %v360 = vmul.f32 %v345, %v353
    %v361 = vmul.f32 %v346, %v357
    %v362 = vadd.f32 %v326, %v359
    %v363 = vadd.f32 %v327, %v360
    %v364 = vadd.f32 %v328, %v361
    %365 = vset.pattern.permute.xlu0 6
    %366 = vperm.xlu0 %365, %v138
    %v367 = vpop.permute.xlu0 %366
    %368 = vset.pattern.permute.xlu0 6
    %369 = vperm.xlu0 %368, %v139
    %v370 = vpop.permute.xlu0 %369
    %371 = vset.pattern.permute.xlu0 6
    %372 = vperm.xlu0 %371, %v140
    %v373 = vpop.permute.xlu0 %372
    %vm374 = vcmp.eq.s32.totalorder %v145, %v367
    %vm375 = vcmp.eq.s32.totalorder %v145, %v370
    %vm376 = vcmp.eq.s32.totalorder %v145, %v373
    %v377 = vsel %vm374, 1, 0
    %v378 = vsel %vm375, 1, 0
    %v379 = vsel %vm376, 1, 0
    %v380 = vcvt.s32.f32 %v377
    %v381 = vcvt.s32.f32 %v378
    %v382 = vcvt.s32.f32 %v379
    %383 = vset.pattern.permute.xlu0 6
    %384 = vperm.xlu0 %383, %v141
    %v385 = vpop.permute.xlu0 %384
    %387 = vset.pattern.permute.xlu0 6
    %388 = vperm.xlu0 %387, %v142
    %v389 = vpop.permute.xlu0 %388
    %391 = vset.pattern.permute.xlu0 6
    %392 = vperm.xlu0 %391, %v143
    %v393 = vpop.permute.xlu0 %392
    %v395 = vmul.f32 %v380, %v385
    %v396 = vmul.f32 %v381, %v389
    %v397 = vmul.f32 %v382, %v393
    %v398 = vadd.f32 %v362, %v395
    %v399 = vadd.f32 %v363, %v396
    %v400 = vadd.f32 %v364, %v397
    %401 = vset.pattern.permute.xlu0 7
    %402 = vperm.xlu0 %401, %v138
    %v403 = vpop.permute.xlu0 %402
    %404 = vset.pattern.permute.xlu0 7
    %405 = vperm.xlu0 %404, %v139
    %v406 = vpop.permute.xlu0 %405
    %407 = vset.pattern.permute.xlu0 7
    %408 = vperm.xlu0 %407, %v140
    %v409 = vpop.permute.xlu0 %408
    %vm410 = vcmp.eq.s32.totalorder %v145, %v403
    %vm411 = vcmp.eq.s32.totalorder %v145, %v406
    %vm412 = vcmp.eq.s32.totalorder %v145, %v409
    %v413 = vsel %vm410, 1, 0
    %v414 = vsel %vm411, 1, 0
    %v415 = vsel %vm412, 1, 0
    %v416 = vcvt.s32.f32 %v413
    %v417 = vcvt.s32.f32 %v414
    %v418 = vcvt.s32.f32 %v415
    %419 = vset.pattern.permute.xlu0 7
    %420 = vperm.xlu0 %419, %v141
    %v421 = vpop.permute.xlu0 %420
    %423 = vset.pattern.permute.xlu0 7
    %424 = vperm.xlu0 %423, %v142
    %v425 = vpop.permute.xlu0 %424
    %427 = vset.pattern.permute.xlu0 7
    %428 = vperm.xlu0 %427, %v143
    %v429 = vpop.permute.xlu0 %428
    %v431 = vmul.f32 %v416, %v421
    %v432 = vmul.f32 %v417, %v425
    %v433 = vmul.f32 %v418, %v429
    %v434 = vadd.f32 %v398, %v431
    %v435 = vadd.f32 %v399, %v432
    %v436 = vadd.f32 %v400, %v433
    %vm437 = vcmask 64512
    %v438 = vsel %vm437, %v141, 0.0
    %439 = vadd.xlane.f32.xlu0 %v438
    %v440 = vpop.xlane.xlu0 %439
    %v441 = vsel %vm437, %v142, 0.0
    %442 = vadd.xlane.f32.xlu0 %v441
    %v443 = vpop.xlane.xlu0 %442
    %v444 = vsel %vm437, %v143, 0.0
    %445 = vadd.xlane.f32.xlu0 %v444
    %v446 = vpop.xlane.xlu0 %445
    %v447 = vmax.f32 %v440, 1.0
    %v448 = vmax.f32 %v443, 1.0
    %v449 = vmax.f32 %v446, 1.0
    %v450 = vld [vmem:[%s13] sm:$0xff]
    %v451 = vld [vmem:[%s13 + $0x8] sm:$0xff]
    %v452 = vld [vmem:[%s13 + $0x10] sm:$0xff]
    %v453 = vld [vmem:[%s13 + $0x18] sm:$0xff]
    %v454 = vld [vmem:[%s13 + $0x20] sm:$0xff]
    %v455 = vld [vmem:[%s13 + $0x28] sm:$0xff]
    %v456 = vld [vmem:[%s13 + $0x30] sm:$0xff]
    %v457 = vld [vmem:[%s13 + $0x38] sm:$0xff]
    %v458 = vpack.c.bf16 %v435, %v434
    %v459 = vpack.c.bf16 %v436, %v436
    %v460 = vpack.c.bf16 %v451, %v450
    %v461 = vpack.c.bf16 %v453, %v452
    %v462 = vpack.c.bf16 %v455, %v454
    %v463 = vpack.c.bf16 %v457, %v456
    %vm464 = vcmask 523264
    %v466 = vsel %vm464, %v458, 0
    %v469 = vsel %vm464, %v459, 0
    %471 = vmatprep.subr.bf16.mxu0 0
    %472 = vmatpush1.bf16.msra.mxu0 %v460
    %473 = vmatprep.subr.bf16.mxu0 0
    %474 = vmatpush1.bf16.msra.mxu0 %v461
    %475 = vmatprep.subr.bf16.mxu0 0
    %476 = vmatpush1.bf16.msra.mxu0 %v462
    %477 = vmatprep.subr.bf16.mxu0 0
    %478 = vmatpush1.bf16.msra.mxu0 %v463
    %479 = vmatprep.subr.bf16.mxu0 0
    %480 = vmatpush1.bf16.msra.mxu0 0
    %481 = vmatprep.subr.bf16.mxu0 0
    %482 = vmatpush1.bf16.msra.mxu0 0
    %483 = vmatprep.subr.bf16.mxu0 0
    %484 = vmatpush1.bf16.msra.mxu0 0
    %485 = vmatprep.subr.bf16.mxu0 0
    %486 = vmatpush1.bf16.msra.mxu0 0
    %487 = vmatprep.subr.bf16.mxu0 0
    %488 = vmatpush1.bf16.msra.mxu0 0
    %489 = vmatprep.subr.bf16.mxu0 0
    %490 = vmatpush1.bf16.msra.mxu0 0
    %491 = vmatprep.subr.bf16.mxu0 0
    %492 = vmatpush1.bf16.msra.mxu0 0
    %493 = vmatprep.subr.bf16.mxu0 0
    %494 = vmatpush1.bf16.msra.mxu0 0
    %495 = vmatprep.subr.bf16.mxu0 0
    %496 = vmatpush1.bf16.msra.mxu0 0
    %497 = vmatprep.subr.bf16.mxu0 0
    %498 = vmatpush1.bf16.msra.mxu0 0
    %499 = vmatprep.subr.bf16.mxu0 0
    %500 = vmatpush1.bf16.msra.mxu0 0
    %501 = vmatprep.subr.bf16.mxu0 0
    %502 = vmatpush1.bf16.msra.mxu0 0
    %503 = vmatprep.mubr.bf16.mxu0 0
    %504 = vmatmul.mubr.bf16.gmra.mrb[0].mxu0 %v466
    %v505 = vpop.f32.mrb[0].mxu0
    %v506 = vadd.f32 0.0, %v505
    %v507 = vpop.f32.mrb[0].mxu0
    %v508 = vpop.f32.mrb[0].mxu0
    %v509 = vadd.f32 0.0, %v508
    %v510 = vpop.f32.mrb[0].mxu0
    %511 = vmatprep.mubr.bf16.mxu0 0
    %512 = vmatmul.mubr.bf16.gmra.mrb[0].mxu0 %v469
    %v513 = vpop.f32.mrb[0].mxu0
    %v514 = vadd.f32 0.0, %v513
    %v515 = vpop.f32.mrb[0].mxu0
    %v516 = vpop.f32.mrb[0].mxu0
    %v517 = vpop.f32.mrb[0].mxu0
    %518 = vdwg.mxu0
    %v519 = vrcp.pop %v447
    %v520 = vmul.f32 %v506, %v519
    %v521 = vrcp.pop %v448
    %v522 = vmul.f32 %v509, %v521
    %v523 = vrcp.pop %v449
    %v524 = vmul.f32 %v514, %v523
    %v525 = vld [vmem:[%s15] sm:$0xff]
    %v526 = vld [vmem:[%s15 + $0x8] sm:$0xff]
    %v527 = vld [vmem:[%s15 + $0x10] sm:$0xff]
    %v528 = vld [vmem:[%s15 + $0x18] sm:$0xff]
    %v529 = vpack.c.bf16 %v522, %v520
    %v530 = vpack.c.bf16 %v524, %v524
    %v531 = vpack.c.bf16 %v526, %v525
    %v532 = vpack.c.bf16 %v528, %v527
    %v533 = vld [vmem:[%s17] sm:$0x1]
    %v535 = vlaneseq
    %v536 = vshrl.u32 %v535, 7
    %v537 = vsub.s32 0, %v536
    %v538 = vrot.slane %v533, %v537
    %vm540 = vcmask 261120
    %v542 = vsel %vm540, %v529, 0
    %v545 = vsel %vm540, %v530, 0
    %547 = vmatprep.subr.bf16.mxu0 0
    %548 = vmatpush1.bf16.msra.mxu0 %v531
    %549 = vmatprep.subr.bf16.mxu0 0
    %550 = vmatpush1.bf16.msra.mxu0 %v532
    %551 = vmatprep.subr.bf16.mxu0 0
    %552 = vmatpush1.bf16.msra.mxu0 0
    %553 = vmatprep.subr.bf16.mxu0 0
    %554 = vmatpush1.bf16.msra.mxu0 0
    %555 = vmatprep.subr.bf16.mxu0 0
    %556 = vmatpush1.bf16.msra.mxu0 0
    %557 = vmatprep.subr.bf16.mxu0 0
    %558 = vmatpush1.bf16.msra.mxu0 0
    %559 = vmatprep.subr.bf16.mxu0 0
    %560 = vmatpush1.bf16.msra.mxu0 0
    %561 = vmatprep.subr.bf16.mxu0 0
    %562 = vmatpush1.bf16.msra.mxu0 0
    %563 = vmatprep.subr.bf16.mxu0 0
    %564 = vmatpush1.bf16.msra.mxu0 0
    %565 = vmatprep.subr.bf16.mxu0 0
    %566 = vmatpush1.bf16.msra.mxu0 0
    %567 = vmatprep.subr.bf16.mxu0 0
    %568 = vmatpush1.bf16.msra.mxu0 0
    %569 = vmatprep.subr.bf16.mxu0 0
    %570 = vmatpush1.bf16.msra.mxu0 0
    %571 = vmatprep.subr.bf16.mxu0 0
    %572 = vmatpush1.bf16.msra.mxu0 0
    %573 = vmatprep.subr.bf16.mxu0 0
    %574 = vmatpush1.bf16.msra.mxu0 0
    %575 = vmatprep.subr.bf16.mxu0 0
    %576 = vmatpush1.bf16.msra.mxu0 0
    %577 = vmatprep.subr.bf16.mxu0 0
    %578 = vmatpush1.bf16.msra.mxu0 0
    %579 = vmatprep.mubr.bf16.mxu0 0
    %580 = vmatmul.mubr.bf16.gmra.mrb[0].mxu0 %v542
    %v581 = vpop.f32.mrb[0].mxu0
    %v582 = vadd.f32 %v538, %v581
    %v583 = vpop.f32.mrb[0].mxu0
    %v584 = vpop.f32.mrb[0].mxu0
    %v585 = vadd.f32 %v538, %v584
    %v586 = vpop.f32.mrb[0].mxu0
    %587 = vmatprep.mubr.bf16.mxu0 0
    %588 = vmatmul.mubr.bf16.gmra.mrb[0].mxu0 %v545
    %v589 = vpop.f32.mrb[0].mxu0
    %v590 = vadd.f32 %v538, %v589
    %v591 = vpop.f32.mrb[0].mxu0
    %v592 = vpop.f32.mrb[0].mxu0
    %v593 = vpop.f32.mrb[0].mxu0
    %594 = vdwg.mxu0
    %v595 = vtanh.pop %v582
    %v596 = vtanh.pop %v585
    %v597 = vtanh.pop %v590
    %v598 = vld [vmem:[%s5] sm:$0xff]
    %v599 = vld [vmem:[%s5 + $0x8] sm:$0xff]
    %v600 = vld [vmem:[%s5 + $0x10] sm:$0xff]
    %602 = vset.pattern.permute.xlu0 0
    %603 = vperm.xlu0 %602, %v598
    %v604 = vpop.permute.xlu0 %603
    %607 = vset.pattern.permute.xlu0 0
    %608 = vperm.xlu0 %607, %v599
    %v609 = vpop.permute.xlu0 %608
    %612 = vset.pattern.permute.xlu0 0
    %613 = vperm.xlu0 %612, %v600
    %v614 = vpop.permute.xlu0 %613
    %v616 = vmul.f32 %v595, %v604
    %v617 = vmul.f32 %v596, %v609
    %v618 = vmul.f32 %v597, %v614
    %v619 = vld [vmem:[%s19] sm:$0x1]
    %v620 = vld [vmem:[%s21] sm:$0x1]
    %v622 = vrot.slane %v616, 7
    %v625 = vlaneseq
    %v626 = vshrl.u32 %v625, 7
    %v627 = vsub.s32 0, %v626
    %v628 = vrot.slane %v620, %v627
    %v631 = vrot.slane %v617, 2
    %v634 = vlaneseq
    %v635 = vshrl.u32 %v634, 7
    %v636 = vsub.s32 0, %v635
    %v637 = vrot.slane %v619, %v636
    %v639 = vrot.slane %v616, 1
    %v641 = vrot.slane %v617, 4
    %vm643 = vcmask 1040384
    %v644 = vsel %vm643, %v619, %v622
    %vm645 = vcmask 1044480
    %v646 = vsel %vm645, %v644, %v628
    %vm647 = vcmask 1045504
    %v648 = vsel %vm647, %v646, %v631
    %vm649 = vcmask 1041408
    %v650 = vsel %vm649, %v631, %v637
    %vm651 = vcmask 1042432
    %v652 = vsel %vm651, %v650, %v639
    %vm653 = vcmask 1046528
    %v654 = vsel %vm653, %v652, %v628
    %v655 = vld [vmem:[%s23] sm:$0xff]
    %v656 = vld [vmem:[%s23 + $0x8] sm:$0x3]
    %v659 = vrot.slane %v655, 6
    %v660 = vrot.slane %v656, 6
    %v661 = vsel %vm649, %v659, %v660
    %v664 = vsel %vm649, %v656, %v659
    %v665 = vadd.f32 %v648, %v655
    %v666 = vadd.f32 %v654, %v664
    %v667 = vadd.f32 %v641, %v661
    %v668 = vld [vmem:[%s25] sm:$0x1]
    %v669 = vld [vmem:[%s27] sm:$0x1]
    %v670 = vsel %vm540, %v665, 0.0
    %671 = vadd.xlane.f32.xlu0 %v670
    %v672 = vpop.xlane.xlu0 %671
    %v673 = vsel %vm540, %v666, 0.0
    %674 = vadd.xlane.f32.xlu0 %v673
    %v675 = vpop.xlane.xlu0 %674
    %vm676 = vcmask 257024
    %v677 = vsel %vm676, %v667, 0.0
    %678 = vadd.xlane.f32.xlu0 %v677
    %v679 = vpop.xlane.xlu0 %678
    %v680 = vrcp.pop 32.0
    %v681 = vmul.f32 %v672, %v680
    %v682 = vmul.f32 %v675, %v680
    %v683 = vmul.f32 %v679, %v680
    %v684 = vsub.f32 %v665, %v681
    %v685 = vsub.f32 %v666, %v682
    %v686 = vsub.f32 %v667, %v683
    %v687 = vmul.f32 %v684, %v684
    %v688 = vmul.f32 %v685, %v685
    %v689 = vmul.f32 %v686, %v686
    %v690 = vsel %vm540, %v687, 0.0
    %691 = vadd.xlane.f32.xlu0 %v690
    %v692 = vpop.xlane.xlu0 %691
    %v693 = vsel %vm540, %v688, 0.0
    %694 = vadd.xlane.f32.xlu0 %v693
    %v695 = vpop.xlane.xlu0 %694
    %v696 = vsel %vm676, %v689, 0.0
    %697 = vadd.xlane.f32.xlu0 %v696
    %v698 = vpop.xlane.xlu0 %697
    %v699 = vmul.f32 %v692, %v680
    %v700 = vmul.f32 %v695, %v680
    %v701 = vmul.f32 %v698, %v680
    %v702 = vadd.f32 %v699, 1e-12
    %v703 = vadd.f32 %v700, 1e-12
    %v704 = vadd.f32 %v701, 1e-12
    %v705 = vrsqrt.pop %v702
    %v706 = vrsqrt.pop %v703
    %v707 = vrsqrt.pop %v704
    %v708 = vmul.f32 %v684, %v705
    %v709 = vmul.f32 %v685, %v706
    %v710 = vmul.f32 %v686, %v707
    %v712 = vlaneseq
    %v713 = vshrl.u32 %v712, 7
    %v714 = vsub.s32 0, %v713
    %v715 = vrot.slane %v668, %v714
    %v717 = vmul.f32 %v708, %v715
    %v718 = vmul.f32 %v709, %v715
    %v719 = vmul.f32 %v710, %v715
    %v721 = vlaneseq
    %v722 = vshrl.u32 %v721, 7
    %v723 = vsub.s32 0, %v722
    %v724 = vrot.slane %v669, %v723
    %v726 = vadd.f32 %v717, %v724
    %v727 = vadd.f32 %v718, %v724
    %v728 = vadd.f32 %v719, %v724
    %v729 = vld [vmem:[%s29] sm:$0xff]
    %v730 = vld [vmem:[%s29 + $0x8] sm:$0xff]
    %v731 = vld [vmem:[%s29 + $0x10] sm:$0xff]
    %v732 = vld [vmem:[%s29 + $0x18] sm:$0xff]
    %v733 = vpack.c.bf16 %v727, %v726
    %v734 = vpack.c.bf16 %v728, %v728
    %v735 = vpack.c.bf16 %v730, %v729
    %v736 = vpack.c.bf16 %v732, %v731
    %v737 = vld [vmem:[%s31] sm:$0x1]
    %v739 = vlaneseq
    %v740 = vshrl.u32 %v739, 7
    %v741 = vsub.s32 0, %v740
    %v742 = vrot.slane %v737, %v741
    %v745 = vsel %vm540, %v733, 0
    %v748 = vsel %vm540, %v734, 0
    %750 = vmatprep.subr.bf16.mxu0 0
    %751 = vmatpush1.bf16.msra.mxu0 %v735
    %752 = vmatprep.subr.bf16.mxu0 0
    %753 = vmatpush1.bf16.msra.mxu0 %v736
    %754 = vmatprep.subr.bf16.mxu0 0
    %755 = vmatpush1.bf16.msra.mxu0 0
    %756 = vmatprep.subr.bf16.mxu0 0
    %757 = vmatpush1.bf16.msra.mxu0 0
    %758 = vmatprep.subr.bf16.mxu0 0
    %759 = vmatpush1.bf16.msra.mxu0 0
    %760 = vmatprep.subr.bf16.mxu0 0
    %761 = vmatpush1.bf16.msra.mxu0 0
    %762 = vmatprep.subr.bf16.mxu0 0
    %763 = vmatpush1.bf16.msra.mxu0 0
    %764 = vmatprep.subr.bf16.mxu0 0
    %765 = vmatpush1.bf16.msra.mxu0 0
    %766 = vmatprep.subr.bf16.mxu0 0
    %767 = vmatpush1.bf16.msra.mxu0 0
    %768 = vmatprep.subr.bf16.mxu0 0
    %769 = vmatpush1.bf16.msra.mxu0 0
    %770 = vmatprep.subr.bf16.mxu0 0
    %771 = vmatpush1.bf16.msra.mxu0 0
    %772 = vmatprep.subr.bf16.mxu0 0
    %773 = vmatpush1.bf16.msra.mxu0 0
    %774 = vmatprep.subr.bf16.mxu0 0
    %775 = vmatpush1.bf16.msra.mxu0 0
    %776 = vmatprep.subr.bf16.mxu0 0
    %777 = vmatpush1.bf16.msra.mxu0 0
    %778 = vmatprep.subr.bf16.mxu0 0
    %779 = vmatpush1.bf16.msra.mxu0 0
    %780 = vmatprep.subr.bf16.mxu0 0
    %781 = vmatpush1.bf16.msra.mxu0 0
    %782 = vmatprep.mubr.bf16.mxu0 0
    %783 = vmatmul.mubr.bf16.gmra.mrb[0].mxu0 %v745
    %v784 = vpop.f32.mrb[0].mxu0
    %v785 = vadd.f32 %v742, %v784
    %v786 = vpop.f32.mrb[0].mxu0
    %v787 = vpop.f32.mrb[0].mxu0
    %v788 = vadd.f32 %v742, %v787
    %v789 = vpop.f32.mrb[0].mxu0
    %790 = vmatprep.mubr.bf16.mxu0 0
    %791 = vmatmul.mubr.bf16.gmra.mrb[0].mxu0 %v748
    %v792 = vpop.f32.mrb[0].mxu0
    %v793 = vadd.f32 %v742, %v792
    %v794 = vpop.f32.mrb[0].mxu0
    %v795 = vpop.f32.mrb[0].mxu0
    %v796 = vpop.f32.mrb[0].mxu0
    %797 = vdwg.mxu0
    %v798 = vld [vmem:[%s7] sm:$0x3]
    %v799 = vsub.f32 1.0, %v798
    %v800 = vmul.f32 %v799, -1e+09
    %vm801 = vcmask 80896
    %v802 = vsel %vm801, %v800, -1e+09
    %v803 = vlaneseq
    %v804 = vshrl.u32 %v803, 7
    %v805 = vsub.s32 0, %v804
    %v806 = vrot.slane %v802, %v805
    %v808 = vrot.slane %v800, 1
    %809 = vrot.lane.b32.xlu0 %v808, 10
    %v810 = vpop.permute.xlu0 %809
    %v812 = vsel %vm801, -1e+09, %v810
    %v813 = vlaneseq
    %v814 = vshrl.u32 %v813, 7
    %v815 = vsub.s32 0, %v814
    %v816 = vrot.slane %v812, %v815
    %v817 = vsel %vm649, %v806, %v816
    %vm818 = vcmp.ge.s32.totalorder %v145, 0
    %vm819 = vcmp.lt.s32.totalorder %v145, 8
    %vm820 = vmand %vm818, %vm819
    %v821 = vsel %vm820, 1, 0
    %v822 = vcvt.s32.f32 %v821
    %vm823 = vcmp.ge.s32.totalorder %v145, 8
    %vm824 = vcmp.lt.s32.totalorder %v145, 16
    %vm825 = vmand %vm823, %vm824
    %v826 = vsel %vm825, 1, 0
    %v827 = vcvt.s32.f32 %v826
    %vm828 = vcmp.ge.s32.totalorder %v145, 16
    %vm829 = vcmp.lt.s32.totalorder %v145, 24
    %vm830 = vmand %vm828, %vm829
    %v831 = vsel %vm830, 1, 0
    %v832 = vcvt.s32.f32 %v831
    %vm833 = vcmp.ge.s32.totalorder %v145, 24
    %vm834 = vcmp.lt.s32.totalorder %v145, 32
    %vm835 = vmand %vm833, %vm834
    %v836 = vsel %vm835, 1, 0
    %v837 = vcvt.s32.f32 %v836
    %v838 = vmul.f32 %v785, %v822
    %v839 = vmul.f32 %v788, %v822
    %v840 = vmul.f32 %v793, %v822
    %v841 = vpack.c.bf16 %v839, %v838
    %v842 = vpack.c.bf16 %v840, %v840
    %v843 = vpack.c.bf16 %v788, %v785
    %v844 = vpack.c.bf16 %v793, %v793
    %847 = vrot.lane.b32.xlu0 %v843, 96
    %v848 = vpop.permute.xlu0 %847
    %849 = vrot.lane.b32.xlu0 %v844, 96
    %v850 = vpop.permute.xlu0 %849
    %v852 = vsel %vm540, %v841, 0
    %v855 = vsel %vm540, %v842, 0
    %v858 = vsel %vm540, %v848, 0
    %v861 = vsel %vm540, %v850, 0
    %863 = vmatprep.subr.bf16.mxu0 0
    %864 = vmatpush1.bf16.xpose.msra.mxu0 %v858
    %865 = vmatprep.subr.bf16.mxu0 0
    %866 = vmatpush1.bf16.xpose.msra.mxu0 %v861
    %867 = vmatprep.subr.bf16.mxu0 0
    %868 = vmatpush1.bf16.xpose.msra.mxu0 0
    %869 = vmatprep.subr.bf16.mxu0 0
    %870 = vmatpush1.bf16.xpose.msra.mxu0 0
    %871 = vmatprep.subr.bf16.mxu0 0
    %872 = vmatpush1.bf16.xpose.msra.mxu0 0
    %873 = vmatprep.subr.bf16.mxu0 0
    %874 = vmatpush1.bf16.xpose.msra.mxu0 0
    %875 = vmatprep.subr.bf16.mxu0 0
    %876 = vmatpush1.bf16.xpose.msra.mxu0 0
    %877 = vmatprep.subr.bf16.mxu0 0
    %878 = vmatpush1.bf16.xpose.msra.mxu0 0
    %879 = vmatprep.subr.bf16.mxu0 0
    %880 = vmatpush1.bf16.xpose.msra.mxu0 0
    %881 = vmatprep.subr.bf16.mxu0 0
    %882 = vmatpush1.bf16.xpose.msra.mxu0 0
    %883 = vmatprep.subr.bf16.mxu0 0
    %884 = vmatpush1.bf16.xpose.msra.mxu0 0
    %885 = vmatprep.subr.bf16.mxu0 0
    %886 = vmatpush1.bf16.xpose.msra.mxu0 0
    %887 = vmatprep.subr.bf16.mxu0 0
    %888 = vmatpush1.bf16.xpose.msra.mxu0 0
    %889 = vmatprep.subr.bf16.mxu0 0
    %890 = vmatpush1.bf16.xpose.msra.mxu0 0
    %891 = vmatprep.subr.bf16.mxu0 0
    %892 = vmatpush1.bf16.xpose.msra.mxu0 0
    %893 = vmatprep.subr.bf16.mxu0 0
    %894 = vmatpush1.bf16.xpose.msra.mxu0 0
    %895 = vmatprep.mubr.bf16.mxu0 0
    %896 = vmatmul.mubr.bf16.gmra.mrb[0].mxu0 %v852
    %v897 = vpop.f32.mrb[0].mxu0
    %v898 = vadd.f32 0.0, %v897
    %v899 = vpop.f32.mrb[0].mxu0
    %v900 = vpop.f32.mrb[0].mxu0
    %v901 = vadd.f32 0.0, %v900
    %v902 = vpop.f32.mrb[0].mxu0
    %903 = vmatprep.mubr.bf16.mxu0 0
    %904 = vmatmul.mubr.bf16.gmra.mrb[0].mxu0 %v855
    %v905 = vpop.f32.mrb[0].mxu0
    %v906 = vadd.f32 0.0, %v905
    %v907 = vpop.f32.mrb[0].mxu0
    %v908 = vpop.f32.mrb[0].mxu0
    %v909 = vpop.f32.mrb[0].mxu0
    %910 = vdwg.mxu0
    %v911 = vmul.f32 %v898, 0.35355338
    %v912 = vmul.f32 %v901, 0.35355338
    %v913 = vmul.f32 %v906, 0.35355338
    %v914 = vadd.f32 %v911, %v806
    %v915 = vadd.f32 %v912, %v817
    %v916 = vadd.f32 %v913, %v816
    %vm917 = vcmask 162816
    %v918 = vsel %vm917, %v914, -inf
    %919 = vmax.xlane.f32.xlu0 %v918
    %v920 = vpop.xlane.xlu0 %919
    %v921 = vsel %vm917, %v915, -inf
    %922 = vmax.xlane.f32.xlu0 %v921
    %v923 = vpop.xlane.xlu0 %922
    %vm924 = vcmask 158720
    %v925 = vsel %vm924, %v916, -inf
    %926 = vmax.xlane.f32.xlu0 %v925
    %v927 = vpop.xlane.xlu0 %926
    %v928 = vsub.f32 %v914, %v920
    %v929 = vsub.f32 %v915, %v923
    %v930 = vsub.f32 %v916, %v927
    %v931 = vmul.f32 %v928, 1.442695
    %v932 = vpow.pop %v931
    %v933 = vmul.f32 %v929, 1.442695
    %v934 = vpow.pop %v933
    %v935 = vmul.f32 %v930, 1.442695
    %v936 = vpow.pop %v935
    %v937 = vsel %vm917, %v932, 0.0
    %938 = vadd.xlane.f32.xlu0 %v937
    %v939 = vpop.xlane.xlu0 %938
    %v940 = vsel %vm917, %v934, 0.0
    %941 = vadd.xlane.f32.xlu0 %v940
    %v942 = vpop.xlane.xlu0 %941
    %v943 = vsel %vm924, %v936, 0.0
    %944 = vadd.xlane.f32.xlu0 %v943
    %v945 = vpop.xlane.xlu0 %944
    %v946 = vrcp.pop %v939
    %v947 = vrcp.pop %v942
    %v948 = vrcp.pop %v945
    %v949 = vmul.f32 %v932, %v946
    %v950 = vmul.f32 %v934, %v947
    %v951 = vmul.f32 %v936, %v948
    %953 = vrot.lane.b32.xlu0 %v822, 64
    %v954 = vpop.permute.xlu0 %953
    %v956 = vmul.f32 %v785, %v954
    %v957 = vmul.f32 %v788, %v954
    %v958 = vmul.f32 %v793, %v954
    %v959 = vpack.c.bf16 %v950, %v949
    %v960 = vpack.c.bf16 %v951, %v951
    %v961 = vpack.c.bf16 %v957, %v956
    %v962 = vpack.c.bf16 %v958, %v958
    %v963 = vmul.f32 %v785, %v827
    %v964 = vmul.f32 %v788, %v827
    %v965 = vmul.f32 %v793, %v827
    %v966 = vpack.c.bf16 %v964, %v963
    %v967 = vpack.c.bf16 %v965, %v965
    %v969 = vsel %vm540, %v966, 0
    %v972 = vsel %vm540, %v967, 0
    %974 = vmatprep.subr.bf16.mxu0 0
    %975 = vmatpush1.bf16.xpose.msra.mxu0 %v858
    %976 = vmatprep.subr.bf16.mxu0 0
    %977 = vmatpush1.bf16.xpose.msra.mxu0 %v861
    %978 = vmatprep.subr.bf16.mxu0 0
    %979 = vmatpush1.bf16.xpose.msra.mxu0 0
    %980 = vmatprep.subr.bf16.mxu0 0
    %981 = vmatpush1.bf16.xpose.msra.mxu0 0
    %982 = vmatprep.subr.bf16.mxu0 0
    %983 = vmatpush1.bf16.xpose.msra.mxu0 0
    %984 = vmatprep.subr.bf16.mxu0 0
    %985 = vmatpush1.bf16.xpose.msra.mxu0 0
    %986 = vmatprep.subr.bf16.mxu0 0
    %987 = vmatpush1.bf16.xpose.msra.mxu0 0
    %988 = vmatprep.subr.bf16.mxu0 0
    %989 = vmatpush1.bf16.xpose.msra.mxu0 0
    %990 = vmatprep.subr.bf16.mxu0 0
    %991 = vmatpush1.bf16.xpose.msra.mxu0 0
    %992 = vmatprep.subr.bf16.mxu0 0
    %993 = vmatpush1.bf16.xpose.msra.mxu0 0
    %994 = vmatprep.subr.bf16.mxu0 0
    %995 = vmatpush1.bf16.xpose.msra.mxu0 0
    %996 = vmatprep.subr.bf16.mxu0 0
    %997 = vmatpush1.bf16.xpose.msra.mxu0 0
    %998 = vmatprep.subr.bf16.mxu0 0
    %999 = vmatpush1.bf16.xpose.msra.mxu0 0
    %1000 = vmatprep.subr.bf16.mxu0 0
    %1001 = vmatpush1.bf16.xpose.msra.mxu0 0
    %1002 = vmatprep.subr.bf16.mxu0 0
    %1003 = vmatpush1.bf16.xpose.msra.mxu0 0
    %1004 = vmatprep.subr.bf16.mxu0 0
    %1005 = vmatpush1.bf16.xpose.msra.mxu0 0
    %1006 = vmatprep.mubr.bf16.mxu0 0
    %1007 = vmatmul.mubr.bf16.gmra.mrb[0].mxu0 %v969
    %v1008 = vpop.f32.mrb[0].mxu0
    %v1009 = vadd.f32 0.0, %v1008
    %v1010 = vpop.f32.mrb[0].mxu0
    %v1011 = vpop.f32.mrb[0].mxu0
    %v1012 = vadd.f32 0.0, %v1011
    %v1013 = vpop.f32.mrb[0].mxu0
    %1014 = vmatprep.mubr.bf16.mxu0 0
    %1015 = vmatmul.mubr.bf16.gmra.mrb[0].mxu0 %v972
    %v1016 = vpop.f32.mrb[0].mxu0
    %v1017 = vadd.f32 0.0, %v1016
    %v1018 = vpop.f32.mrb[0].mxu0
    %v1019 = vpop.f32.mrb[0].mxu0
    %v1020 = vpop.f32.mrb[0].mxu0
    %1021 = vdwg.mxu0
    %v1022 = vmul.f32 %v1009, 0.35355338
    %v1023 = vmul.f32 %v1012, 0.35355338
    %v1024 = vmul.f32 %v1017, 0.35355338
    %v1025 = vadd.f32 %v1022, %v806
    %v1026 = vadd.f32 %v1023, %v817
    %v1027 = vadd.f32 %v1024, %v816
    %v1028 = vsel %vm917, %v1025, -inf
    %1029 = vmax.xlane.f32.xlu0 %v1028
    %v1030 = vpop.xlane.xlu0 %1029
    %v1031 = vsel %vm917, %v1026, -inf
    %1032 = vmax.xlane.f32.xlu0 %v1031
    %v1033 = vpop.xlane.xlu0 %1032
    %v1034 = vsel %vm924, %v1027, -inf
    %1035 = vmax.xlane.f32.xlu0 %v1034
    %v1036 = vpop.xlane.xlu0 %1035
    %v1037 = vsub.f32 %v1025, %v1030
    %v1038 = vsub.f32 %v1026, %v1033
    %v1039 = vsub.f32 %v1027, %v1036
    %v1040 = vmul.f32 %v1037, 1.442695
    %v1041 = vpow.pop %v1040
    %v1042 = vmul.f32 %v1038, 1.442695
    %v1043 = vpow.pop %v1042
    %v1044 = vmul.f32 %v1039, 1.442695
    %v1045 = vpow.pop %v1044
    %v1046 = vsel %vm917, %v1041, 0.0
    %1047 = vadd.xlane.f32.xlu0 %v1046
    %v1048 = vpop.xlane.xlu0 %1047
    %v1049 = vsel %vm917, %v1043, 0.0
    %1050 = vadd.xlane.f32.xlu0 %v1049
    %v1051 = vpop.xlane.xlu0 %1050
    %v1052 = vsel %vm924, %v1045, 0.0
    %1053 = vadd.xlane.f32.xlu0 %v1052
    %v1054 = vpop.xlane.xlu0 %1053
    %v1055 = vrcp.pop %v1048
    %v1056 = vrcp.pop %v1051
    %v1057 = vrcp.pop %v1054
    %v1058 = vmul.f32 %v1041, %v1055
    %v1059 = vmul.f32 %v1043, %v1056
    %v1060 = vmul.f32 %v1045, %v1057
    %1062 = vrot.lane.b32.xlu0 %v827, 64
    %v1063 = vpop.permute.xlu0 %1062
    %v1065 = vmul.f32 %v785, %v1063
    %v1066 = vmul.f32 %v788, %v1063
    %v1067 = vmul.f32 %v793, %v1063
    %v1068 = vpack.c.bf16 %v1059, %v1058
    %v1069 = vpack.c.bf16 %v1060, %v1060
    %v1070 = vpack.c.bf16 %v1066, %v1065
    %v1071 = vpack.c.bf16 %v1067, %v1067
    %1074 = vrot.lane.b32.xlu0 %v1070, 64
    %v1075 = vpop.permute.xlu0 %1074
    %1076 = vrot.lane.b32.xlu0 %v1071, 64
    %v1077 = vpop.permute.xlu0 %1076
    %v1080 = vsel %vm917, %v1068, 0
    %v1083 = vsel %vm917, %v1069, 0
    %v1086 = vsel %vm649, %v1077, 0
    %1088 = vmatprep.subr.bf16.mxu0 0
    %1089 = vmatpush1.bf16.msra.mxu0 %v1075
    %1090 = vmatprep.subr.bf16.mxu0 0
    %1091 = vmatpush1.bf16.msra.mxu0 %v1086
    %1092 = vmatprep.subr.bf16.mxu0 0
    %1093 = vmatpush1.bf16.msra.mxu0 0
    %1094 = vmatprep.subr.bf16.mxu0 0
    %1095 = vmatpush1.bf16.msra.mxu0 0
    %1096 = vmatprep.subr.bf16.mxu0 0
    %1097 = vmatpush1.bf16.msra.mxu0 0
    %1098 = vmatprep.subr.bf16.mxu0 0
    %1099 = vmatpush1.bf16.msra.mxu0 0
    %1100 = vmatprep.subr.bf16.mxu0 0
    %1101 = vmatpush1.bf16.msra.mxu0 0
    %1102 = vmatprep.subr.bf16.mxu0 0
    %1103 = vmatpush1.bf16.msra.mxu0 0
    %1104 = vmatprep.subr.bf16.mxu0 0
    %1105 = vmatpush1.bf16.msra.mxu0 0
    %1106 = vmatprep.subr.bf16.mxu0 0
    %1107 = vmatpush1.bf16.msra.mxu0 0
    %1108 = vmatprep.subr.bf16.mxu0 0
    %1109 = vmatpush1.bf16.msra.mxu0 0
    %1110 = vmatprep.subr.bf16.mxu0 0
    %1111 = vmatpush1.bf16.msra.mxu0 0
    %1112 = vmatprep.subr.bf16.mxu0 0
    %1113 = vmatpush1.bf16.msra.mxu0 0
    %1114 = vmatprep.subr.bf16.mxu0 0
    %1115 = vmatpush1.bf16.msra.mxu0 0
    %1116 = vmatprep.subr.bf16.mxu0 0
    %1117 = vmatpush1.bf16.msra.mxu0 0
    %1118 = vmatprep.subr.bf16.mxu0 0
    %1119 = vmatpush1.bf16.msra.mxu0 0
    %1120 = vmatprep.mubr.bf16.mxu0 0
    %1121 = vmatmul.mubr.bf16.gmra.mrb[0].mxu0 %v1080
    %v1122 = vpop.f32.mrb[0].mxu0
    %v1123 = vadd.f32 0.0, %v1122
    %v1124 = vpop.f32.mrb[0].mxu0
    %v1125 = vpop.f32.mrb[0].mxu0
    %v1126 = vadd.f32 0.0, %v1125
    %v1127 = vpop.f32.mrb[0].mxu0
    %1128 = vmatprep.mubr.bf16.mxu0 0
    %1129 = vmatmul.mubr.bf16.gmra.mrb[0].mxu0 %v1083
    %v1130 = vpop.f32.mrb[0].mxu0
    %v1131 = vadd.f32 0.0, %v1130
    %v1132 = vpop.f32.mrb[0].mxu0
    %v1133 = vpop.f32.mrb[0].mxu0
    %v1134 = vpop.f32.mrb[0].mxu0
    %1135 = vdwg.mxu0
    %1138 = vrot.lane.b32.xlu0 %v961, 64
    %v1139 = vpop.permute.xlu0 %1138
    %1140 = vrot.lane.b32.xlu0 %v962, 64
    %v1141 = vpop.permute.xlu0 %1140
    %v1144 = vsel %vm917, %v959, 0
    %v1147 = vsel %vm917, %v960, 0
    %v1150 = vsel %vm649, %v1141, 0
    %1152 = vmatprep.subr.bf16.mxu0 0
    %1153 = vmatpush1.bf16.msra.mxu0 %v1139
    %1154 = vmatprep.subr.bf16.mxu0 0
    %1155 = vmatpush1.bf16.msra.mxu0 %v1150
    %1156 = vmatprep.subr.bf16.mxu0 0
    %1157 = vmatpush1.bf16.msra.mxu0 0
    %1158 = vmatprep.subr.bf16.mxu0 0
    %1159 = vmatpush1.bf16.msra.mxu0 0
    %1160 = vmatprep.subr.bf16.mxu0 0
    %1161 = vmatpush1.bf16.msra.mxu0 0
    %1162 = vmatprep.subr.bf16.mxu0 0
    %1163 = vmatpush1.bf16.msra.mxu0 0
    %1164 = vmatprep.subr.bf16.mxu0 0
    %1165 = vmatpush1.bf16.msra.mxu0 0
    %1166 = vmatprep.subr.bf16.mxu0 0
    %1167 = vmatpush1.bf16.msra.mxu0 0
    %1168 = vmatprep.subr.bf16.mxu0 0
    %1169 = vmatpush1.bf16.msra.mxu0 0
    %1170 = vmatprep.subr.bf16.mxu0 0
    %1171 = vmatpush1.bf16.msra.mxu0 0
    %1172 = vmatprep.subr.bf16.mxu0 0
    %1173 = vmatpush1.bf16.msra.mxu0 0
    %1174 = vmatprep.subr.bf16.mxu0 0
    %1175 = vmatpush1.bf16.msra.mxu0 0
    %1176 = vmatprep.subr.bf16.mxu0 0
    %1177 = vmatpush1.bf16.msra.mxu0 0
    %1178 = vmatprep.subr.bf16.mxu0 0
    %1179 = vmatpush1.bf16.msra.mxu0 0
    %1180 = vmatprep.subr.bf16.mxu0 0
    %1181 = vmatpush1.bf16.msra.mxu0 0
    %1182 = vmatprep.subr.bf16.mxu0 0
    %1183 = vmatpush1.bf16.msra.mxu0 0
    %1184 = vmatprep.mubr.bf16.mxu0 0
    %1185 = vmatmul.mubr.bf16.gmra.mrb[0].mxu0 %v1144
    %v1186 = vpop.f32.mrb[0].mxu0
    %v1187 = vadd.f32 %v1123, %v1186
    %v1188 = vpop.f32.mrb[0].mxu0
    %v1189 = vpop.f32.mrb[0].mxu0
    %v1190 = vadd.f32 %v1126, %v1189
    %v1191 = vpop.f32.mrb[0].mxu0
    %1192 = vmatprep.mubr.bf16.mxu0 0
    %1193 = vmatmul.mubr.bf16.gmra.mrb[0].mxu0 %v1147
    %v1194 = vpop.f32.mrb[0].mxu0
    %v1195 = vadd.f32 %v1131, %v1194
    %v1196 = vpop.f32.mrb[0].mxu0
    %v1197 = vpop.f32.mrb[0].mxu0
    %v1198 = vpop.f32.mrb[0].mxu0
    %1199 = vdwg.mxu0
    %v1200 = vmul.f32 %v785, %v832
    %v1201 = vmul.f32 %v788, %v832
    %v1202 = vmul.f32 %v793, %v832
    %v1203 = vpack.c.bf16 %v1201, %v1200
    %v1204 = vpack.c.bf16 %v1202, %v1202
    %v1206 = vsel %vm540, %v1203, 0
    %v1209 = vsel %vm540, %v1204, 0
    %1211 = vmatprep.subr.bf16.mxu0 0
    %1212 = vmatpush1.bf16.xpose.msra.mxu0 %v858
    %1213 = vmatprep.subr.bf16.mxu0 0
    %1214 = vmatpush1.bf16.xpose.msra.mxu0 %v861
    %1215 = vmatprep.subr.bf16.mxu0 0
    %1216 = vmatpush1.bf16.xpose.msra.mxu0 0
    %1217 = vmatprep.subr.bf16.mxu0 0
    %1218 = vmatpush1.bf16.xpose.msra.mxu0 0
    %1219 = vmatprep.subr.bf16.mxu0 0
    %1220 = vmatpush1.bf16.xpose.msra.mxu0 0
    %1221 = vmatprep.subr.bf16.mxu0 0
    %1222 = vmatpush1.bf16.xpose.msra.mxu0 0
    %1223 = vmatprep.subr.bf16.mxu0 0
    %1224 = vmatpush1.bf16.xpose.msra.mxu0 0
    %1225 = vmatprep.subr.bf16.mxu0 0
    %1226 = vmatpush1.bf16.xpose.msra.mxu0 0
    %1227 = vmatprep.subr.bf16.mxu0 0
    %1228 = vmatpush1.bf16.xpose.msra.mxu0 0
    %1229 = vmatprep.subr.bf16.mxu0 0
    %1230 = vmatpush1.bf16.xpose.msra.mxu0 0
    %1231 = vmatprep.subr.bf16.mxu0 0
    %1232 = vmatpush1.bf16.xpose.msra.mxu0 0
    %1233 = vmatprep.subr.bf16.mxu0 0
    %1234 = vmatpush1.bf16.xpose.msra.mxu0 0
    %1235 = vmatprep.subr.bf16.mxu0 0
    %1236 = vmatpush1.bf16.xpose.msra.mxu0 0
    %1237 = vmatprep.subr.bf16.mxu0 0
    %1238 = vmatpush1.bf16.xpose.msra.mxu0 0
    %1239 = vmatprep.subr.bf16.mxu0 0
    %1240 = vmatpush1.bf16.xpose.msra.mxu0 0
    %1241 = vmatprep.subr.bf16.mxu0 0
    %1242 = vmatpush1.bf16.xpose.msra.mxu0 0
    %1243 = vmatprep.mubr.bf16.mxu0 0
    %1244 = vmatmul.mubr.bf16.gmra.mrb[0].mxu0 %v1206
    %v1245 = vpop.f32.mrb[0].mxu0
    %v1246 = vadd.f32 0.0, %v1245
    %v1247 = vpop.f32.mrb[0].mxu0
    %v1248 = vpop.f32.mrb[0].mxu0
    %v1249 = vadd.f32 0.0, %v1248
    %v1250 = vpop.f32.mrb[0].mxu0
    %1251 = vmatprep.mubr.bf16.mxu0 0
    %1252 = vmatmul.mubr.bf16.gmra.mrb[0].mxu0 %v1209
    %v1253 = vpop.f32.mrb[0].mxu0
    %v1254 = vadd.f32 0.0, %v1253
    %v1255 = vpop.f32.mrb[0].mxu0
    %v1256 = vpop.f32.mrb[0].mxu0
    %v1257 = vpop.f32.mrb[0].mxu0
    %1258 = vdwg.mxu0
    %v1259 = vmul.f32 %v1246, 0.35355338
    %v1260 = vmul.f32 %v1249, 0.35355338
    %v1261 = vmul.f32 %v1254, 0.35355338
    %v1262 = vadd.f32 %v1259, %v806
    %v1263 = vadd.f32 %v1260, %v817
    %v1264 = vadd.f32 %v1261, %v816
    %v1265 = vsel %vm917, %v1262, -inf
    %1266 = vmax.xlane.f32.xlu0 %v1265
    %v1267 = vpop.xlane.xlu0 %1266
    %v1268 = vsel %vm917, %v1263, -inf
    %1269 = vmax.xlane.f32.xlu0 %v1268
    %v1270 = vpop.xlane.xlu0 %1269
    %v1271 = vsel %vm924, %v1264, -inf
    %1272 = vmax.xlane.f32.xlu0 %v1271
    %v1273 = vpop.xlane.xlu0 %1272
    %v1274 = vsub.f32 %v1262, %v1267
    %v1275 = vsub.f32 %v1263, %v1270
    %v1276 = vsub.f32 %v1264, %v1273
    %v1277 = vmul.f32 %v1274, 1.442695
    %v1278 = vpow.pop %v1277
    %v1279 = vmul.f32 %v1275, 1.442695
    %v1280 = vpow.pop %v1279
    %v1281 = vmul.f32 %v1276, 1.442695
    %v1282 = vpow.pop %v1281
    %v1283 = vsel %vm917, %v1278, 0.0
    %1284 = vadd.xlane.f32.xlu0 %v1283
    %v1285 = vpop.xlane.xlu0 %1284
    %v1286 = vsel %vm917, %v1280, 0.0
    %1287 = vadd.xlane.f32.xlu0 %v1286
    %v1288 = vpop.xlane.xlu0 %1287
    %v1289 = vsel %vm924, %v1282, 0.0
    %1290 = vadd.xlane.f32.xlu0 %v1289
    %v1291 = vpop.xlane.xlu0 %1290
    %v1292 = vrcp.pop %v1285
    %v1293 = vrcp.pop %v1288
    %v1294 = vrcp.pop %v1291
    %v1295 = vmul.f32 %v1278, %v1292
    %v1296 = vmul.f32 %v1280, %v1293
    %v1297 = vmul.f32 %v1282, %v1294
    %1299 = vrot.lane.b32.xlu0 %v832, 64
    %v1300 = vpop.permute.xlu0 %1299
    %v1302 = vmul.f32 %v785, %v1300
    %v1303 = vmul.f32 %v788, %v1300
    %v1304 = vmul.f32 %v793, %v1300
    %v1305 = vpack.c.bf16 %v1296, %v1295
    %v1306 = vpack.c.bf16 %v1297, %v1297
    %v1307 = vpack.c.bf16 %v1303, %v1302
    %v1308 = vpack.c.bf16 %v1304, %v1304
    %1311 = vrot.lane.b32.xlu0 %v1307, 64
    %v1312 = vpop.permute.xlu0 %1311
    %1313 = vrot.lane.b32.xlu0 %v1308, 64
    %v1314 = vpop.permute.xlu0 %1313
    %v1317 = vsel %vm917, %v1305, 0
    %v1320 = vsel %vm917, %v1306, 0
    %v1323 = vsel %vm649, %v1314, 0
    %1325 = vmatprep.subr.bf16.mxu0 0
    %1326 = vmatpush1.bf16.msra.mxu0 %v1312
    %1327 = vmatprep.subr.bf16.mxu0 0
    %1328 = vmatpush1.bf16.msra.mxu0 %v1323
    %1329 = vmatprep.subr.bf16.mxu0 0
    %1330 = vmatpush1.bf16.msra.mxu0 0
    %1331 = vmatprep.subr.bf16.mxu0 0
    %1332 = vmatpush1.bf16.msra.mxu0 0
    %1333 = vmatprep.subr.bf16.mxu0 0
    %1334 = vmatpush1.bf16.msra.mxu0 0
    %1335 = vmatprep.subr.bf16.mxu0 0
    %1336 = vmatpush1.bf16.msra.mxu0 0
    %1337 = vmatprep.subr.bf16.mxu0 0
    %1338 = vmatpush1.bf16.msra.mxu0 0
    %1339 = vmatprep.subr.bf16.mxu0 0
    %1340 = vmatpush1.bf16.msra.mxu0 0
    %1341 = vmatprep.subr.bf16.mxu0 0
    %1342 = vmatpush1.bf16.msra.mxu0 0
    %1343 = vmatprep.subr.bf16.mxu0 0
    %1344 = vmatpush1.bf16.msra.mxu0 0
    %1345 = vmatprep.subr.bf16.mxu0 0
    %1346 = vmatpush1.bf16.msra.mxu0 0
    %1347 = vmatprep.subr.bf16.mxu0 0
    %1348 = vmatpush1.bf16.msra.mxu0 0
    %1349 = vmatprep.subr.bf16.mxu0 0
    %1350 = vmatpush1.bf16.msra.mxu0 0
    %1351 = vmatprep.subr.bf16.mxu0 0
    %1352 = vmatpush1.bf16.msra.mxu0 0
    %1353 = vmatprep.subr.bf16.mxu0 0
    %1354 = vmatpush1.bf16.msra.mxu0 0
    %1355 = vmatprep.subr.bf16.mxu0 0
    %1356 = vmatpush1.bf16.msra.mxu0 0
    %1357 = vmatprep.mubr.bf16.mxu0 0
    %1358 = vmatmul.mubr.bf16.gmra.mrb[0].mxu0 %v1317
    %v1359 = vpop.f32.mrb[0].mxu0
    %v1360 = vadd.f32 0.0, %v1359
    %v1361 = vpop.f32.mrb[0].mxu0
    %v1362 = vpop.f32.mrb[0].mxu0
    %v1363 = vadd.f32 0.0, %v1362
    %v1364 = vpop.f32.mrb[0].mxu0
    %1365 = vmatprep.mubr.bf16.mxu0 0
    %1366 = vmatmul.mubr.bf16.gmra.mrb[0].mxu0 %v1320
    %v1367 = vpop.f32.mrb[0].mxu0
    %v1368 = vadd.f32 0.0, %v1367
    %v1369 = vpop.f32.mrb[0].mxu0
    %v1370 = vpop.f32.mrb[0].mxu0
    %v1371 = vpop.f32.mrb[0].mxu0
    %1372 = vdwg.mxu0
    %v1373 = vadd.f32 %v1187, %v1360
    %v1374 = vadd.f32 %v1190, %v1363
    %v1375 = vadd.f32 %v1195, %v1368
    %v1376 = vmul.f32 %v785, %v837
    %v1377 = vmul.f32 %v788, %v837
    %v1378 = vmul.f32 %v793, %v837
    %v1379 = vpack.c.bf16 %v1377, %v1376
    %v1380 = vpack.c.bf16 %v1378, %v1378
    %v1382 = vsel %vm540, %v1379, 0
    %v1385 = vsel %vm540, %v1380, 0
    %1387 = vmatprep.subr.bf16.mxu0 0
    %1388 = vmatpush1.bf16.xpose.msra.mxu0 %v858
    %1389 = vmatprep.subr.bf16.mxu0 0
    %1390 = vmatpush1.bf16.xpose.msra.mxu0 %v861
    %1391 = vmatprep.subr.bf16.mxu0 0
    %1392 = vmatpush1.bf16.xpose.msra.mxu0 0
    %1393 = vmatprep.subr.bf16.mxu0 0
    %1394 = vmatpush1.bf16.xpose.msra.mxu0 0
    %1395 = vmatprep.subr.bf16.mxu0 0
    %1396 = vmatpush1.bf16.xpose.msra.mxu0 0
    %1397 = vmatprep.subr.bf16.mxu0 0
    %1398 = vmatpush1.bf16.xpose.msra.mxu0 0
    %1399 = vmatprep.subr.bf16.mxu0 0
    %1400 = vmatpush1.bf16.xpose.msra.mxu0 0
    %1401 = vmatprep.subr.bf16.mxu0 0
    %1402 = vmatpush1.bf16.xpose.msra.mxu0 0
    %1403 = vmatprep.subr.bf16.mxu0 0
    %1404 = vmatpush1.bf16.xpose.msra.mxu0 0
    %1405 = vmatprep.subr.bf16.mxu0 0
    %1406 = vmatpush1.bf16.xpose.msra.mxu0 0
    %1407 = vmatprep.subr.bf16.mxu0 0
    %1408 = vmatpush1.bf16.xpose.msra.mxu0 0
    %1409 = vmatprep.subr.bf16.mxu0 0
    %1410 = vmatpush1.bf16.xpose.msra.mxu0 0
    %1411 = vmatprep.subr.bf16.mxu0 0
    %1412 = vmatpush1.bf16.xpose.msra.mxu0 0
    %1413 = vmatprep.subr.bf16.mxu0 0
    %1414 = vmatpush1.bf16.xpose.msra.mxu0 0
    %1415 = vmatprep.subr.bf16.mxu0 0
    %1416 = vmatpush1.bf16.xpose.msra.mxu0 0
    %1417 = vmatprep.subr.bf16.mxu0 0
    %1418 = vmatpush1.bf16.xpose.msra.mxu0 0
    %1419 = vmatprep.mubr.bf16.mxu0 0
    %1420 = vmatmul.mubr.bf16.gmra.mrb[0].mxu0 %v1382
    %v1421 = vpop.f32.mrb[0].mxu0
    %v1422 = vadd.f32 0.0, %v1421
    %v1423 = vpop.f32.mrb[0].mxu0
    %v1424 = vpop.f32.mrb[0].mxu0
    %v1425 = vadd.f32 0.0, %v1424
    %v1426 = vpop.f32.mrb[0].mxu0
    %1427 = vmatprep.mubr.bf16.mxu0 0
    %1428 = vmatmul.mubr.bf16.gmra.mrb[0].mxu0 %v1385
    %v1429 = vpop.f32.mrb[0].mxu0
    %v1430 = vadd.f32 0.0, %v1429
    %v1431 = vpop.f32.mrb[0].mxu0
    %v1432 = vpop.f32.mrb[0].mxu0
    %v1433 = vpop.f32.mrb[0].mxu0
    %1434 = vdwg.mxu0
    %v1435 = vmul.f32 %v1422, 0.35355338
    %v1436 = vmul.f32 %v1425, 0.35355338
    %v1437 = vmul.f32 %v1430, 0.35355338
    %v1438 = vadd.f32 %v1435, %v806
    %v1439 = vadd.f32 %v1436, %v817
    %v1440 = vadd.f32 %v1437, %v816
    %v1441 = vsel %vm917, %v1438, -inf
    %1442 = vmax.xlane.f32.xlu0 %v1441
    %v1443 = vpop.xlane.xlu0 %1442
    %v1444 = vsel %vm917, %v1439, -inf
    %1445 = vmax.xlane.f32.xlu0 %v1444
    %v1446 = vpop.xlane.xlu0 %1445
    %v1447 = vsel %vm924, %v1440, -inf
    %1448 = vmax.xlane.f32.xlu0 %v1447
    %v1449 = vpop.xlane.xlu0 %1448
    %v1450 = vsub.f32 %v1438, %v1443
    %v1451 = vsub.f32 %v1439, %v1446
    %v1452 = vsub.f32 %v1440, %v1449
    %v1453 = vmul.f32 %v1450, 1.442695
    %v1454 = vpow.pop %v1453
    %v1455 = vmul.f32 %v1451, 1.442695
    %v1456 = vpow.pop %v1455
    %v1457 = vmul.f32 %v1452, 1.442695
    %v1458 = vpow.pop %v1457
    %v1459 = vsel %vm917, %v1454, 0.0
    %1460 = vadd.xlane.f32.xlu0 %v1459
    %v1461 = vpop.xlane.xlu0 %1460
    %v1462 = vsel %vm917, %v1456, 0.0
    %1463 = vadd.xlane.f32.xlu0 %v1462
    %v1464 = vpop.xlane.xlu0 %1463
    %v1465 = vsel %vm924, %v1458, 0.0
    %1466 = vadd.xlane.f32.xlu0 %v1465
    %v1467 = vpop.xlane.xlu0 %1466
    %v1468 = vrcp.pop %v1461
    %v1469 = vrcp.pop %v1464
    %v1470 = vrcp.pop %v1467
    %v1471 = vmul.f32 %v1454, %v1468
    %v1472 = vmul.f32 %v1456, %v1469
    %v1473 = vmul.f32 %v1458, %v1470
    %1475 = vrot.lane.b32.xlu0 %v837, 64
    %v1476 = vpop.permute.xlu0 %1475
    %v1478 = vmul.f32 %v785, %v1476
    %v1479 = vmul.f32 %v788, %v1476
    %v1480 = vmul.f32 %v793, %v1476
    %v1481 = vpack.c.bf16 %v1472, %v1471
    %v1482 = vpack.c.bf16 %v1473, %v1473
    %v1483 = vpack.c.bf16 %v1479, %v1478
    %v1484 = vpack.c.bf16 %v1480, %v1480
    %1487 = vrot.lane.b32.xlu0 %v1483, 64
    %v1488 = vpop.permute.xlu0 %1487
    %1489 = vrot.lane.b32.xlu0 %v1484, 64
    %v1490 = vpop.permute.xlu0 %1489
    %v1493 = vsel %vm917, %v1481, 0
    %v1496 = vsel %vm917, %v1482, 0
    %v1499 = vsel %vm649, %v1490, 0
    %1501 = vmatprep.subr.bf16.mxu0 0
    %1502 = vmatpush1.bf16.msra.mxu0 %v1488
    %1503 = vmatprep.subr.bf16.mxu0 0
    %1504 = vmatpush1.bf16.msra.mxu0 %v1499
    %1505 = vmatprep.subr.bf16.mxu0 0
    %1506 = vmatpush1.bf16.msra.mxu0 0
    %1507 = vmatprep.subr.bf16.mxu0 0
    %1508 = vmatpush1.bf16.msra.mxu0 0
    %1509 = vmatprep.subr.bf16.mxu0 0
    %1510 = vmatpush1.bf16.msra.mxu0 0
    %1511 = vmatprep.subr.bf16.mxu0 0
    %1512 = vmatpush1.bf16.msra.mxu0 0
    %1513 = vmatprep.subr.bf16.mxu0 0
    %1514 = vmatpush1.bf16.msra.mxu0 0
    %1515 = vmatprep.subr.bf16.mxu0 0
    %1516 = vmatpush1.bf16.msra.mxu0 0
    %1517 = vmatprep.subr.bf16.mxu0 0
    %1518 = vmatpush1.bf16.msra.mxu0 0
    %1519 = vmatprep.subr.bf16.mxu0 0
    %1520 = vmatpush1.bf16.msra.mxu0 0
    %1521 = vmatprep.subr.bf16.mxu0 0
    %1522 = vmatpush1.bf16.msra.mxu0 0
    %1523 = vmatprep.subr.bf16.mxu0 0
    %1524 = vmatpush1.bf16.msra.mxu0 0
    %1525 = vmatprep.subr.bf16.mxu0 0
    %1526 = vmatpush1.bf16.msra.mxu0 0
    %1527 = vmatprep.subr.bf16.mxu0 0
    %1528 = vmatpush1.bf16.msra.mxu0 0
    %1529 = vmatprep.subr.bf16.mxu0 0
    %1530 = vmatpush1.bf16.msra.mxu0 0
    %1531 = vmatprep.subr.bf16.mxu0 0
    %1532 = vmatpush1.bf16.msra.mxu0 0
    %1533 = vmatprep.mubr.bf16.mxu0 0
    %1534 = vmatmul.mubr.bf16.gmra.mrb[0].mxu0 %v1493
    %v1535 = vpop.f32.mrb[0].mxu0
    %v1536 = vadd.f32 0.0, %v1535
    %v1537 = vpop.f32.mrb[0].mxu0
    %v1538 = vpop.f32.mrb[0].mxu0
    %v1539 = vadd.f32 0.0, %v1538
    %v1540 = vpop.f32.mrb[0].mxu0
    %1541 = vmatprep.mubr.bf16.mxu0 0
    %1542 = vmatmul.mubr.bf16.gmra.mrb[0].mxu0 %v1496
    %v1543 = vpop.f32.mrb[0].mxu0
    %v1544 = vadd.f32 0.0, %v1543
    %v1545 = vpop.f32.mrb[0].mxu0
    %v1546 = vpop.f32.mrb[0].mxu0
    %v1547 = vpop.f32.mrb[0].mxu0
    %1548 = vdwg.mxu0
    %v1549 = vadd.f32 %v1373, %v1536
    %v1550 = vadd.f32 %v1374, %v1539
    %v1551 = vadd.f32 %v1375, %v1544
    %v1552 = vld [vmem:[%s33] sm:$0xff]
    %v1553 = vld [vmem:[%s33 + $0x8] sm:$0xff]
    %v1554 = vld [vmem:[%s33 + $0x10] sm:$0xff]
    %v1555 = vld [vmem:[%s33 + $0x18] sm:$0xff]
    %v1556 = vpack.c.bf16 %v1550, %v1549
    %v1557 = vpack.c.bf16 %v1551, %v1551
    %v1558 = vpack.c.bf16 %v1553, %v1552
    %v1559 = vpack.c.bf16 %v1555, %v1554
    %v1560 = vld [vmem:[%s35] sm:$0x1]
    %v1562 = vlaneseq
    %v1563 = vshrl.u32 %v1562, 7
    %v1564 = vsub.s32 0, %v1563
    %v1565 = vrot.slane %v1560, %v1564
    %v1568 = vsel %vm540, %v1556, 0
    %v1571 = vsel %vm540, %v1557, 0
    %1573 = vmatprep.subr.bf16.mxu0 0
    %1574 = vmatpush1.bf16.msra.mxu0 %v1558
    %1575 = vmatprep.subr.bf16.mxu0 0
    %1576 = vmatpush1.bf16.msra.mxu0 %v1559
    %1577 = vmatprep.subr.bf16.mxu0 0
    %1578 = vmatpush1.bf16.msra.mxu0 0
    %1579 = vmatprep.subr.bf16.mxu0 0
    %1580 = vmatpush1.bf16.msra.mxu0 0
    %1581 = vmatprep.subr.bf16.mxu0 0
    %1582 = vmatpush1.bf16.msra.mxu0 0
    %1583 = vmatprep.subr.bf16.mxu0 0
    %1584 = vmatpush1.bf16.msra.mxu0 0
    %1585 = vmatprep.subr.bf16.mxu0 0
    %1586 = vmatpush1.bf16.msra.mxu0 0
    %1587 = vmatprep.subr.bf16.mxu0 0
    %1588 = vmatpush1.bf16.msra.mxu0 0
    %1589 = vmatprep.subr.bf16.mxu0 0
    %1590 = vmatpush1.bf16.msra.mxu0 0
    %1591 = vmatprep.subr.bf16.mxu0 0
    %1592 = vmatpush1.bf16.msra.mxu0 0
    %1593 = vmatprep.subr.bf16.mxu0 0
    %1594 = vmatpush1.bf16.msra.mxu0 0
    %1595 = vmatprep.subr.bf16.mxu0 0
    %1596 = vmatpush1.bf16.msra.mxu0 0
    %1597 = vmatprep.subr.bf16.mxu0 0
    %1598 = vmatpush1.bf16.msra.mxu0 0
    %1599 = vmatprep.subr.bf16.mxu0 0
    %1600 = vmatpush1.bf16.msra.mxu0 0
    %1601 = vmatprep.subr.bf16.mxu0 0
    %1602 = vmatpush1.bf16.msra.mxu0 0
    %1603 = vmatprep.subr.bf16.mxu0 0
    %1604 = vmatpush1.bf16.msra.mxu0 0
    %1605 = vmatprep.mubr.bf16.mxu0 0
    %1606 = vmatmul.mubr.bf16.gmra.mrb[0].mxu0 %v1568
    %v1607 = vpop.f32.mrb[0].mxu0
    %v1608 = vadd.f32 %v1565, %v1607
    %v1609 = vpop.f32.mrb[0].mxu0
    %v1610 = vpop.f32.mrb[0].mxu0
    %v1611 = vadd.f32 %v1565, %v1610
    %v1612 = vpop.f32.mrb[0].mxu0
    %1613 = vmatprep.mubr.bf16.mxu0 0
    %1614 = vmatmul.mubr.bf16.gmra.mrb[0].mxu0 %v1571
    %v1615 = vpop.f32.mrb[0].mxu0
    %v1616 = vadd.f32 %v1565, %v1615
    %v1617 = vpop.f32.mrb[0].mxu0
    %v1618 = vpop.f32.mrb[0].mxu0
    %v1619 = vpop.f32.mrb[0].mxu0
    %1620 = vdwg.mxu0
    %v1621 = vadd.f32 %v1608, %v726
    %v1622 = vadd.f32 %v1611, %v727
    %v1623 = vadd.f32 %v1616, %v728
    %v1624 = vld [vmem:[%s37] sm:$0x1]
    %v1625 = vld [vmem:[%s39] sm:$0x1]
    %v1626 = vsel %vm540, %v1621, 0.0
    %1627 = vadd.xlane.f32.xlu0 %v1626
    %v1628 = vpop.xlane.xlu0 %1627
    %v1629 = vsel %vm540, %v1622, 0.0
    %1630 = vadd.xlane.f32.xlu0 %v1629
    %v1631 = vpop.xlane.xlu0 %1630
    %v1632 = vsel %vm676, %v1623, 0.0
    %1633 = vadd.xlane.f32.xlu0 %v1632
    %v1634 = vpop.xlane.xlu0 %1633
    %v1635 = vmul.f32 %v1628, %v680
    %v1636 = vmul.f32 %v1631, %v680
    %v1637 = vmul.f32 %v1634, %v680
    %v1638 = vsub.f32 %v1621, %v1635
    %v1639 = vsub.f32 %v1622, %v1636
    %v1640 = vsub.f32 %v1623, %v1637
    %v1641 = vmul.f32 %v1638, %v1638
    %v1642 = vmul.f32 %v1639, %v1639
    %v1643 = vmul.f32 %v1640, %v1640
    %v1644 = vsel %vm540, %v1641, 0.0
    %1645 = vadd.xlane.f32.xlu0 %v1644
    %v1646 = vpop.xlane.xlu0 %1645
    %v1647 = vsel %vm540, %v1642, 0.0
    %1648 = vadd.xlane.f32.xlu0 %v1647
    %v1649 = vpop.xlane.xlu0 %1648
    %v1650 = vsel %vm676, %v1643, 0.0
    %1651 = vadd.xlane.f32.xlu0 %v1650
    %v1652 = vpop.xlane.xlu0 %1651
    %v1653 = vmul.f32 %v1646, %v680
    %v1654 = vmul.f32 %v1649, %v680
    %v1655 = vmul.f32 %v1652, %v680
    %v1656 = vadd.f32 %v1653, 1e-12
    %v1657 = vadd.f32 %v1654, 1e-12
    %v1658 = vadd.f32 %v1655, 1e-12
    %v1659 = vrsqrt.pop %v1656
    %v1660 = vrsqrt.pop %v1657
    %v1661 = vrsqrt.pop %v1658
    %v1662 = vmul.f32 %v1638, %v1659
    %v1663 = vmul.f32 %v1639, %v1660
    %v1664 = vmul.f32 %v1640, %v1661
    %v1666 = vlaneseq
    %v1667 = vshrl.u32 %v1666, 7
    %v1668 = vsub.s32 0, %v1667
    %v1669 = vrot.slane %v1624, %v1668
    %v1671 = vmul.f32 %v1662, %v1669
    %v1672 = vmul.f32 %v1663, %v1669
    %v1673 = vmul.f32 %v1664, %v1669
    %v1675 = vlaneseq
    %v1676 = vshrl.u32 %v1675, 7
    %v1677 = vsub.s32 0, %v1676
    %v1678 = vrot.slane %v1625, %v1677
    %v1680 = vadd.f32 %v1671, %v1678
    %v1681 = vadd.f32 %v1672, %v1678
    %v1682 = vadd.f32 %v1673, %v1678
    %v1683 = vld [vmem:[%s41] sm:$0xff]
    %v1684 = vld [vmem:[%s41 + $0x8] sm:$0xff]
    %v1685 = vld [vmem:[%s41 + $0x10] sm:$0xff]
    %v1686 = vld [vmem:[%s41 + $0x18] sm:$0xff]
    %v1687 = vpack.c.bf16 %v1681, %v1680
    %v1688 = vpack.c.bf16 %v1682, %v1682
    %v1689 = vpack.c.bf16 %v1684, %v1683
    %v1690 = vpack.c.bf16 %v1686, %v1685
    %v1691 = vld [vmem:[%s43] sm:$0x1]
    %v1693 = vlaneseq
    %v1694 = vshrl.u32 %v1693, 7
    %v1695 = vsub.s32 0, %v1694
    %v1696 = vrot.slane %v1691, %v1695
    %v1699 = vsel %vm540, %v1687, 0
    %v1702 = vsel %vm540, %v1688, 0
    %1704 = vmatprep.subr.bf16.mxu0 0
    %1705 = vmatpush1.bf16.msra.mxu0 %v1689
    %1706 = vmatprep.subr.bf16.mxu0 0
    %1707 = vmatpush1.bf16.msra.mxu0 %v1690
    %1708 = vmatprep.subr.bf16.mxu0 0
    %1709 = vmatpush1.bf16.msra.mxu0 0
    %1710 = vmatprep.subr.bf16.mxu0 0
    %1711 = vmatpush1.bf16.msra.mxu0 0
    %1712 = vmatprep.subr.bf16.mxu0 0
    %1713 = vmatpush1.bf16.msra.mxu0 0
    %1714 = vmatprep.subr.bf16.mxu0 0
    %1715 = vmatpush1.bf16.msra.mxu0 0
    %1716 = vmatprep.subr.bf16.mxu0 0
    %1717 = vmatpush1.bf16.msra.mxu0 0
    %1718 = vmatprep.subr.bf16.mxu0 0
    %1719 = vmatpush1.bf16.msra.mxu0 0
    %1720 = vmatprep.subr.bf16.mxu0 0
    %1721 = vmatpush1.bf16.msra.mxu0 0
    %1722 = vmatprep.subr.bf16.mxu0 0
    %1723 = vmatpush1.bf16.msra.mxu0 0
    %1724 = vmatprep.subr.bf16.mxu0 0
    %1725 = vmatpush1.bf16.msra.mxu0 0
    %1726 = vmatprep.subr.bf16.mxu0 0
    %1727 = vmatpush1.bf16.msra.mxu0 0
    %1728 = vmatprep.subr.bf16.mxu0 0
    %1729 = vmatpush1.bf16.msra.mxu0 0
    %1730 = vmatprep.subr.bf16.mxu0 0
    %1731 = vmatpush1.bf16.msra.mxu0 0
    %1732 = vmatprep.subr.bf16.mxu0 0
    %1733 = vmatpush1.bf16.msra.mxu0 0
    %1734 = vmatprep.subr.bf16.mxu0 0
    %1735 = vmatpush1.bf16.msra.mxu0 0
    %1736 = vmatprep.mubr.bf16.mxu0 0
    %1737 = vmatmul.mubr.bf16.gmra.mrb[0].mxu0 %v1699
    %v1738 = vpop.f32.mrb[0].mxu0
    %v1739 = vadd.f32 %v1696, %v1738
    %v1740 = vpop.f32.mrb[0].mxu0
    %v1741 = vpop.f32.mrb[0].mxu0
    %v1742 = vadd.f32 %v1696, %v1741
    %v1743 = vpop.f32.mrb[0].mxu0
    %1744 = vmatprep.mubr.bf16.mxu0 0
    %1745 = vmatmul.mubr.bf16.gmra.mrb[0].mxu0 %v1702
    %v1746 = vpop.f32.mrb[0].mxu0
    %v1747 = vadd.f32 %v1696, %v1746
    %v1748 = vpop.f32.mrb[0].mxu0
    %v1749 = vpop.f32.mrb[0].mxu0
    %v1750 = vpop.f32.mrb[0].mxu0
    %1751 = vdwg.mxu0
    %v1752 = vmul.f32 %v1739, %v1739
    %v1753 = vmul.f32 %v1742, %v1742
    %v1754 = vmul.f32 %v1747, %v1747
    %v1755 = vmul.f32 %v1739, %v1752
    %v1756 = vmul.f32 %v1742, %v1753
    %v1757 = vmul.f32 %v1747, %v1754
    %v1758 = vmul.f32 %v1755, 0.044715
    %v1759 = vmul.f32 %v1756, 0.044715
    %v1760 = vmul.f32 %v1757, 0.044715
    %v1761 = vadd.f32 %v1739, %v1758
    %v1762 = vadd.f32 %v1742, %v1759
    %v1763 = vadd.f32 %v1747, %v1760
    %v1764 = vmul.f32 %v1761, 0.7978846
    %v1765 = vmul.f32 %v1762, 0.7978846
    %v1766 = vmul.f32 %v1763, 0.7978846
    %v1767 = vtanh.pop %v1764
    %v1768 = vtanh.pop %v1765
    %v1769 = vtanh.pop %v1766
    %v1770 = vadd.f32 %v1767, 1.0
    %v1771 = vadd.f32 %v1768, 1.0
    %v1772 = vadd.f32 %v1769, 1.0
    %v1773 = vmul.f32 %v1770, 0.5
    %v1774 = vmul.f32 %v1771, 0.5
    %v1775 = vmul.f32 %v1772, 0.5
    %v1776 = vmul.f32 %v1739, %v1773
    %v1777 = vmul.f32 %v1742, %v1774
    %v1778 = vmul.f32 %v1747, %v1775
    %v1779 = vld [vmem:[%s45] sm:$0xff]
    %v1780 = vld [vmem:[%s45 + $0x8] sm:$0xff]
    %v1781 = vld [vmem:[%s45 + $0x10] sm:$0xff]
    %v1782 = vld [vmem:[%s45 + $0x18] sm:$0xff]
    %v1783 = vld [vmem:[%s45 + $0x20] sm:$0xff]
    %v1784 = vld [vmem:[%s45 + $0x28] sm:$0xff]
    %v1785 = vld [vmem:[%s45 + $0x30] sm:$0xff]
    %v1786 = vld [vmem:[%s45 + $0x38] sm:$0xff]
    %v1787 = vpack.c.bf16 %v1777, %v1776
    %v1788 = vpack.c.bf16 %v1778, %v1778
    %v1789 = vpack.c.bf16 %v1780, %v1779
    %v1790 = vpack.c.bf16 %v1782, %v1781
    %v1791 = vpack.c.bf16 %v1784, %v1783
    %v1792 = vpack.c.bf16 %v1786, %v1785
    %v1793 = vld [vmem:[%s47] sm:$0x1]
    %v1795 = vlaneseq
    %v1796 = vshrl.u32 %v1795, 7
    %v1797 = vsub.s32 0, %v1796
    %v1798 = vrot.slane %v1793, %v1797
    %v1801 = vsel %vm464, %v1787, 0
    %v1804 = vsel %vm464, %v1788, 0
    %1806 = vmatprep.subr.bf16.mxu0 0
    %1807 = vmatpush1.bf16.msra.mxu0 %v1789
    %1808 = vmatprep.subr.bf16.mxu0 0
    %1809 = vmatpush1.bf16.msra.mxu0 %v1790
    %1810 = vmatprep.subr.bf16.mxu0 0
    %1811 = vmatpush1.bf16.msra.mxu0 %v1791
    %1812 = vmatprep.subr.bf16.mxu0 0
    %1813 = vmatpush1.bf16.msra.mxu0 %v1792
    %1814 = vmatprep.subr.bf16.mxu0 0
    %1815 = vmatpush1.bf16.msra.mxu0 0
    %1816 = vmatprep.subr.bf16.mxu0 0
    %1817 = vmatpush1.bf16.msra.mxu0 0
    %1818 = vmatprep.subr.bf16.mxu0 0
    %1819 = vmatpush1.bf16.msra.mxu0 0
    %1820 = vmatprep.subr.bf16.mxu0 0
    %1821 = vmatpush1.bf16.msra.mxu0 0
    %1822 = vmatprep.subr.bf16.mxu0 0
    %1823 = vmatpush1.bf16.msra.mxu0 0
    %1824 = vmatprep.subr.bf16.mxu0 0
    %1825 = vmatpush1.bf16.msra.mxu0 0
    %1826 = vmatprep.subr.bf16.mxu0 0
    %1827 = vmatpush1.bf16.msra.mxu0 0
    %1828 = vmatprep.subr.bf16.mxu0 0
    %1829 = vmatpush1.bf16.msra.mxu0 0
    %1830 = vmatprep.subr.bf16.mxu0 0
    %1831 = vmatpush1.bf16.msra.mxu0 0
    %1832 = vmatprep.subr.bf16.mxu0 0
    %1833 = vmatpush1.bf16.msra.mxu0 0
    %1834 = vmatprep.subr.bf16.mxu0 0
    %1835 = vmatpush1.bf16.msra.mxu0 0
    %1836 = vmatprep.subr.bf16.mxu0 0
    %1837 = vmatpush1.bf16.msra.mxu0 0
    %1838 = vmatprep.mubr.bf16.mxu0 0
    %1839 = vmatmul.mubr.bf16.gmra.mrb[0].mxu0 %v1801
    %v1840 = vpop.f32.mrb[0].mxu0
    %v1841 = vadd.f32 %v1798, %v1840
    %v1842 = vpop.f32.mrb[0].mxu0
    %v1843 = vpop.f32.mrb[0].mxu0
    %v1844 = vadd.f32 %v1798, %v1843
    %v1845 = vpop.f32.mrb[0].mxu0
    %1846 = vmatprep.mubr.bf16.mxu0 0
    %1847 = vmatmul.mubr.bf16.gmra.mrb[0].mxu0 %v1804
    %v1848 = vpop.f32.mrb[0].mxu0
    %v1849 = vpop.f32.mrb[0].mxu0
    %v1850 = vpop.f32.mrb[0].mxu0
    %v1851 = vpop.f32.mrb[0].mxu0
    %1852 = vdwg.mxu0
    %v1853 = vadd.f32 %v1841, %v1680
    %v1854 = vadd.f32 %v1844, %v1681
    %v1855 = vld [vmem:[%s49] sm:$0x1]
    %v1856 = vld [vmem:[%s51] sm:$0x1]
    %v1857 = vsel %vm540, %v1853, 0.0
    %1858 = vadd.xlane.f32.xlu0 %v1857
    %v1859 = vpop.xlane.xlu0 %1858
    %v1860 = vsel %vm540, %v1854, 0.0
    %1861 = vadd.xlane.f32.xlu0 %v1860
    %v1862 = vpop.xlane.xlu0 %1861
    %v1863 = vmul.f32 %v1859, %v680
    %v1864 = vmul.f32 %v1862, %v680
    %v1865 = vsub.f32 %v1853, %v1863
    %v1866 = vsub.f32 %v1854, %v1864
    %v1867 = vmul.f32 %v1865, %v1865
    %v1868 = vmul.f32 %v1866, %v1866
    %v1869 = vsel %vm540, %v1867, 0.0
    %1870 = vadd.xlane.f32.xlu0 %v1869
    %v1871 = vpop.xlane.xlu0 %1870
    %v1872 = vsel %vm540, %v1868, 0.0
    %1873 = vadd.xlane.f32.xlu0 %v1872
    %v1874 = vpop.xlane.xlu0 %1873
    %v1875 = vmul.f32 %v1871, %v680
    %v1876 = vmul.f32 %v1874, %v680
    %v1877 = vadd.f32 %v1875, 1e-12
    %v1878 = vadd.f32 %v1876, 1e-12
    %v1879 = vrsqrt.pop %v1877
    %v1880 = vrsqrt.pop %v1878
    %v1881 = vmul.f32 %v1865, %v1879
    %v1882 = vmul.f32 %v1866, %v1880
    %v1884 = vlaneseq
    %v1885 = vshrl.u32 %v1884, 7
    %v1886 = vsub.s32 0, %v1885
    %v1887 = vrot.slane %v1855, %v1886
    %v1889 = vmul.f32 %v1881, %v1887
    %v1890 = vmul.f32 %v1882, %v1887
    %v1892 = vlaneseq
    %v1893 = vshrl.u32 %v1892, 7
    %v1894 = vsub.s32 0, %v1893
    %v1895 = vrot.slane %v1856, %v1894
    %v1897 = vadd.f32 %v1889, %v1895
    %v1898 = vadd.f32 %v1890, %v1895
    %v1900 = vrot.slane %v1898, 1
    %v1902 = vsel %vm643, %v1897, %v1900
    %v1903 = vld [vmem:[%s53] sm:$0xff]
    %v1904 = vld [vmem:[%s53 + $0x8] sm:$0xff]
    %v1905 = vld [vmem:[%s53 + $0x10] sm:$0xff]
    %v1906 = vld [vmem:[%s53 + $0x18] sm:$0xff]
    %v1907 = vpack.c.bf16 %v1902, %v1902
    %v1908 = vpack.c.bf16 %v1904, %v1903
    %v1909 = vpack.c.bf16 %v1906, %v1905
    %v1910 = vld [vmem:[%s55] sm:$0x1]
    %v1912 = vlaneseq
    %v1913 = vshrl.u32 %v1912, 7
    %v1914 = vsub.s32 0, %v1913
    %v1915 = vrot.slane %v1910, %v1914
    %v1918 = vsel %vm540, %v1907, 0
    %1920 = vmatprep.subr.bf16.mxu0 0
    %1921 = vmatpush1.bf16.msra.mxu0 %v1908
    %1922 = vmatprep.subr.bf16.mxu0 0
    %1923 = vmatpush1.bf16.msra.mxu0 %v1909
    %1924 = vmatprep.subr.bf16.mxu0 0
    %1925 = vmatpush1.bf16.msra.mxu0 0
    %1926 = vmatprep.subr.bf16.mxu0 0
    %1927 = vmatpush1.bf16.msra.mxu0 0
    %1928 = vmatprep.subr.bf16.mxu0 0
    %1929 = vmatpush1.bf16.msra.mxu0 0
    %1930 = vmatprep.subr.bf16.mxu0 0
    %1931 = vmatpush1.bf16.msra.mxu0 0
    %1932 = vmatprep.subr.bf16.mxu0 0
    %1933 = vmatpush1.bf16.msra.mxu0 0
    %1934 = vmatprep.subr.bf16.mxu0 0
    %1935 = vmatpush1.bf16.msra.mxu0 0
    %1936 = vmatprep.subr.bf16.mxu0 0
    %1937 = vmatpush1.bf16.msra.mxu0 0
    %1938 = vmatprep.subr.bf16.mxu0 0
    %1939 = vmatpush1.bf16.msra.mxu0 0
    %1940 = vmatprep.subr.bf16.mxu0 0
    %1941 = vmatpush1.bf16.msra.mxu0 0
    %1942 = vmatprep.subr.bf16.mxu0 0
    %1943 = vmatpush1.bf16.msra.mxu0 0
    %1944 = vmatprep.subr.bf16.mxu0 0
    %1945 = vmatpush1.bf16.msra.mxu0 0
    %1946 = vmatprep.subr.bf16.mxu0 0
    %1947 = vmatpush1.bf16.msra.mxu0 0
    %1948 = vmatprep.subr.bf16.mxu0 0
    %1949 = vmatpush1.bf16.msra.mxu0 0
    %1950 = vmatprep.subr.bf16.mxu0 0
    %1951 = vmatpush1.bf16.msra.mxu0 0
    %1952 = vmatprep.mubr.bf16.mxu0 0
    %1953 = vmatmul.mubr.bf16.gmra.mrb[0].mxu0 %v1918
    %v1954 = vpop.f32.mrb[0].mxu0
    %v1955 = vadd.f32 %v1915, %v1954
    %v1956 = vpop.f32.mrb[0].mxu0
    %v1957 = vpop.f32.mrb[0].mxu0
    %v1958 = vpop.f32.mrb[0].mxu0
    %1959 = vdwg.mxu0
    %v1960 = vtanh.pop %v1955
    %1961 = vst [vmem:[#allocation2] sm:$0x3] %v1960
    %v1963 = vrot.slane %v618, 3
    %v1965 = vsel %vm643, %v618, %v1963
    %v1966 = vsub.f32 %v1960, %v1965
    %v1967 = vmul.f32 %v1966, %v1966
    %vm1968 = vcmask 254976
    %v1969 = vsel %vm1968, %v1967, 0.0
    %1970 = vadd.xlane.f32.xlu0 %v1969
    %v1971 = vpop.xlane.xlu0 %1970
    %v1972 = vrot.slane %v1971, 4
    %v1973 = vadd.f32 %v1971, %v1972
    %v1974 = vrot.slane %v1973, 2
    %v1975 = vadd.f32 %v1973, %v1974
    %v1976 = vrot.slane %v1975, 1
    %v1977 = vadd.f32 %v1975, %v1976
    %s1978 = vtos %v1977
    %v1979 = vrcp.pop 64.0
    %s1980 = vtos %v1979
    %s1981 = smul.f32 %s1978, %s1980
    %v1982 = vld [vmem:[%s9] sm:$0xff]
    %v1983 = vld [vmem:[%s9 + $0x8] sm:$0xff]
    %1984 = vset.pattern.permute.xlu0 0
    %1985 = vperm.xlu0 %1984, %v1982
    %v1986 = vpop.permute.xlu0 %1985
    %1987 = vset.pattern.permute.xlu0 0
    %1988 = vperm.xlu0 %1987, %v1983
    %v1989 = vpop.permute.xlu0 %1988
    %vm1990 = vcmp.eq.s32.totalorder %v145, %v1986
    %vm1991 = vcmp.eq.s32.totalorder %v145, %v1989
    %v1992 = vld [vmem:[%s57] sm:$0xff]
    %v1993 = vld [vmem:[%s57 + $0x8] sm:$0xff]
    %v1994 = vld [vmem:[%s57 + $0x10] sm:$0xff]
    %v1995 = vld [vmem:[%s57 + $0x18] sm:$0xff]
    %v1996 = vld [vmem:[%s57 + $0x20] sm:$0xff]
    %v1997 = vld [vmem:[%s57 + $0x28] sm:$0xff]
    %v1998 = vld [vmem:[%s57 + $0x30] sm:$0xff]
    %v1999 = vld [vmem:[%s57 + $0x38] sm:$0xff]
    %v2000 = vsel %vm1990, 1, 0
    %v2001 = vsel %vm1991, 1, 0
    %v2002 = vcvt.s32.f32 %v2000
    %v2003 = vcvt.s32.f32 %v2001
    %v2004 = vpack.c.bf16 %v2003, %v2002
    %v2005 = vpack.c.bf16 %v1993, %v1992
    %v2006 = vpack.c.bf16 %v1995, %v1994
    %v2007 = vpack.c.bf16 %v1997, %v1996
    %v2008 = vpack.c.bf16 %v1999, %v1998
    %v2009 = vlaneseq
    %v2010 = vshrl.u32 %v2009, 7
    %v2011 = vsub.s32 0, %v2010
    %v2012 = vrot.slane %v1960, %v2011
    %v2013 = vlaneseq
    %v2014 = vshrl.u32 %v2013, 7
    %v2015 = vsub.s32 1, %v2014
    %v2016 = vrot.slane %v1960, %v2015
    %v2018 = vsel %vm464, %v2004, 0
    %2020 = vmatprep.subr.bf16.mxu0 0
    %2021 = vmatpush1.bf16.msra.mxu0 %v2005
    %2022 = vmatprep.subr.bf16.mxu0 0
    %2023 = vmatpush1.bf16.msra.mxu0 %v2006
    %2024 = vmatprep.subr.bf16.mxu0 0
    %2025 = vmatpush1.bf16.msra.mxu0 %v2007
    %2026 = vmatprep.subr.bf16.mxu0 0
    %2027 = vmatpush1.bf16.msra.mxu0 %v2008
    %2028 = vmatprep.subr.bf16.mxu0 0
    %2029 = vmatpush1.bf16.msra.mxu0 0
    %2030 = vmatprep.subr.bf16.mxu0 0
    %2031 = vmatpush1.bf16.msra.mxu0 0
    %2032 = vmatprep.subr.bf16.mxu0 0
    %2033 = vmatpush1.bf16.msra.mxu0 0
    %2034 = vmatprep.subr.bf16.mxu0 0
    %2035 = vmatpush1.bf16.msra.mxu0 0
    %2036 = vmatprep.subr.bf16.mxu0 0
    %2037 = vmatpush1.bf16.msra.mxu0 0
    %2038 = vmatprep.subr.bf16.mxu0 0
    %2039 = vmatpush1.bf16.msra.mxu0 0
    %2040 = vmatprep.subr.bf16.mxu0 0
    %2041 = vmatpush1.bf16.msra.mxu0 0
    %2042 = vmatprep.subr.bf16.mxu0 0
    %2043 = vmatpush1.bf16.msra.mxu0 0
    %2044 = vmatprep.subr.bf16.mxu0 0
    %2045 = vmatpush1.bf16.msra.mxu0 0
    %2046 = vmatprep.subr.bf16.mxu0 0
    %2047 = vmatpush1.bf16.msra.mxu0 0
    %2048 = vmatprep.subr.bf16.mxu0 0
    %2049 = vmatpush1.bf16.msra.mxu0 0
    %2050 = vmatprep.subr.bf16.mxu0 0
    %2051 = vmatpush1.bf16.msra.mxu0 0
    %2052 = vmatprep.mubr.bf16.mxu0 0
    %2053 = vmatmul.mubr.bf16.gmra.mrb[0].mxu0 %v2018
    %v2054 = vpop.f32.mrb[0].mxu0
    %v2055 = vadd.f32 %v2012, %v2054
    %v2056 = vpop.f32.mrb[0].mxu0
    %v2057 = vpop.f32.mrb[0].mxu0
    %v2058 = vadd.f32 %v2016, %v2057
    %v2059 = vpop.f32.mrb[0].mxu0
    %2060 = vdwg.mxu0
    %v2061 = vld [vmem:[%s59] sm:$0xff]
    %v2062 = vld [vmem:[%s59 + $0x8] sm:$0xff]
    %v2063 = vld [vmem:[%s59 + $0x10] sm:$0xff]
    %v2064 = vld [vmem:[%s59 + $0x18] sm:$0xff]
    %v2065 = vpack.c.bf16 %v2058, %v2055
    %v2066 = vpack.c.bf16 %v2062, %v2061
    %v2067 = vpack.c.bf16 %v2064, %v2063
    %v2068 = vld [vmem:[%s61] sm:$0x1]
    %v2070 = vlaneseq
    %v2071 = vshrl.u32 %v2070, 7
    %v2072 = vsub.s32 0, %v2071
    %v2073 = vrot.slane %v2068, %v2072
    %v2076 = vsel %vm540, %v2065, 0
    %2078 = vmatprep.subr.bf16.mxu0 0
    %2079 = vmatpush1.bf16.msra.mxu0 %v2066
    %2080 = vmatprep.subr.bf16.mxu0 0
    %2081 = vmatpush1.bf16.msra.mxu0 %v2067
    %2082 = vmatprep.subr.bf16.mxu0 0
    %2083 = vmatpush1.bf16.msra.mxu0 0
    %2084 = vmatprep.subr.bf16.mxu0 0
    %2085 = vmatpush1.bf16.msra.mxu0 0
    %2086 = vmatprep.subr.bf16.mxu0 0
    %2087 = vmatpush1.bf16.msra.mxu0 0
    %2088 = vmatprep.subr.bf16.mxu0 0
    %2089 = vmatpush1.bf16.msra.mxu0 0
    %2090 = vmatprep.subr.bf16.mxu0 0
    %2091 = vmatpush1.bf16.msra.mxu0 0
    %2092 = vmatprep.subr.bf16.mxu0 0
    %2093 = vmatpush1.bf16.msra.mxu0 0
    %2094 = vmatprep.subr.bf16.mxu0 0
    %2095 = vmatpush1.bf16.msra.mxu0 0
    %2096 = vmatprep.subr.bf16.mxu0 0
    %2097 = vmatpush1.bf16.msra.mxu0 0
    %2098 = vmatprep.subr.bf16.mxu0 0
    %2099 = vmatpush1.bf16.msra.mxu0 0
    %2100 = vmatprep.subr.bf16.mxu0 0
    %2101 = vmatpush1.bf16.msra.mxu0 0
    %2102 = vmatprep.subr.bf16.mxu0 0
    %2103 = vmatpush1.bf16.msra.mxu0 0
    %2104 = vmatprep.subr.bf16.mxu0 0
    %2105 = vmatpush1.bf16.msra.mxu0 0
    %2106 = vmatprep.subr.bf16.mxu0 0
    %2107 = vmatpush1.bf16.msra.mxu0 0
    %2108 = vmatprep.subr.bf16.mxu0 0
    %2109 = vmatpush1.bf16.msra.mxu0 0
    %2110 = vmatprep.mubr.bf16.mxu0 0
    %2111 = vmatmul.mubr.bf16.gmra.mrb[0].mxu0 %v2076
    %v2112 = vpop.f32.mrb[0].mxu0
    %v2113 = vadd.f32 %v2073, %v2112
    %v2114 = vpop.f32.mrb[0].mxu0
    %v2115 = vpop.f32.mrb[0].mxu0
    %v2116 = vadd.f32 %v2073, %v2115
    %v2117 = vpop.f32.mrb[0].mxu0
    %2118 = vdwg.mxu0
    %2119 = vst [vmem:[%s65] sm:$0xff] %v2113
    %2120 = vst [vmem:[%s65 + $0x8] sm:$0xff] %v2116
    %v2121 = vld [vmem:[%s11] sm:$0xff]
    %v2122 = vld [vmem:[%s11 + $0x8] sm:$0xff]
    %vm2123 = vcmp.lt.f32.partialorder %v2121, 0.5
    %vm2124 = vcmp.lt.f32.partialorder %v2122, 0.5
    %v2125 = vsel %vm2123, 4294967196, %v1982
    %v2126 = vsel %vm2124, 4294967196, %v1983
    %2127 = vmax.xlane.f32.xlu0 %v2113
    %v2128 = vpop.xlane.xlu0 %2127
    %2129 = vmax.xlane.f32.xlu0 %v2116
    %v2130 = vpop.xlane.xlu0 %2129
    %v2131 = vsub.f32 %v2113, %v2128
    %v2132 = vsub.f32 %v2116, %v2130
    %v2133 = vmul.f32 %v2131, 1.442695
    %v2134 = vpow.pop %v2133
    %v2135 = vmul.f32 %v2132, 1.442695
    %v2136 = vpow.pop %v2135
    %2137 = vadd.xlane.f32.xlu0 %v2134
    %v2138 = vpop.xlane.xlu0 %2137
    %2139 = vadd.xlane.f32.xlu0 %v2136
    %v2140 = vpop.xlane.xlu0 %2139
    %v2141 = vlog2.pop %v2138
    %v2142 = vmul.f32 %v2141, 0.6931472
    %v2143 = vlog2.pop %v2140
    %v2144 = vmul.f32 %v2143, 0.6931472
    %v2145 = vadd.f32 %v2128, %v2142
    %v2146 = vadd.f32 %v2130, %v2144
    %2147 = vset.pattern.permute.xlu0 0
    %2148 = vperm.xlu0 %2147, %v2125
    %v2149 = vpop.permute.xlu0 %2148
    %2150 = vset.pattern.permute.xlu0 0
    %2151 = vperm.xlu0 %2150, %v2126
    %v2152 = vpop.permute.xlu0 %2151
    %vm2153 = vcmp.eq.s32.totalorder %v145, %v2149
    %vm2154 = vcmp.eq.s32.totalorder %v145, %v2152
    %v2155 = vsel %vm2153, %v2113, 0.0
    %v2156 = vsel %vm2154, %v2116, 0.0
    %2157 = vadd.xlane.f32.xlu0 %v2155
    %v2158 = vpop.xlane.xlu0 %2157
    %2159 = vadd.xlane.f32.xlu0 %v2156
    %v2160 = vpop.xlane.xlu0 %2159
    %vm2161 = vcmp.ne.s32.totalorder %v2125, 4294967196
    %vm2162 = vcmp.ne.s32.totalorder %v2126, 4294967196
    %v2163 = vsel %vm2161, 1, 0
    %v2164 = vsel %vm2162, 1, 0
    %v2165 = vcvt.s32.f32 %v2163
    %v2166 = vcvt.s32.f32 %v2164
    %v2167 = vsub.f32 %v2145, %v2158
    %v2168 = vsub.f32 %v2146, %v2160
    %v2169 = vmul.f32 %v2167, %v2165
    %v2170 = vmul.f32 %v2168, %v2166
    %vm2171 = vcmask 7168
    %v2172 = vsel %vm2171, %v2169, 0.0
    %v2173 = vsel %vm2171, %v2170, 0.0
    %v2174 = vadd.f32 %v2172, %v2173
    %2175 = vadd.xlane.f32.xlu0 %v2174
    %v2176 = vpop.xlane.xlu0 %2175
    %v2177 = vrot.slane %v2176, 4
    %v2178 = vadd.f32 %v2176, %v2177
    %v2179 = vrot.slane %v2178, 2
    %v2180 = vadd.f32 %v2178, %v2179
    %v2181 = vrot.slane %v2180, 1
    %v2182 = vadd.f32 %v2180, %v2181
    %s2183 = vtos %v2182
    %v2184 = vsel %vm2171, %v2165, 0.0
    %v2185 = vsel %vm2171, %v2166, 0.0
    %v2186 = vadd.f32 %v2184, %v2185
    %2187 = vadd.xlane.f32.xlu0 %v2186
    %v2188 = vpop.xlane.xlu0 %2187
    %v2189 = vrot.slane %v2188, 4
    %v2190 = vadd.f32 %v2188, %v2189
    %v2191 = vrot.slane %v2190, 2
    %v2192 = vadd.f32 %v2190, %v2191
    %v2193 = vrot.slane %v2192, 1
    %v2194 = vadd.f32 %v2192, %v2193
    %s2195 = vtos %v2194
    %s2196 = smax.f32 %s2195, 1.0
    %v2197 = vstv %s2196
    %v2198 = vrcp.pop %v2197
    %s2199 = vtos %v2198
    %s2200 = smul.f32 %s2183, %s2199
    %s2201 = scalar_lea.smem [#allocation5], 0
    %2202 = sst [smem:[%s2201]] %s1981
    %s2203 = scalar_lea.smem [#allocation5], 1
    %2204 = sst [smem:[%s2203]] %s2200
    %s2205 = smul.f32 %s1981, 0.5
    %s2206 = smul.f32 %s2200, 0.5
    %s2207 = sadd.f32 %s2205, %s2206
    %s2208 = scalar_lea.smem [#allocation5], 2
    %2209 = sst [smem:[%s2208]] %s2207
    // Predicated region
    $region126: #{mvm_forward.1} parent=1 // pred_check
      _
    $region127: #{mvm_forward.1} parent=1 // pred_check_branch
      %2211 = sbr.rel (0) target = $region129
    $region128: #{mvm_forward.1} parent=1 // pred_region
      %s2213 = ssub.s32 32, 32
      %2214 = vsyncadd [#allocation3], %s2213
      %s2216 = sshll.u32 [#allocation2], 4
      %s2217 = int_to_ptr.vmem [resolvable:$true] %s2216
      %2219 = dma.vmem_to_hbm [thread:$0]  %s2217, 32, %s63, [#allocation3]
    $region129: #{mvm_forward.1} parent=1 // pred_fallthru
      _
    // Predicated region
    $region130: #{mvm_forward.1} parent=1 // pred_check
      _
    $region131: #{mvm_forward.1} parent=1 // pred_check_branch
      %2221 = sbr.rel (0) target = $region133
    $region132: #{mvm_forward.1} parent=1 // pred_region
      _
    $region133: #{mvm_forward.1} parent=1 // pred_fallthru
      _
    // Predicated region
    $region134: #{mvm_forward.1} parent=1 // pred_check
      _
    $region135: #{mvm_forward.1} parent=1 // pred_check_branch
      %2223 = sbr.rel (0) target = $region137
    $region136: #{mvm_forward.1} parent=1 // pred_region
      %s2225 = ssub.s32 16, 16
      %2226 = vsyncadd [#allocation4], %s2225
      %s2228 = sshll.u32 %s67, 4
      %s2229 = int_to_ptr.vmem [resolvable:$true] %s2228
      %2231 = dma.smem_to_vmem [#allocation5], 16, %s2229, [#allocation4]
    $region137: #{mvm_forward.1} parent=1 // pred_fallthru
      _
    // Predicated region
    $region138: #{mvm_forward.1} parent=1 // pred_check
      _
    $region139: #{mvm_forward.1} parent=1 // pred_check_branch
      %2233 = sbr.rel (0) target = $region141
    $region140: #{mvm_forward.1} parent=1 // pred_region
      %2234 = dma.done [#allocation3], 32
    $region141: #{mvm_forward.1} parent=1 // pred_fallthru
      _
    // Predicated region
    $region142: #{mvm_forward.1} parent=1 // pred_check
      _
    $region143: #{mvm_forward.1} parent=1 // pred_check_branch
      %2236 = sbr.rel (0) target = $region145
    $region144: #{mvm_forward.1} parent=1 // pred_region
      _
    $region145: #{mvm_forward.1} parent=1 // pred_fallthru
      _
    // Predicated region
    $region146: #{mvm_forward.1} parent=1 // pred_check
      _
    $region147: #{mvm_forward.1} parent=1 // pred_check_branch
      %2238 = sbr.rel (0) target = $region149
    $region148: #{mvm_forward.1} parent=1 // pred_region
      %2239 = dma.done [#allocation4], 16
    $region149: #{mvm_forward.1} parent=1 // pred_fallthru
      _
    %2240 = sfence
    %2241 = vsyncpa [#allocation3], 1
    %2242 = vsyncpa [#allocation4], 1

</llo_original>
